<compile_context>
chip_gen: v7x
topology: tpu7x:2x2x1
jax: 0.10.0
libtpu: 0.0.40
codegen_flags: <defaults>
</compile_context>

<pallas_src>
import jax
import jax.numpy as jnp
from jax.experimental import pallas as pl
from jax.experimental.pallas import tpu as pltpu

NEG_SLOPE = 0.01
BN_EPS = 1e-5

# True layer widths: input_dim -> 512 -> 512 -> 256 -> 128 -> 64 -> 32 -> 1
HIDDEN_TRUE = [512, 512, 256, 128, 64, 32, 1]
# Lane-padded widths for layers 1..6 outputs (multiples of 128 for MXU N-dim).
HIDDEN_PAD = [512, 512, 256, 128, 128, 128, 128]

MAX_TILE_B = 512  # default upper bound for the batch tile; sweepable.


def _round_up(n, m):
    return ((n + m - 1) // m) * m


def _choose_tile_b(B, max_tile_b=MAX_TILE_B):
    """Pick a batch tile: large for MXU fill, but >= 2 grid steps when B allows (v7x megacore)."""
    max_tile_b = max(128, _round_up(int(max_tile_b), 128))
    if B <= 128:
        return 128
    if B <= 2 * max_tile_b:
        # Split roughly in half so both v7x TensorCores get a tile.
        return min(max_tile_b, _round_up(_round_up(B, 2) // 2, 128))
    return max_tile_b


def _default_epilogue_dtype():
    """bf16 elementwise epilogue on v6e/v7x (native bf16 VPU); f32 on v5e and older/unknown."""
    try:
        kind = jax.devices()[0].device_kind.lower()
    except Exception:  # pragma: no cover
        return jnp.float32
    if any(v in kind for v in ("v2", "v3", "v4", "v5")):
        return jnp.float32
    return jnp.bfloat16


def _leaky_relu(v):
    return jnp.where(v >= 0, v, NEG_SLOPE * v)


def _make_kernel(compute_dtype):
    cdt = compute_dtype

    def kernel(x_ref,
               w1, b1, w2, b2, w3, b3, w4, b4, w5, b5, w6, b6, w7, b7,
               out_ref):
        """One batch tile: 7 layers fully fused, activations resident in VMEM."""

        def lin(h, w_ref, b_ref):
            # bf16 MXU inputs, f32 accumulation; bias add + activation in `cdt` on the VPU.
            acc = jnp.dot(h.astype(jnp.bfloat16), w_ref[...],
                          preferred_element_type=jnp.float32)
            return acc.astype(cdt) + b_ref[...].astype(cdt)

        x = x_ref[...]

        identity = _leaky_relu(lin(x, w1, b1))                # fc1 + bn1 + leaky_relu
        out = _leaky_relu(lin(identity, w2, b2) + identity)   # fc2 + bn2 + skip + leaky_relu
        out = _leaky_relu(lin(out, w3, b3))                   # fc3 + bn3
        out = _leaky_relu(lin(out, w4, b4))                   # fc4 + bn4
        out = _leaky_relu(lin(out, w5, b5))                   # fc5 + bn5 (out padded to 128)
        out = _leaky_relu(lin(out, w6, b6))                   # fc6 + bn6 (out padded to 128)

        # fc7: single real output column.  Compute as w7_row (1,128) contracted against
        # h6 (tile_b,128) on their last dims -> lane-dense (1, tile_b) row, stored directly.
        y = jax.lax.dot_general(
            w7[...], out.astype(jnp.bfloat16),
            dimension_numbers=(((1,), (1,)), ((), ())),
            preferred_element_type=jnp.float32)               # (1, tile_b) f32
        y = y + b7[...]                                       # b7 is (1, 1) f32
        out_ref[...] = y[None].astype(out_ref.dtype)          # (1, 1, tile_b)

    return kernel


def residual_complex_nn_forward(x, params, *, max_tile_b=MAX_TILE_B, compute_dtype=None):
    """x: (B, input_dim) f32.

    params: list of 7 (W, b):
      layers 1..6: W bf16 (in_pad, out_pad), b f32 (1, out_pad)   (BN folded, zero-padded)
      layer  7   : W bf16 (1, 128) row (real cols 0..31), b f32 (1, 1)
    """
    if compute_dtype is None:
        compute_dtype = _default_epilogue_dtype()

    B, D = x.shape
    D_pad = int(params[0][0].shape[0])
    assert D <= D_pad, (D, D_pad)

    tile_b = _choose_tile_b(B, max_tile_b)
    num_tiles = pl.cdiv(B, tile_b)
    B_pad = num_tiles * tile_b

    # Pad batch rows and input features (lane-dense x tile; w1 rows are already padded).
    x = jnp.pad(x, ((0, B_pad - B), (0, D_pad - D)))

    flat = []
    for w, b in params:
        flat.extend([w, b])

    in_specs = [pl.BlockSpec((tile_b, D_pad), lambda i: (i, 0))]
    for arr in flat:
        # Full-array block with a constant index_map: DMA'd once, resident across the grid.
        in_specs.append(pl.BlockSpec(arr.shape, lambda i: (0, 0)))
    out_spec = pl.BlockSpec((1, 1, tile_b), lambda i: (i, 0, 0))

    flops = 2 * B_pad * sum(int(w.shape[0]) * int(w.shape[1]) for w, _ in params)
    bytes_accessed = (int(x.size) * x.dtype.itemsize
                      + sum(int(a.size) * a.dtype.itemsize for a in flat)
                      + B_pad * 4)

    y = pl.pallas_call(
        _make_kernel(compute_dtype),
        out_shape=jax.ShapeDtypeStruct((num_tiles, 1, tile_b), jnp.float32),
        grid=(num_tiles,),
        in_specs=in_specs,
        out_specs=out_spec,
        compiler_params=pltpu.CompilerParams(
            dimension_semantics=("parallel",)),
        cost_estimate=pl.CostEstimate(
            flops=flops, transcendentals=0, bytes_accessed=bytes_accessed),
    )(x, *flat)

    return y.reshape(B_pad, 1)[:B]


def make_params(key, input_dim):
    """He init, bias=0, deterministic BN stats; BN folded; padded to lane widths; bf16 weights."""
    d_in_pad0 = _round_up(input_dim, 128)
    true_dims = [input_dim] + HIDDEN_TRUE
    pad_dims = [d_in_pad0] + HIDDEN_PAD
    params = []
    for i in range(7):
        d_in, d_out = true_dims[i], true_dims[i + 1]
        p_in, p_out = pad_dims[i], pad_dims[i + 1]
        key, kw, kg, kb, km, kv = jax.random.split(key, 6)
        # He (Kaiming) normal init, bias = 0 (per module docstring).
        w = jax.random.normal(kw, (d_in, d_out), jnp.float32) * jnp.sqrt(2.0 / d_in)
        b = jnp.zeros((d_out,), jnp.float32)
        if i < 6:  # layers 1..6 have BatchNorm1d (eval mode, running stats) -> fold into linear
            gamma = 1.0 + 0.1 * jax.random.normal(kg, (d_out,), jnp.float32)
            beta = 0.1 * jax.random.normal(kb, (d_out,), jnp.float32)
            running_mean = 0.1 * jax.random.normal(km, (d_out,), jnp.float32)
            running_var = 1.0 + 0.1 * jnp.abs(jax.random.normal(kv, (d_out,), jnp.float32))
            scale = gamma / jnp.sqrt(running_var + BN_EPS)
            shift = beta - running_mean * scale
            w_eff = w * scale[None, :]
            b_eff = b * scale + shift
            # Zero-pad; padded output columns stay exactly 0 through leaky_relu (bias pad = 0).
            w_pad = jnp.zeros((p_in, p_out), jnp.float32).at[:d_in, :d_out].set(w_eff)
            b_pad = jnp.zeros((1, p_out), jnp.float32).at[0, :d_out].set(b_eff)
        else:      # fc7: no BN; stored as a lane-dense (1, p_in) weight row + (1,1) bias.
            w_pad = jnp.zeros((1, p_in), jnp.float32).at[0, :d_in].set(w[:, 0])
            b_pad = b.reshape(1, 1)
        params.append((w_pad.astype(jnp.bfloat16), b_pad))
    return params


def reference_forward(x, params, *, compute_dtype=jnp.float32):
    """Pure-JAX reference replicating the kernel's numeric recipe."""
    cdt = compute_dtype

    def lin(h, wb):
        w, b = wb
        acc = jnp.dot(h.astype(jnp.bfloat16), w, preferred_element_type=jnp.float32)
        return acc.astype(cdt) + b.astype(cdt)

    D_pad = int(params[0][0].shape[0])
    x = jnp.pad(x, ((0, 0), (0, D_pad - x.shape[1]))).astype(jnp.float32)

    identity = _leaky_relu(lin(x, params[0]))
    out = _leaky_relu(lin(identity, params[1]) + identity)
    for i in range(2, 6):
        out = _leaky_relu(lin(out, params[i]))
    w7, b7 = params[6]
    y = jax.lax.dot_general(
        w7, out.astype(jnp.bfloat16),
        dimension_numbers=(((1,), (1,)), ((), ())),
        preferred_element_type=jnp.float32) + b7          # (1, B)
    return jnp.transpose(y)                                # (B, 1)


if __name__ == "__main__":
    key = jax.random.PRNGKey(0)
    key, kx, kp = jax.random.split(key, 3)

    batch = 8
    input_dim = 32
    x = jax.random.normal(kx, (batch, input_dim), jnp.float32)

    params = make_params(kp, input_dim)

    cdt = _default_epilogue_dtype()
    y = residual_complex_nn_forward(x, params, compute_dtype=cdt)
    y = jax.block_until_ready(y)

    y_ref = reference_forward(x, params, compute_dtype=cdt)
    assert y.shape == (batch, 1), y.shape
    assert jnp.allclose(y, y_ref, atol=1e-2, rtol=1e-2), (y, y_ref)

    print("KERNEL_OK")
</pallas_src>

<mosaic_0001>
module attributes {stable_mosaic.version = 11 : i64} {
  func.func @kernel(%arg0: i32, %arg1: memref<128x128xf32, #tpu.memory_space<vmem>>, %arg2: memref<128x512xbf16, #tpu.memory_space<vmem>>, %arg3: memref<1x512xf32, #tpu.memory_space<vmem>>, %arg4: memref<512x512xbf16, #tpu.memory_space<vmem>>, %arg5: memref<1x512xf32, #tpu.memory_space<vmem>>, %arg6: memref<512x256xbf16, #tpu.memory_space<vmem>>, %arg7: memref<1x256xf32, #tpu.memory_space<vmem>>, %arg8: memref<256x128xbf16, #tpu.memory_space<vmem>>, %arg9: memref<1x128xf32, #tpu.memory_space<vmem>>, %arg10: memref<128x128xbf16, #tpu.memory_space<vmem>>, %arg11: memref<1x128xf32, #tpu.memory_space<vmem>>, %arg12: memref<128x128xbf16, #tpu.memory_space<vmem>>, %arg13: memref<1x128xf32, #tpu.memory_space<vmem>>, %arg14: memref<1x128xbf16, #tpu.memory_space<vmem>>, %arg15: memref<1x1xf32, #tpu.memory_space<vmem>>, %arg16: memref<1x1x128xf32, #tpu.memory_space<vmem>>) attributes {dimension_semantics = [#tpu.dimension_semantics<parallel>], iteration_bounds = array<i64: 1>, scalar_prefetch = 0 : i64, scratch_operands = 0 : i64, tpu.core_type = #tpu.core_type<tc>, window_params = [{transform_indices = @transform_0, window_bounds = array<i64: 128, 128>}, {pipeline_mode = #tpu.pipeline_mode<synchronous>, transform_indices = @transform_1, window_bounds = array<i64: 128, 512>}, {pipeline_mode = #tpu.pipeline_mode<synchronous>, transform_indices = @transform_2, window_bounds = array<i64: 1, 512>}, {pipeline_mode = #tpu.pipeline_mode<synchronous>, transform_indices = @transform_3, window_bounds = array<i64: 512, 512>}, {pipeline_mode = #tpu.pipeline_mode<synchronous>, transform_indices = @transform_4, window_bounds = array<i64: 1, 512>}, {pipeline_mode = #tpu.pipeline_mode<synchronous>, transform_indices = @transform_5, window_bounds = array<i64: 512, 256>}, {pipeline_mode = #tpu.pipeline_mode<synchronous>, transform_indices = @transform_6, window_bounds = array<i64: 1, 256>}, {pipeline_mode = #tpu.pipeline_mode<synchronous>, transform_indices = @transform_7, window_bounds = array<i64: 256, 128>}, {pipeline_mode = #tpu.pipeline_mode<synchronous>, transform_indices = @transform_8, window_bounds = array<i64: 1, 128>}, {pipeline_mode = #tpu.pipeline_mode<synchronous>, transform_indices = @transform_9, window_bounds = array<i64: 128, 128>}, {pipeline_mode = #tpu.pipeline_mode<synchronous>, transform_indices = @transform_10, window_bounds = array<i64: 1, 128>}, {pipeline_mode = #tpu.pipeline_mode<synchronous>, transform_indices = @transform_11, window_bounds = array<i64: 128, 128>}, {pipeline_mode = #tpu.pipeline_mode<synchronous>, transform_indices = @transform_12, window_bounds = array<i64: 1, 128>}, {pipeline_mode = #tpu.pipeline_mode<synchronous>, transform_indices = @transform_13, window_bounds = array<i64: 1, 128>}, {pipeline_mode = #tpu.pipeline_mode<synchronous>, transform_indices = @transform_14, window_bounds = array<i64: 1, 1>}, {transform_indices = @transform_15, window_bounds = array<i64: 1, 1, 128>}]} {
    %c0 = arith.constant 0 : index
    %c0_0 = arith.constant 0 : index
    %0 = vector.load %arg1[%c0, %c0_0] : memref<128x128xf32, #tpu.memory_space<vmem>>, vector<128x128xf32>
    %1 = arith.truncf %0 : vector<128x128xf32> to vector<128x128xbf16>
    %c0_1 = arith.constant 0 : index
    %c0_2 = arith.constant 0 : index
    %2 = vector.load %arg2[%c0_1, %c0_2] : memref<128x512xbf16, #tpu.memory_space<vmem>>, vector<128x512xbf16>
    %cst = arith.constant dense<0.000000e+00> : vector<128x512xf32>
    %3 = tpu.matmul %1, %2, %cst {dimension_numbers = #tpu.dot_dimension_numbers<[1], [0], [0], [1], [0, 0, 1, 1], [], []>} : vector<128x128xbf16>, vector<128x512xbf16>, vector<128x512xf32> -> vector<128x512xf32>
    %4 = arith.truncf %3 : vector<128x512xf32> to vector<128x512xbf16>
    %c0_3 = arith.constant 0 : index
    %c0_4 = arith.constant 0 : index
    %5 = vector.load %arg3[%c0_3, %c0_4] : memref<1x512xf32, #tpu.memory_space<vmem>>, vector<1x512xf32>
    %6 = arith.truncf %5 : vector<1x512xf32> to vector<1x512xbf16>
    %7 = vector.broadcast %6 : vector<1x512xbf16> to vector<128x512xbf16>
    %8 = arith.addf %4, %7 : vector<128x512xbf16>
    %cst_5 = arith.constant 0.000000e+00 : bf16
    %9 = vector.broadcast %cst_5 : bf16 to vector<128x512xbf16>
    %10 = arith.cmpf oge, %8, %9 : vector<128x512xbf16>
    %cst_6 = arith.constant 1.000980e-02 : bf16
    %11 = vector.broadcast %cst_6 : bf16 to vector<128x512xbf16>
    %12 = arith.mulf %11, %8 : vector<128x512xbf16>
    %13 = arith.select %10, %8, %12 : vector<128x512xi1>, vector<128x512xbf16>
    %c0_7 = arith.constant 0 : index
    %c0_8 = arith.constant 0 : index
    %14 = vector.load %arg4[%c0_7, %c0_8] : memref<512x512xbf16, #tpu.memory_space<vmem>>, vector<512x512xbf16>
    %cst_9 = arith.constant dense<0.000000e+00> : vector<128x512xf32>
    %15 = tpu.matmul %13, %14, %cst_9 {dimension_numbers = #tpu.dot_dimension_numbers<[1], [0], [0], [1], [0, 0, 1, 1], [], []>} : vector<128x512xbf16>, vector<512x512xbf16>, vector<128x512xf32> -> vector<128x512xf32>
    %16 = arith.truncf %15 : vector<128x512xf32> to vector<128x512xbf16>
    %c0_10 = arith.constant 0 : index
    %c0_11 = arith.constant 0 : index
    %17 = vector.load %arg5[%c0_10, %c0_11] : memref<1x512xf32, #tpu.memory_space<vmem>>, vector<1x512xf32>
    %18 = arith.truncf %17 : vector<1x512xf32> to vector<1x512xbf16>
    %19 = vector.broadcast %18 : vector<1x512xbf16> to vector<128x512xbf16>
    %20 = arith.addf %16, %19 : vector<128x512xbf16>
    %21 = arith.addf %20, %13 : vector<128x512xbf16>
    %cst_12 = arith.constant 0.000000e+00 : bf16
    %22 = vector.broadcast %cst_12 : bf16 to vector<128x512xbf16>
    %23 = arith.cmpf oge, %21, %22 : vector<128x512xbf16>
    %cst_13 = arith.constant 1.000980e-02 : bf16
    %24 = vector.broadcast %cst_13 : bf16 to vector<128x512xbf16>
    %25 = arith.mulf %24, %21 : vector<128x512xbf16>
    %26 = arith.select %23, %21, %25 : vector<128x512xi1>, vector<128x512xbf16>
    %c0_14 = arith.constant 0 : index
    %c0_15 = arith.constant 0 : index
    %27 = vector.load %arg6[%c0_14, %c0_15] : memref<512x256xbf16, #tpu.memory_space<vmem>>, vector<512x256xbf16>
    %cst_16 = arith.constant dense<0.000000e+00> : vector<128x256xf32>
    %28 = tpu.matmul %26, %27, %cst_16 {dimension_numbers = #tpu.dot_dimension_numbers<[1], [0], [0], [1], [0, 0, 1, 1], [], []>} : vector<128x512xbf16>, vector<512x256xbf16>, vector<128x256xf32> -> vector<128x256xf32>
    %29 = arith.truncf %28 : vector<128x256xf32> to vector<128x256xbf16>
    %c0_17 = arith.constant 0 : index
    %c0_18 = arith.constant 0 : index
    %30 = vector.load %arg7[%c0_17, %c0_18] : memref<1x256xf32, #tpu.memory_space<vmem>>, vector<1x256xf32>
    %31 = arith.truncf %30 : vector<1x256xf32> to vector<1x256xbf16>
    %32 = vector.broadcast %31 : vector<1x256xbf16> to vector<128x256xbf16>
    %33 = arith.addf %29, %32 : vector<128x256xbf16>
    %cst_19 = arith.constant 0.000000e+00 : bf16
    %34 = vector.broadcast %cst_19 : bf16 to vector<128x256xbf16>
    %35 = arith.cmpf oge, %33, %34 : vector<128x256xbf16>
    %cst_20 = arith.constant 1.000980e-02 : bf16
    %36 = vector.broadcast %cst_20 : bf16 to vector<128x256xbf16>
    %37 = arith.mulf %36, %33 : vector<128x256xbf16>
    %38 = arith.select %35, %33, %37 : vector<128x256xi1>, vector<128x256xbf16>
    %c0_21 = arith.constant 0 : index
    %c0_22 = arith.constant 0 : index
    %39 = vector.load %arg8[%c0_21, %c0_22] : memref<256x128xbf16, #tpu.memory_space<vmem>>, vector<256x128xbf16>
    %cst_23 = arith.constant dense<0.000000e+00> : vector<128x128xf32>
    %40 = tpu.matmul %38, %39, %cst_23 {dimension_numbers = #tpu.dot_dimension_numbers<[1], [0], [0], [1], [0, 0, 1, 1], [], []>} : vector<128x256xbf16>, vector<256x128xbf16>, vector<128x128xf32> -> vector<128x128xf32>
    %41 = arith.truncf %40 : vector<128x128xf32> to vector<128x128xbf16>
    %c0_24 = arith.constant 0 : index
    %c0_25 = arith.constant 0 : index
    %42 = vector.load %arg9[%c0_24, %c0_25] : memref<1x128xf32, #tpu.memory_space<vmem>>, vector<1x128xf32>
    %43 = arith.truncf %42 : vector<1x128xf32> to vector<1x128xbf16>
    %44 = vector.broadcast %43 : vector<1x128xbf16> to vector<128x128xbf16>
    %45 = arith.addf %41, %44 : vector<128x128xbf16>
    %cst_26 = arith.constant 0.000000e+00 : bf16
    %46 = vector.broadcast %cst_26 : bf16 to vector<128x128xbf16>
    %47 = arith.cmpf oge, %45, %46 : vector<128x128xbf16>
    %cst_27 = arith.constant 1.000980e-02 : bf16
    %48 = vector.broadcast %cst_27 : bf16 to vector<128x128xbf16>
    %49 = arith.mulf %48, %45 : vector<128x128xbf16>
    %50 = arith.select %47, %45, %49 : vector<128x128xi1>, vector<128x128xbf16>
    %c0_28 = arith.constant 0 : index
    %c0_29 = arith.constant 0 : index
    %51 = vector.load %arg10[%c0_28, %c0_29] : memref<128x128xbf16, #tpu.memory_space<vmem>>, vector<128x128xbf16>
    %cst_30 = arith.constant dense<0.000000e+00> : vector<128x128xf32>
    %52 = tpu.matmul %50, %51, %cst_30 {dimension_numbers = #tpu.dot_dimension_numbers<[1], [0], [0], [1], [0, 0, 1, 1], [], []>} : vector<128x128xbf16>, vector<128x128xbf16>, vector<128x128xf32> -> vector<128x128xf32>
    %53 = arith.truncf %52 : vector<128x128xf32> to vector<128x128xbf16>
    %c0_31 = arith.constant 0 : index
    %c0_32 = arith.constant 0 : index
    %54 = vector.load %arg11[%c0_31, %c0_32] : memref<1x128xf32, #tpu.memory_space<vmem>>, vector<1x128xf32>
    %55 = arith.truncf %54 : vector<1x128xf32> to vector<1x128xbf16>
    %56 = vector.broadcast %55 : vector<1x128xbf16> to vector<128x128xbf16>
    %57 = arith.addf %53, %56 : vector<128x128xbf16>
    %cst_33 = arith.constant 0.000000e+00 : bf16
    %58 = vector.broadcast %cst_33 : bf16 to vector<128x128xbf16>
    %59 = arith.cmpf oge, %57, %58 : vector<128x128xbf16>
    %cst_34 = arith.constant 1.000980e-02 : bf16
    %60 = vector.broadcast %cst_34 : bf16 to vector<128x128xbf16>
    %61 = arith.mulf %60, %57 : vector<128x128xbf16>
    %62 = arith.select %59, %57, %61 : vector<128x128xi1>, vector<128x128xbf16>
    %c0_35 = arith.constant 0 : index
    %c0_36 = arith.constant 0 : index
    %63 = vector.load %arg12[%c0_35, %c0_36] : memref<128x128xbf16, #tpu.memory_space<vmem>>, vector<128x128xbf16>
    %cst_37 = arith.constant dense<0.000000e+00> : vector<128x128xf32>
    %64 = tpu.matmul %62, %63, %cst_37 {dimension_numbers = #tpu.dot_dimension_numbers<[1], [0], [0], [1], [0, 0, 1, 1], [], []>} : vector<128x128xbf16>, vector<128x128xbf16>, vector<128x128xf32> -> vector<128x128xf32>
    %65 = arith.truncf %64 : vector<128x128xf32> to vector<128x128xbf16>
    %c0_38 = arith.constant 0 : index
    %c0_39 = arith.constant 0 : index
    %66 = vector.load %arg13[%c0_38, %c0_39] : memref<1x128xf32, #tpu.memory_space<vmem>>, vector<1x128xf32>
    %67 = arith.truncf %66 : vector<1x128xf32> to vector<1x128xbf16>
    %68 = vector.broadcast %67 : vector<1x128xbf16> to vector<128x128xbf16>
    %69 = arith.addf %65, %68 : vector<128x128xbf16>
    %cst_40 = arith.constant 0.000000e+00 : bf16
    %70 = vector.broadcast %cst_40 : bf16 to vector<128x128xbf16>
    %71 = arith.cmpf oge, %69, %70 : vector<128x128xbf16>
    %cst_41 = arith.constant 1.000980e-02 : bf16
    %72 = vector.broadcast %cst_41 : bf16 to vector<128x128xbf16>
    %73 = arith.mulf %72, %69 : vector<128x128xbf16>
    %74 = arith.select %71, %69, %73 : vector<128x128xi1>, vector<128x128xbf16>
    %c0_42 = arith.constant 0 : index
    %c0_43 = arith.constant 0 : index
    %75 = vector.load %arg14[%c0_42, %c0_43] : memref<1x128xbf16, #tpu.memory_space<vmem>>, vector<1x128xbf16>
    %cst_44 = arith.constant dense<0.000000e+00> : vector<1x128xf32>
    %76 = tpu.matmul %75, %74, %cst_44 {dimension_numbers = #tpu.dot_dimension_numbers<[1], [1], [0], [0], [0, 0, 1, 0], [], []>} : vector<1x128xbf16>, vector<128x128xbf16>, vector<1x128xf32> -> vector<1x128xf32>
    %c0_45 = arith.constant 0 : index
    %c0_46 = arith.constant 0 : index
    %77 = vector.load %arg15[%c0_45, %c0_46] : memref<1x1xf32, #tpu.memory_space<vmem>>, vector<1x1xf32>
    %78 = vector.broadcast %77 : vector<1x1xf32> to vector<1x128xf32>
    %79 = arith.addf %76, %78 : vector<1x128xf32>
    %80 = vector.shape_cast %79 : vector<1x128xf32> to vector<1x1x128xf32>
    %c0_47 = arith.constant 0 : index
    %c0_48 = arith.constant 0 : index
    %c0_49 = arith.constant 0 : index
    %81 = vector.load %arg16[%c0_47, %c0_48, %c0_49] : memref<1x1x128xf32, #tpu.memory_space<vmem>>, vector<1x1x128xf32>
    tpu.vector_store %arg16[%c0_47, %c0_48, %c0_49], %80 {strides = array<i32>} : memref<1x1x128xf32, #tpu.memory_space<vmem>>, vector<1x1x128xf32>,
    return
  }
  func.func @transform_0(%arg0: i32) -> (i32, i32) {
    %c0_i32 = arith.constant 0 : i32
    %c0_i32_0 = arith.constant 0 : i32
    return %arg0, %c0_i32 : i32, i32
  }
  func.func @transform_1(%arg0: i32) -> (i32, i32) {
    %c0_i32 = arith.constant 0 : i32
    %c0_i32_0 = arith.constant 0 : i32
    %c0_i32_1 = arith.constant 0 : i32
    return %c0_i32, %c0_i32_0 : i32, i32
  }
  func.func @transform_2(%arg0: i32) -> (i32, i32) {
    %c0_i32 = arith.constant 0 : i32
    %c0_i32_0 = arith.constant 0 : i32
    %c0_i32_1 = arith.constant 0 : i32
    return %c0_i32, %c0_i32_0 : i32, i32
  }
  func.func @transform_3(%arg0: i32) -> (i32, i32) {
    %c0_i32 = arith.constant 0 : i32
    %c0_i32_0 = arith.constant 0 : i32
    %c0_i32_1 = arith.constant 0 : i32
    return %c0_i32, %c0_i32_0 : i32, i32
  }
  func.func @transform_4(%arg0: i32) -> (i32, i32) {
    %c0_i32 = arith.constant 0 : i32
    %c0_i32_0 = arith.constant 0 : i32
    %c0_i32_1 = arith.constant 0 : i32
    return %c0_i32, %c0_i32_0 : i32, i32
  }
  func.func @transform_5(%arg0: i32) -> (i32, i32) {
    %c0_i32 = arith.constant 0 : i32
    %c0_i32_0 = arith.constant 0 : i32
    %c0_i32_1 = arith.constant 0 : i32
    return %c0_i32, %c0_i32_0 : i32, i32
  }
  func.func @transform_6(%arg0: i32) -> (i32, i32) {
    %c0_i32 = arith.constant 0 : i32
    %c0_i32_0 = arith.constant 0 : i32
    %c0_i32_1 = arith.constant 0 : i32
    return %c0_i32, %c0_i32_0 : i32, i32
  }
  func.func @transform_7(%arg0: i32) -> (i32, i32) {
    %c0_i32 = arith.constant 0 : i32
    %c0_i32_0 = arith.constant 0 : i32
    %c0_i32_1 = arith.constant 0 : i32
    return %c0_i32, %c0_i32_0 : i32, i32
  }
  func.func @transform_8(%arg0: i32) -> (i32, i32) {
    %c0_i32 = arith.constant 0 : i32
    %c0_i32_0 = arith.constant 0 : i32
    %c0_i32_1 = arith.constant 0 : i32
    return %c0_i32, %c0_i32_0 : i32, i32
  }
  func.func @transform_9(%arg0: i32) -> (i32, i32) {
    %c0_i32 = arith.constant 0 : i32
    %c0_i32_0 = arith.constant 0 : i32
    %c0_i32_1 = arith.constant 0 : i32
    return %c0_i32, %c0_i32_0 : i32, i32
  }
  func.func @transform_10(%arg0: i32) -> (i32, i32) {
    %c0_i32 = arith.constant 0 : i32
    %c0_i32_0 = arith.constant 0 : i32
    %c0_i32_1 = arith.constant 0 : i32
    return %c0_i32, %c0_i32_0 : i32, i32
  }
  func.func @transform_11(%arg0: i32) -> (i32, i32) {
    %c0_i32 = arith.constant 0 : i32
    %c0_i32_0 = arith.constant 0 : i32
    %c0_i32_1 = arith.constant 0 : i32
    return %c0_i32, %c0_i32_0 : i32, i32
  }
  func.func @transform_12(%arg0: i32) -> (i32, i32) {
    %c0_i32 = arith.constant 0 : i32
    %c0_i32_0 = arith.constant 0 : i32
    %c0_i32_1 = arith.constant 0 : i32
    return %c0_i32, %c0_i32_0 : i32, i32
  }
  func.func @transform_13(%arg0: i32) -> (i32, i32) {
    %c0_i32 = arith.constant 0 : i32
    %c0_i32_0 = arith.constant 0 : i32
    %c0_i32_1 = arith.constant 0 : i32
    return %c0_i32, %c0_i32_0 : i32, i32
  }
  func.func @transform_14(%arg0: i32) -> (i32, i32) {
    %c0_i32 = arith.constant 0 : i32
    %c0_i32_0 = arith.constant 0 : i32
    %c0_i32_1 = arith.constant 0 : i32
    return %c0_i32, %c0_i32_0 : i32, i32
  }
  func.func @transform_15(%arg0: i32) -> (i32, i32, i32) {
    %c0_i32 = arith.constant 0 : i32
    %c0_i32_0 = arith.constant 0 : i32
    %c0_i32_1 = arith.constant 0 : i32
    return %arg0, %c0_i32, %c0_i32_0 : i32, i32, i32
  }
}

</mosaic_0001>

<llo_original>
// kernel: tpu_custom_call.1
$region0: #{tpu_custom_call.1}
  #allocation0 [shape = 'u32[]', space=smem, size = 0x4, offset = 0x4, fixed_abs, tag = 'smem constant byte address 0x4 - core index']
  #allocation1 [shape = 'u32[144,128]{1,0:T(1,128)}', space=vmem, size = 0x12000, scoped, tag = 'internal scratch']
  #allocation2 [shape = 'f32[1,1]{1,0:T(1,128)S(1)}', space=vmem, size = 0x200, scoped, tag = 'scoped memory for tpu_custom_call.1']
  %s0 = inlined_call_operand.hbm [shape: f32[128,128], index: 0, kind: input, shape index: {}]
  %s1 = inlined_call_operand.hbm [shape: bf16[128,512], index: 1, kind: input, shape index: {}]
  %s2 = inlined_call_operand.vmem [shape: f32[1,512], index: 2, kind: input, shape index: {}]
  %s3 = inlined_call_operand.hbm [shape: bf16[512,512], index: 3, kind: input, shape index: {}]
  %s4 = inlined_call_operand.vmem [shape: f32[1,512], index: 4, kind: input, shape index: {}]
  %s5 = inlined_call_operand.hbm [shape: bf16[512,256], index: 5, kind: input, shape index: {}]
  %s6 = inlined_call_operand.vmem [shape: f32[1,256], index: 6, kind: input, shape index: {}]
  %s7 = inlined_call_operand.hbm [shape: bf16[256,128], index: 7, kind: input, shape index: {}]
  %s8 = inlined_call_operand.vmem [shape: f32[1,128], index: 8, kind: input, shape index: {}]
  %s9 = inlined_call_operand.hbm [shape: bf16[128,128], index: 9, kind: input, shape index: {}]
  %s10 = inlined_call_operand.vmem [shape: f32[1,128], index: 10, kind: input, shape index: {}]
  %s11 = inlined_call_operand.hbm [shape: bf16[128,128], index: 11, kind: input, shape index: {}]
  %s12 = inlined_call_operand.vmem [shape: f32[1,128], index: 12, kind: input, shape index: {}]
  %s13 = inlined_call_operand.vmem [shape: bf16[1,128], index: 13, kind: input, shape index: {}]
  %s14 = inlined_call_operand.<no memory space> [shape: f32[1,1], index: 14, kind: input, shape index: {}]
  %s15 = inlined_call_operand.hbm [shape: f32[1,1,128], index: 15, kind: output, shape index: {}]
  %s16 = sld [smem:[#allocation0]]
  $region98: #{tpu_custom_call.1} parent=0
    _
  %s18 = ssub.s32 1, %s16
  %s19 = scalar_select 0, %s18, %s16
  %v20 = vstv %s14
  %21 = vst [vmem:[#allocation2] sm:$0x1] %v20
  $region1: #{tpu_custom_call.1} parent=0
    #allocation3 [shape = 'u8[65536]{0}', space=vmem, size = 0x10000, scoped, tag = 'input window, operand 0, single buffered']
    #allocation4 [shape = 's32[1]{0}', space=sflag, size = 0x4, scoped, tag = 'scoped memory for tpu_custom_call.1']
    #allocation5 [shape = 's32[1]{0}', space=sflag, size = 0x4, scoped, tag = 'scoped memory for tpu_custom_call.1']
    #allocation6 [shape = 'u8[131072]{0}', space=vmem, size = 0x20000, scoped, tag = 'input window, operand 1, single buffered']
    #allocation7 [shape = 's32[1]{0}', space=sflag, size = 0x4, scoped, tag = 'scoped memory for tpu_custom_call.1']
    #allocation8 [shape = 'u8[524288]{0}', space=vmem, size = 0x80000, scoped, tag = 'input window, operand 3, single buffered']
    #allocation9 [shape = 'u8[262144]{0}', space=vmem, size = 0x40000, scoped, tag = 'input window, operand 5, single buffered']
    #allocation10 [shape = 's32[1]{0}', space=sflag, size = 0x4, scoped, tag = 'scoped memory for tpu_custom_call.1']
    #allocation11 [shape = 'u8[65536]{0}', space=vmem, size = 0x10000, scoped, tag = 'input window, operand 7, single buffered']
    #allocation12 [shape = 'u8[32768]{0}', space=vmem, size = 0x8000, scoped, tag = 'input window, operand 9, single buffered']
    #allocation13 [shape = 's32[1]{0}', space=sflag, size = 0x4, scoped, tag = 'scoped memory for tpu_custom_call.1']
    #allocation14 [shape = 'u8[32768]{0}', space=vmem, size = 0x8000, scoped, tag = 'input window, operand 11, single buffered']
    #allocation15 [shape = 'u8[512]{0}', space=vmem, size = 0x400, scoped, tag = 'output window, operand 0, single buffered']
    %22 = vsyncpa [#allocation4], 0
    %23 = vsyncpa [#allocation7], 0
    %24 = vsyncpa [#allocation10], 0
    %25 = vsyncpa [#allocation13], 0
    %26 = vsyncpa [#allocation5], 0
    // Predicated region
    $region2: #{tpu_custom_call.1} parent=1 // pred_check
      _
    $region3: #{tpu_custom_call.1} parent=1 // pred_check_branch
      %28 = sbr.rel (0) target = $region5
    $region4: #{tpu_custom_call.1} parent=1 // pred_region
      %s30 = ssub.s32 2048, 2048
      %31 = vsyncadd [#allocation4], %s30
      %s32 = sshll.u32 [#allocation3], 4
      %s33 = int_to_ptr.vmem [resolvable:$true] %s32
      %38 = dma.hbm_to_vmem [thread:$0]  %s0, 2048, %s33, [#allocation4], 128, 128, 8
    $region5: #{tpu_custom_call.1} parent=1 // pred_fallthru
      _
    // Predicated region
    $region6: #{tpu_custom_call.1} parent=1 // pred_check
      _
    $region7: #{tpu_custom_call.1} parent=1 // pred_check_branch
      %40 = sbr.rel (0) target = $region9
    $region8: #{tpu_custom_call.1} parent=1 // pred_region
      %s42 = ssub.s32 4096, 4096
      %43 = vsyncadd [#allocation7], %s42
      %s44 = sshll.u32 [#allocation6], 4
      %s45 = int_to_ptr.vmem [resolvable:$true] %s44
      %50 = dma.hbm_to_vmem [thread:$0]  %s1, 4096, %s45, [#allocation7], 256, 256, 16
    $region9: #{tpu_custom_call.1} parent=1 // pred_fallthru
      _
    // Predicated region
    $region10: #{tpu_custom_call.1} parent=1 // pred_check
      _
    $region11: #{tpu_custom_call.1} parent=1 // pred_check_branch
      %52 = sbr.rel (0) target = $region13
    $region12: #{tpu_custom_call.1} parent=1 // pred_region
      _
    $region13: #{tpu_custom_call.1} parent=1 // pred_fallthru
      _
    // Predicated region
    $region14: #{tpu_custom_call.1} parent=1 // pred_check
      _
    $region15: #{tpu_custom_call.1} parent=1 // pred_check_branch
      %54 = sbr.rel (0) target = $region17
    $region16: #{tpu_custom_call.1} parent=1 // pred_region
      %s56 = ssub.s32 16384, 16384
      %57 = vsyncadd [#allocation7], %s56
      %s58 = sshll.u32 [#allocation8], 4
      %s59 = int_to_ptr.vmem [resolvable:$true] %s58
      %64 = dma.hbm_to_vmem [thread:$0]  %s3, 16384, %s59, [#allocation7], 256, 256, 16
    $region17: #{tpu_custom_call.1} parent=1 // pred_fallthru
      _
    // Predicated region
    $region18: #{tpu_custom_call.1} parent=1 // pred_check
      _
    $region19: #{tpu_custom_call.1} parent=1 // pred_check_branch
      %66 = sbr.rel (0) target = $region21
    $region20: #{tpu_custom_call.1} parent=1 // pred_region
      _
    $region21: #{tpu_custom_call.1} parent=1 // pred_fallthru
      _
    // Predicated region
    $region22: #{tpu_custom_call.1} parent=1 // pred_check
      _
    $region23: #{tpu_custom_call.1} parent=1 // pred_check_branch
      %68 = sbr.rel (0) target = $region25
    $region24: #{tpu_custom_call.1} parent=1 // pred_region
      %s70 = ssub.s32 8192, 8192
      %71 = vsyncadd [#allocation10], %s70
      %s72 = sshll.u32 [#allocation9], 4
      %s73 = int_to_ptr.vmem [resolvable:$true] %s72
      %78 = dma.hbm_to_vmem [thread:$0]  %s5, 8192, %s73, [#allocation10], 128, 128, 8
    $region25: #{tpu_custom_call.1} parent=1 // pred_fallthru
      _
    // Predicated region
    $region26: #{tpu_custom_call.1} parent=1 // pred_check
      _
    $region27: #{tpu_custom_call.1} parent=1 // pred_check_branch
      %80 = sbr.rel (0) target = $region29
    $region28: #{tpu_custom_call.1} parent=1 // pred_region
      _
    $region29: #{tpu_custom_call.1} parent=1 // pred_fallthru
      _
    // Predicated region
    $region30: #{tpu_custom_call.1} parent=1 // pred_check
      _
    $region31: #{tpu_custom_call.1} parent=1 // pred_check_branch
      %82 = sbr.rel (0) target = $region33
    $region32: #{tpu_custom_call.1} parent=1 // pred_region
      %s84 = ssub.s32 2048, 2048
      %85 = vsyncadd [#allocation10], %s84
      %s86 = sshll.u32 [#allocation11], 4
      %s87 = int_to_ptr.vmem [resolvable:$true] %s86
      %92 = dma.hbm_to_vmem [thread:$0]  %s7, 2048, %s87, [#allocation10], 64, 64, 4
    $region33: #{tpu_custom_call.1} parent=1 // pred_fallthru
      _
    // Predicated region
    $region34: #{tpu_custom_call.1} parent=1 // pred_check
      _
    $region35: #{tpu_custom_call.1} parent=1 // pred_check_branch
      %94 = sbr.rel (0) target = $region37
    $region36: #{tpu_custom_call.1} parent=1 // pred_region
      _
    $region37: #{tpu_custom_call.1} parent=1 // pred_fallthru
      _
    // Predicated region
    $region38: #{tpu_custom_call.1} parent=1 // pred_check
      _
    $region39: #{tpu_custom_call.1} parent=1 // pred_check_branch
      %96 = sbr.rel (0) target = $region41
    $region40: #{tpu_custom_call.1} parent=1 // pred_region
      %s98 = ssub.s32 1024, 1024
      %99 = vsyncadd [#allocation13], %s98
      %s100 = sshll.u32 [#allocation12], 4
      %s101 = int_to_ptr.vmem [resolvable:$true] %s100
      %106 = dma.hbm_to_vmem [thread:$0]  %s9, 1024, %s101, [#allocation13], 64, 64, 4
    $region41: #{tpu_custom_call.1} parent=1 // pred_fallthru
      _
    // Predicated region
    $region42: #{tpu_custom_call.1} parent=1 // pred_check
      _
    $region43: #{tpu_custom_call.1} parent=1 // pred_check_branch
      %108 = sbr.rel (0) target = $region45
    $region44: #{tpu_custom_call.1} parent=1 // pred_region
      _
    $region45: #{tpu_custom_call.1} parent=1 // pred_fallthru
      _
    // Predicated region
    $region46: #{tpu_custom_call.1} parent=1 // pred_check
      _
    $region47: #{tpu_custom_call.1} parent=1 // pred_check_branch
      %110 = sbr.rel (0) target = $region49
    $region48: #{tpu_custom_call.1} parent=1 // pred_region
      %s112 = ssub.s32 1024, 1024
      %113 = vsyncadd [#allocation13], %s112
      %s114 = sshll.u32 [#allocation14], 4
      %s115 = int_to_ptr.vmem [resolvable:$true] %s114
      %120 = dma.hbm_to_vmem [thread:$0]  %s11, 1024, %s115, [#allocation13], 64, 64, 4
    $region49: #{tpu_custom_call.1} parent=1 // pred_fallthru
      _
    // Predicated region
    $region50: #{tpu_custom_call.1} parent=1 // pred_check
      _
    $region51: #{tpu_custom_call.1} parent=1 // pred_check_branch
      %122 = sbr.rel (0) target = $region53
    $region52: #{tpu_custom_call.1} parent=1 // pred_region
      _
    $region53: #{tpu_custom_call.1} parent=1 // pred_fallthru
      _
    // Predicated region
    $region54: #{tpu_custom_call.1} parent=1 // pred_check
      _
    $region55: #{tpu_custom_call.1} parent=1 // pred_check_branch
      %124 = sbr.rel (0) target = $region57
    $region56: #{tpu_custom_call.1} parent=1 // pred_region
      _
    $region57: #{tpu_custom_call.1} parent=1 // pred_fallthru
      _
    // Predicated region
    $region58: #{tpu_custom_call.1} parent=1 // pred_check
      _
    $region59: #{tpu_custom_call.1} parent=1 // pred_check_branch
      %126 = sbr.rel (0) target = $region61
    $region60: #{tpu_custom_call.1} parent=1 // pred_region
      _
    $region61: #{tpu_custom_call.1} parent=1 // pred_fallthru
      _
    // Predicated region
    $region62: #{tpu_custom_call.1} parent=1 // pred_check
      _
    $region63: #{tpu_custom_call.1} parent=1 // pred_check_branch
      %128 = sbr.rel (0) target = $region65
    $region64: #{tpu_custom_call.1} parent=1 // pred_region
      %129 = dma.done [#allocation4], 2048
    $region65: #{tpu_custom_call.1} parent=1 // pred_fallthru
      _
    // Predicated region
    $region66: #{tpu_custom_call.1} parent=1 // pred_check
      _
    $region67: #{tpu_custom_call.1} parent=1 // pred_check_branch
      %131 = sbr.rel (0) target = $region69
    $region68: #{tpu_custom_call.1} parent=1 // pred_region
      %132 = dma.done [#allocation7], 4096
    $region69: #{tpu_custom_call.1} parent=1 // pred_fallthru
      _
    // Predicated region
    $region70: #{tpu_custom_call.1} parent=1 // pred_check
      _
    $region71: #{tpu_custom_call.1} parent=1 // pred_check_branch
      %134 = sbr.rel (0) target = $region73
    $region72: #{tpu_custom_call.1} parent=1 // pred_region
      %135 = dma.done [#allocation7], 16384
    $region73: #{tpu_custom_call.1} parent=1 // pred_fallthru
      _
    // Predicated region
    $region74: #{tpu_custom_call.1} parent=1 // pred_check
      _
    $region75: #{tpu_custom_call.1} parent=1 // pred_check_branch
      %137 = sbr.rel (0) target = $region77
    $region76: #{tpu_custom_call.1} parent=1 // pred_region
      %138 = dma.done [#allocation10], 8192
    $region77: #{tpu_custom_call.1} parent=1 // pred_fallthru
      _
    // Predicated region
    $region78: #{tpu_custom_call.1} parent=1 // pred_check
      _
    $region79: #{tpu_custom_call.1} parent=1 // pred_check_branch
      %140 = sbr.rel (0) target = $region81
    $region80: #{tpu_custom_call.1} parent=1 // pred_region
      %141 = dma.done [#allocation10], 2048
    $region81: #{tpu_custom_call.1} parent=1 // pred_fallthru
      _
    // Predicated region
    $region82: #{tpu_custom_call.1} parent=1 // pred_check
      _
    $region83: #{tpu_custom_call.1} parent=1 // pred_check_branch
      %143 = sbr.rel (0) target = $region85
    $region84: #{tpu_custom_call.1} parent=1 // pred_region
      %144 = dma.done [#allocation13], 1024
    $region85: #{tpu_custom_call.1} parent=1 // pred_fallthru
      _
    // Predicated region
    $region86: #{tpu_custom_call.1} parent=1 // pred_check
      _
    $region87: #{tpu_custom_call.1} parent=1 // pred_check_branch
      %146 = sbr.rel (0) target = $region89
    $region88: #{tpu_custom_call.1} parent=1 // pred_region
      %147 = dma.done [#allocation13], 1024
    $region89: #{tpu_custom_call.1} parent=1 // pred_fallthru
      _
    %v150 = vld [vmem:[#allocation3] sm:$0xff]
    %v151 = vld [vmem:[#allocation3 + $0x8] sm:$0xff]
    %v152 = vld [vmem:[#allocation3 + $0x10] sm:$0xff]
    %v153 = vld [vmem:[#allocation3 + $0x18] sm:$0xff]
    %v154 = vld [vmem:[#allocation3 + $0x20] sm:$0xff]
    %v155 = vld [vmem:[#allocation3 + $0x28] sm:$0xff]
    %v156 = vld [vmem:[#allocation3 + $0x30] sm:$0xff]
    %v157 = vld [vmem:[#allocation3 + $0x38] sm:$0xff]
    %v158 = vld [vmem:[#allocation3 + $0x40] sm:$0xff]
    %v159 = vld [vmem:[#allocation3 + $0x48] sm:$0xff]
    %v160 = vld [vmem:[#allocation3 + $0x50] sm:$0xff]
    %v161 = vld [vmem:[#allocation3 + $0x58] sm:$0xff]
    %v162 = vld [vmem:[#allocation3 + $0x60] sm:$0xff]
    %v163 = vld [vmem:[#allocation3 + $0x68] sm:$0xff]
    %v164 = vld [vmem:[#allocation3 + $0x70] sm:$0xff]
    %v165 = vld [vmem:[#allocation3 + $0x78] sm:$0xff]
    %v166 = vpack.c.bf16 %v151, %v150
    %v167 = vpack.c.bf16 %v153, %v152
    %v168 = vpack.c.bf16 %v155, %v154
    %v169 = vpack.c.bf16 %v157, %v156
    %v170 = vpack.c.bf16 %v159, %v158
    %v171 = vpack.c.bf16 %v161, %v160
    %v172 = vpack.c.bf16 %v163, %v162
    %v173 = vpack.c.bf16 %v165, %v164
    %v174 = vld [vmem:[#allocation6] sm:$0xff]
    %v175 = vld [vmem:[#allocation6 + $0x8] sm:$0xff]
    %v176 = vld [vmem:[#allocation6 + $0x10] sm:$0xff]
    %v177 = vld [vmem:[#allocation6 + $0x18] sm:$0xff]
    %v178 = vld [vmem:[#allocation6 + $0x20] sm:$0xff]
    %v179 = vld [vmem:[#allocation6 + $0x28] sm:$0xff]
    %v180 = vld [vmem:[#allocation6 + $0x30] sm:$0xff]
    %v181 = vld [vmem:[#allocation6 + $0x38] sm:$0xff]
    %v182 = vld [vmem:[#allocation6 + $0x40] sm:$0xff]
    %v183 = vld [vmem:[#allocation6 + $0x48] sm:$0xff]
    %v184 = vld [vmem:[#allocation6 + $0x50] sm:$0xff]
    %v185 = vld [vmem:[#allocation6 + $0x58] sm:$0xff]
    %v186 = vld [vmem:[#allocation6 + $0x60] sm:$0xff]
    %v187 = vld [vmem:[#allocation6 + $0x68] sm:$0xff]
    %v188 = vld [vmem:[#allocation6 + $0x70] sm:$0xff]
    %v189 = vld [vmem:[#allocation6 + $0x78] sm:$0xff]
    %v190 = vld [vmem:[#allocation6 + $0x80] sm:$0xff]
    %v191 = vld [vmem:[#allocation6 + $0x88] sm:$0xff]
    %v192 = vld [vmem:[#allocation6 + $0x90] sm:$0xff]
    %v193 = vld [vmem:[#allocation6 + $0x98] sm:$0xff]
    %v194 = vld [vmem:[#allocation6 + $0xa0] sm:$0xff]
    %v195 = vld [vmem:[#allocation6 + $0xa8] sm:$0xff]
    %v196 = vld [vmem:[#allocation6 + $0xb0] sm:$0xff]
    %v197 = vld [vmem:[#allocation6 + $0xb8] sm:$0xff]
    %v198 = vld [vmem:[#allocation6 + $0xc0] sm:$0xff]
    %v199 = vld [vmem:[#allocation6 + $0xc8] sm:$0xff]
    %v200 = vld [vmem:[#allocation6 + $0xd0] sm:$0xff]
    %v201 = vld [vmem:[#allocation6 + $0xd8] sm:$0xff]
    %v202 = vld [vmem:[#allocation6 + $0xe0] sm:$0xff]
    %v203 = vld [vmem:[#allocation6 + $0xe8] sm:$0xff]
    %v204 = vld [vmem:[#allocation6 + $0xf0] sm:$0xff]
    %v205 = vld [vmem:[#allocation6 + $0xf8] sm:$0xff]
    %v238 = vunpack.c.l.b16 %v174
    %v239 = vunpack.c.h.b16 %v174
    %v240 = vunpack.c.l.b16 %v175
    %v241 = vunpack.c.h.b16 %v175
    %v242 = vunpack.c.l.b16 %v176
    %v243 = vunpack.c.h.b16 %v176
    %v244 = vunpack.c.l.b16 %v177
    %v245 = vunpack.c.h.b16 %v177
    %v246 = vunpack.c.l.b16 %v178
    %v247 = vunpack.c.h.b16 %v178
    %v248 = vunpack.c.l.b16 %v179
    %v249 = vunpack.c.h.b16 %v179
    %v250 = vunpack.c.l.b16 %v180
    %v251 = vunpack.c.h.b16 %v180
    %v252 = vunpack.c.l.b16 %v181
    %v253 = vunpack.c.h.b16 %v181
    %v254 = vunpack.c.l.b16 %v182
    %v255 = vunpack.c.h.b16 %v182
    %v256 = vunpack.c.l.b16 %v183
    %v257 = vunpack.c.h.b16 %v183
    %v258 = vunpack.c.l.b16 %v184
    %v259 = vunpack.c.h.b16 %v184
    %v260 = vunpack.c.l.b16 %v185
    %v261 = vunpack.c.h.b16 %v185
    %v262 = vunpack.c.l.b16 %v186
    %v263 = vunpack.c.h.b16 %v186
    %v264 = vunpack.c.l.b16 %v187
    %v265 = vunpack.c.h.b16 %v187
    %v266 = vunpack.c.l.b16 %v188
    %v267 = vunpack.c.h.b16 %v188
    %v268 = vunpack.c.l.b16 %v189
    %v269 = vunpack.c.h.b16 %v189
    %v270 = vunpack.c.l.b16 %v190
    %v271 = vunpack.c.h.b16 %v190
    %v272 = vunpack.c.l.b16 %v191
    %v273 = vunpack.c.h.b16 %v191
    %v274 = vunpack.c.l.b16 %v192
    %v275 = vunpack.c.h.b16 %v192
    %v276 = vunpack.c.l.b16 %v193
    %v277 = vunpack.c.h.b16 %v193
    %v278 = vunpack.c.l.b16 %v194
    %v279 = vunpack.c.h.b16 %v194
    %v280 = vunpack.c.l.b16 %v195
    %v281 = vunpack.c.h.b16 %v195
    %v282 = vunpack.c.l.b16 %v196
    %v283 = vunpack.c.h.b16 %v196
    %v284 = vunpack.c.l.b16 %v197
    %v285 = vunpack.c.h.b16 %v197
    %v286 = vunpack.c.l.b16 %v198
    %v287 = vunpack.c.h.b16 %v198
    %v288 = vunpack.c.l.b16 %v199
    %v289 = vunpack.c.h.b16 %v199
    %v290 = vunpack.c.l.b16 %v200
    %v291 = vunpack.c.h.b16 %v200
    %v292 = vunpack.c.l.b16 %v201
    %v293 = vunpack.c.h.b16 %v201
    %v294 = vunpack.c.l.b16 %v202
    %v295 = vunpack.c.h.b16 %v202
    %v296 = vunpack.c.l.b16 %v203
    %v297 = vunpack.c.h.b16 %v203
    %v298 = vunpack.c.l.b16 %v204
    %v299 = vunpack.c.h.b16 %v204
    %v300 = vunpack.c.l.b16 %v205
    %v301 = vunpack.c.h.b16 %v205
    %v302 = vpack.c.b16 %v242, %v238
    %v303 = vpack.c.b16 %v243, %v239
    %v304 = vpack.c.b16 %v244, %v240
    %v305 = vpack.c.b16 %v245, %v241
    %v306 = vpack.c.b16 %v250, %v246
    %v307 = vpack.c.b16 %v251, %v247
    %v308 = vpack.c.b16 %v252, %v248
    %v309 = vpack.c.b16 %v253, %v249
    %v310 = vpack.c.b16 %v258, %v254
    %v311 = vpack.c.b16 %v259, %v255
    %v312 = vpack.c.b16 %v260, %v256
    %v313 = vpack.c.b16 %v261, %v257
    %v314 = vpack.c.b16 %v266, %v262
    %v315 = vpack.c.b16 %v267, %v263
    %v316 = vpack.c.b16 %v268, %v264
    %v317 = vpack.c.b16 %v269, %v265
    %v318 = vpack.c.b16 %v274, %v270
    %v319 = vpack.c.b16 %v275, %v271
    %v320 = vpack.c.b16 %v276, %v272
    %v321 = vpack.c.b16 %v277, %v273
    %v322 = vpack.c.b16 %v282, %v278
    %v323 = vpack.c.b16 %v283, %v279
    %v324 = vpack.c.b16 %v284, %v280
    %v325 = vpack.c.b16 %v285, %v281
    %v326 = vpack.c.b16 %v290, %v286
    %v327 = vpack.c.b16 %v291, %v287
    %v328 = vpack.c.b16 %v292, %v288
    %v329 = vpack.c.b16 %v293, %v289
    %v330 = vpack.c.b16 %v298, %v294
    %v331 = vpack.c.b16 %v299, %v295
    %v332 = vpack.c.b16 %v300, %v296
    %v333 = vpack.c.b16 %v301, %v297
    %366 = vmatprep.subr.bf16.mxu0 %v303
    %367 = vmatpush1.bf16.msra.mxu0 %v302
    %368 = vmatprep.subr.bf16.mxu0 %v307
    %369 = vmatpush1.bf16.msra.mxu0 %v306
    %370 = vmatprep.subr.bf16.mxu0 %v311
    %371 = vmatpush1.bf16.msra.mxu0 %v310
    %372 = vmatprep.subr.bf16.mxu0 %v315
    %373 = vmatpush1.bf16.msra.mxu0 %v314
    %374 = vmatprep.subr.bf16.mxu0 %v319
    %375 = vmatpush1.bf16.msra.mxu0 %v318
    %376 = vmatprep.subr.bf16.mxu0 %v323
    %377 = vmatpush1.bf16.msra.mxu0 %v322
    %378 = vmatprep.subr.bf16.mxu0 %v327
    %379 = vmatpush1.bf16.msra.mxu0 %v326
    %380 = vmatprep.subr.bf16.mxu0 %v331
    %381 = vmatpush1.bf16.msra.mxu0 %v330
    %382 = vmatprep.subr.bf16.mxu0 0
    %383 = vmatpush1.bf16.msra.mxu0 0
    %384 = vmatprep.subr.bf16.mxu0 0
    %385 = vmatpush1.bf16.msra.mxu0 0
    %386 = vmatprep.subr.bf16.mxu0 0
    %387 = vmatpush1.bf16.msra.mxu0 0
    %388 = vmatprep.subr.bf16.mxu0 0
    %389 = vmatpush1.bf16.msra.mxu0 0
    %390 = vmatprep.subr.bf16.mxu0 0
    %391 = vmatpush1.bf16.msra.mxu0 0
    %392 = vmatprep.subr.bf16.mxu0 0
    %393 = vmatpush1.bf16.msra.mxu0 0
    %394 = vmatprep.subr.bf16.mxu0 0
    %395 = vmatpush1.bf16.msra.mxu0 0
    %396 = vmatprep.subr.bf16.mxu0 0
    %397 = vmatpush1.bf16.msra.mxu0 0
    %398 = vmatprep.mubr.bf16.mxu0 0
    %399 = vmatmul.mubr.bf16.gmra.mrb[0].mxu0 %v166
    %v400 = vpop.f32.mrb[0].mxu0
    %v401 = vadd.f32 0.0, %v400
    %v402 = vpop.f32.mrb[0].mxu0
    %v403 = vadd.f32 0.0, %v402
    %v404 = vpop.f32.mrb[0].mxu0
    %v405 = vadd.f32 0.0, %v404
    %v406 = vpop.f32.mrb[0].mxu0
    %v407 = vadd.f32 0.0, %v406
    %408 = vmatprep.mubr.bf16.mxu0 0
    %409 = vmatmul.mubr.bf16.gmra.mrb[0].mxu0 %v167
    %v410 = vpop.f32.mrb[0].mxu0
    %v411 = vadd.f32 0.0, %v410
    %v412 = vpop.f32.mrb[0].mxu0
    %v413 = vadd.f32 0.0, %v412
    %v414 = vpop.f32.mrb[0].mxu0
    %v415 = vadd.f32 0.0, %v414
    %v416 = vpop.f32.mrb[0].mxu0
    %v417 = vadd.f32 0.0, %v416
    %418 = vmatprep.mubr.bf16.mxu0 0
    %419 = vmatmul.mubr.bf16.gmra.mrb[0].mxu0 %v168
    %v420 = vpop.f32.mrb[0].mxu0
    %v421 = vadd.f32 0.0, %v420
    %v422 = vpop.f32.mrb[0].mxu0
    %v423 = vadd.f32 0.0, %v422
    %v424 = vpop.f32.mrb[0].mxu0
    %v425 = vadd.f32 0.0, %v424
    %v426 = vpop.f32.mrb[0].mxu0
    %v427 = vadd.f32 0.0, %v426
    %428 = vmatprep.mubr.bf16.mxu0 0
    %429 = vmatmul.mubr.bf16.gmra.mrb[0].mxu0 %v169
    %v430 = vpop.f32.mrb[0].mxu0
    %v431 = vadd.f32 0.0, %v430
    %v432 = vpop.f32.mrb[0].mxu0
    %v433 = vadd.f32 0.0, %v432
    %v434 = vpop.f32.mrb[0].mxu0
    %v435 = vadd.f32 0.0, %v434
    %v436 = vpop.f32.mrb[0].mxu0
    %v437 = vadd.f32 0.0, %v436
    %438 = vmatprep.mubr.bf16.mxu0 0
    %439 = vmatmul.mubr.bf16.gmra.mrb[0].mxu0 %v170
    %v440 = vpop.f32.mrb[0].mxu0
    %v441 = vadd.f32 0.0, %v440
    %v442 = vpop.f32.mrb[0].mxu0
    %v443 = vadd.f32 0.0, %v442
    %v444 = vpop.f32.mrb[0].mxu0
    %v445 = vadd.f32 0.0, %v444
    %v446 = vpop.f32.mrb[0].mxu0
    %v447 = vadd.f32 0.0, %v446
    %448 = vmatprep.mubr.bf16.mxu0 0
    %449 = vmatmul.mubr.bf16.gmra.mrb[0].mxu0 %v171
    %v450 = vpop.f32.mrb[0].mxu0
    %v451 = vadd.f32 0.0, %v450
    %v452 = vpop.f32.mrb[0].mxu0
    %v453 = vadd.f32 0.0, %v452
    %v454 = vpop.f32.mrb[0].mxu0
    %v455 = vadd.f32 0.0, %v454
    %v456 = vpop.f32.mrb[0].mxu0
    %v457 = vadd.f32 0.0, %v456
    %458 = vmatprep.mubr.bf16.mxu0 0
    %459 = vmatmul.mubr.bf16.gmra.mrb[0].mxu0 %v172
    %v460 = vpop.f32.mrb[0].mxu0
    %v461 = vadd.f32 0.0, %v460
    %v462 = vpop.f32.mrb[0].mxu0
    %v463 = vadd.f32 0.0, %v462
    %v464 = vpop.f32.mrb[0].mxu0
    %v465 = vadd.f32 0.0, %v464
    %v466 = vpop.f32.mrb[0].mxu0
    %v467 = vadd.f32 0.0, %v466
    %468 = vmatprep.mubr.bf16.mxu0 0
    %469 = vmatmul.mubr.bf16.gmra.mrb[0].mxu0 %v173
    %v470 = vpop.f32.mrb[0].mxu0
    %v471 = vadd.f32 0.0, %v470
    %v472 = vpop.f32.mrb[0].mxu0
    %v473 = vadd.f32 0.0, %v472
    %v474 = vpop.f32.mrb[0].mxu0
    %v475 = vadd.f32 0.0, %v474
    %v476 = vpop.f32.mrb[0].mxu0
    %v477 = vadd.f32 0.0, %v476
    %478 = vdwg.mxu0
    %479 = vmatprep.subr.bf16.mxu0 %v305
    %480 = vmatpush1.bf16.msra.mxu0 %v304
    %481 = vmatprep.subr.bf16.mxu0 %v309
    %482 = vmatpush1.bf16.msra.mxu0 %v308
    %483 = vmatprep.subr.bf16.mxu0 %v313
    %484 = vmatpush1.bf16.msra.mxu0 %v312
    %485 = vmatprep.subr.bf16.mxu0 %v317
    %486 = vmatpush1.bf16.msra.mxu0 %v316
    %487 = vmatprep.subr.bf16.mxu0 %v321
    %488 = vmatpush1.bf16.msra.mxu0 %v320
    %489 = vmatprep.subr.bf16.mxu0 %v325
    %490 = vmatpush1.bf16.msra.mxu0 %v324
    %491 = vmatprep.subr.bf16.mxu0 %v329
    %492 = vmatpush1.bf16.msra.mxu0 %v328
    %493 = vmatprep.subr.bf16.mxu0 %v333
    %494 = vmatpush1.bf16.msra.mxu0 %v332
    %495 = vmatprep.subr.bf16.mxu0 0
    %496 = vmatpush1.bf16.msra.mxu0 0
    %497 = vmatprep.subr.bf16.mxu0 0
    %498 = vmatpush1.bf16.msra.mxu0 0
    %499 = vmatprep.subr.bf16.mxu0 0
    %500 = vmatpush1.bf16.msra.mxu0 0
    %501 = vmatprep.subr.bf16.mxu0 0
    %502 = vmatpush1.bf16.msra.mxu0 0
    %503 = vmatprep.subr.bf16.mxu0 0
    %504 = vmatpush1.bf16.msra.mxu0 0
    %505 = vmatprep.subr.bf16.mxu0 0
    %506 = vmatpush1.bf16.msra.mxu0 0
    %507 = vmatprep.subr.bf16.mxu0 0
    %508 = vmatpush1.bf16.msra.mxu0 0
    %509 = vmatprep.subr.bf16.mxu0 0
    %510 = vmatpush1.bf16.msra.mxu0 0
    %511 = vmatprep.mubr.bf16.mxu0 0
    %512 = vmatmul.mubr.bf16.gmra.mrb[0].mxu0 %v166
    %v513 = vpop.f32.mrb[0].mxu0
    %v514 = vadd.f32 0.0, %v513
    %v515 = vpop.f32.mrb[0].mxu0
    %v516 = vadd.f32 0.0, %v515
    %v517 = vpop.f32.mrb[0].mxu0
    %v518 = vadd.f32 0.0, %v517
    %v519 = vpop.f32.mrb[0].mxu0
    %v520 = vadd.f32 0.0, %v519
    %521 = vmatprep.mubr.bf16.mxu0 0
    %522 = vmatmul.mubr.bf16.gmra.mrb[0].mxu0 %v167
    %v523 = vpop.f32.mrb[0].mxu0
    %v524 = vadd.f32 0.0, %v523
    %v525 = vpop.f32.mrb[0].mxu0
    %v526 = vadd.f32 0.0, %v525
    %v527 = vpop.f32.mrb[0].mxu0
    %v528 = vadd.f32 0.0, %v527
    %v529 = vpop.f32.mrb[0].mxu0
    %v530 = vadd.f32 0.0, %v529
    %531 = vmatprep.mubr.bf16.mxu0 0
    %532 = vmatmul.mubr.bf16.gmra.mrb[0].mxu0 %v168
    %v533 = vpop.f32.mrb[0].mxu0
    %v534 = vadd.f32 0.0, %v533
    %v535 = vpop.f32.mrb[0].mxu0
    %v536 = vadd.f32 0.0, %v535
    %v537 = vpop.f32.mrb[0].mxu0
    %v538 = vadd.f32 0.0, %v537
    %v539 = vpop.f32.mrb[0].mxu0
    %v540 = vadd.f32 0.0, %v539
    %541 = vmatprep.mubr.bf16.mxu0 0
    %542 = vmatmul.mubr.bf16.gmra.mrb[0].mxu0 %v169
    %v543 = vpop.f32.mrb[0].mxu0
    %v544 = vadd.f32 0.0, %v543
    %v545 = vpop.f32.mrb[0].mxu0
    %v546 = vadd.f32 0.0, %v545
    %v547 = vpop.f32.mrb[0].mxu0
    %v548 = vadd.f32 0.0, %v547
    %v549 = vpop.f32.mrb[0].mxu0
    %v550 = vadd.f32 0.0, %v549
    %551 = vmatprep.mubr.bf16.mxu0 0
    %552 = vmatmul.mubr.bf16.gmra.mrb[0].mxu0 %v170
    %v553 = vpop.f32.mrb[0].mxu0
    %v554 = vadd.f32 0.0, %v553
    %v555 = vpop.f32.mrb[0].mxu0
    %v556 = vadd.f32 0.0, %v555
    %v557 = vpop.f32.mrb[0].mxu0
    %v558 = vadd.f32 0.0, %v557
    %v559 = vpop.f32.mrb[0].mxu0
    %v560 = vadd.f32 0.0, %v559
    %561 = vmatprep.mubr.bf16.mxu0 0
    %562 = vmatmul.mubr.bf16.gmra.mrb[0].mxu0 %v171
    %v563 = vpop.f32.mrb[0].mxu0
    %v564 = vadd.f32 0.0, %v563
    %v565 = vpop.f32.mrb[0].mxu0
    %v566 = vadd.f32 0.0, %v565
    %v567 = vpop.f32.mrb[0].mxu0
    %v568 = vadd.f32 0.0, %v567
    %v569 = vpop.f32.mrb[0].mxu0
    %v570 = vadd.f32 0.0, %v569
    %571 = vmatprep.mubr.bf16.mxu0 0
    %572 = vmatmul.mubr.bf16.gmra.mrb[0].mxu0 %v172
    %v573 = vpop.f32.mrb[0].mxu0
    %v574 = vadd.f32 0.0, %v573
    %v575 = vpop.f32.mrb[0].mxu0
    %v576 = vadd.f32 0.0, %v575
    %v577 = vpop.f32.mrb[0].mxu0
    %v578 = vadd.f32 0.0, %v577
    %v579 = vpop.f32.mrb[0].mxu0
    %v580 = vadd.f32 0.0, %v579
    %581 = vmatprep.mubr.bf16.mxu0 0
    %582 = vmatmul.mubr.bf16.gmra.mrb[0].mxu0 %v173
    %v583 = vpop.f32.mrb[0].mxu0
    %v584 = vadd.f32 0.0, %v583
    %v585 = vpop.f32.mrb[0].mxu0
    %v586 = vadd.f32 0.0, %v585
    %v587 = vpop.f32.mrb[0].mxu0
    %v588 = vadd.f32 0.0, %v587
    %v589 = vpop.f32.mrb[0].mxu0
    %v590 = vadd.f32 0.0, %v589
    %591 = vdwg.mxu0
    %v592 = vpack.c.bf16 %v405, %v401
    %v593 = vpack.c.bf16 %v407, %v403
    %v594 = vpack.c.bf16 %v518, %v514
    %v595 = vpack.c.bf16 %v520, %v516
    %v596 = vpack.c.bf16 %v415, %v411
    %v597 = vpack.c.bf16 %v417, %v413
    %v598 = vpack.c.bf16 %v528, %v524
    %v599 = vpack.c.bf16 %v530, %v526
    %v600 = vpack.c.bf16 %v425, %v421
    %v601 = vpack.c.bf16 %v427, %v423
    %v602 = vpack.c.bf16 %v538, %v534
    %v603 = vpack.c.bf16 %v540, %v536
    %v604 = vpack.c.bf16 %v435, %v431
    %v605 = vpack.c.bf16 %v437, %v433
    %v606 = vpack.c.bf16 %v548, %v544
    %v607 = vpack.c.bf16 %v550, %v546
    %v608 = vpack.c.bf16 %v445, %v441
    %v609 = vpack.c.bf16 %v447, %v443
    %v610 = vpack.c.bf16 %v558, %v554
    %v611 = vpack.c.bf16 %v560, %v556
    %v612 = vpack.c.bf16 %v455, %v451
    %v613 = vpack.c.bf16 %v457, %v453
    %v614 = vpack.c.bf16 %v568, %v564
    %v615 = vpack.c.bf16 %v570, %v566
    %v616 = vpack.c.bf16 %v465, %v461
    %v617 = vpack.c.bf16 %v467, %v463
    %v618 = vpack.c.bf16 %v578, %v574
    %v619 = vpack.c.bf16 %v580, %v576
    %v620 = vpack.c.bf16 %v475, %v471
    %v621 = vpack.c.bf16 %v477, %v473
    %v622 = vpack.c.bf16 %v588, %v584
    %v623 = vpack.c.bf16 %v590, %v586
    %v624 = vld [vmem:[%s2] sm:$0xf]
    %v626 = vlaneseq
    %v627 = vshrl.u32 %v626, 7
    %v628 = vsub.s32 0, %v627
    %v629 = vrot.slane %v624, %v628
    %v630 = vlaneseq
    %v631 = vshrl.u32 %v630, 7
    %v632 = vsub.s32 1, %v631
    %v633 = vrot.slane %v624, %v632
    %v634 = vlaneseq
    %v635 = vshrl.u32 %v634, 7
    %v636 = vsub.s32 2, %v635
    %v637 = vrot.slane %v624, %v636
    %v638 = vlaneseq
    %v639 = vshrl.u32 %v638, 7
    %v640 = vsub.s32 3, %v639
    %v641 = vrot.slane %v624, %v640
    %v646 = vpack.c.bf16 %v629, %v629
    %v647 = vpack.c.bf16 %v633, %v633
    %v648 = vpack.c.bf16 %v637, %v637
    %v649 = vpack.c.bf16 %v641, %v641
    %v651 = vpack.i.b16 %v646, %v646
    %v653 = vlaneseq
    %v654 = vshrl.u32 %v653, 7
    %v655 = vsub.s32 0, %v654
    %v656 = vrot.slane %v651, %v655
    %v658 = vpack.i.b16 %v647, %v647
    %v660 = vlaneseq
    %v661 = vshrl.u32 %v660, 7
    %v662 = vsub.s32 0, %v661
    %v663 = vrot.slane %v658, %v662
    %v665 = vpack.i.b16 %v648, %v648
    %v667 = vlaneseq
    %v668 = vshrl.u32 %v667, 7
    %v669 = vsub.s32 0, %v668
    %v670 = vrot.slane %v665, %v669
    %v672 = vpack.i.b16 %v649, %v649
    %v674 = vlaneseq
    %v675 = vshrl.u32 %v674, 7
    %v676 = vsub.s32 0, %v675
    %v677 = vrot.slane %v672, %v676
    %v678 = vadd.bf16 %v592, %v656
    %v679 = vadd.bf16 %v593, %v663
    %v680 = vadd.bf16 %v594, %v670
    %v681 = vadd.bf16 %v595, %v677
    %v682 = vadd.bf16 %v596, %v656
    %v683 = vadd.bf16 %v597, %v663
    %v684 = vadd.bf16 %v598, %v670
    %v685 = vadd.bf16 %v599, %v677
    %v686 = vadd.bf16 %v600, %v656
    %v687 = vadd.bf16 %v601, %v663
    %v688 = vadd.bf16 %v602, %v670
    %v689 = vadd.bf16 %v603, %v677
    %v690 = vadd.bf16 %v604, %v656
    %v691 = vadd.bf16 %v605, %v663
    %v692 = vadd.bf16 %v606, %v670
    %v693 = vadd.bf16 %v607, %v677
    %v694 = vadd.bf16 %v608, %v656
    %v695 = vadd.bf16 %v609, %v663
    %v696 = vadd.bf16 %v610, %v670
    %v697 = vadd.bf16 %v611, %v677
    %v698 = vadd.bf16 %v612, %v656
    %v699 = vadd.bf16 %v613, %v663
    %v700 = vadd.bf16 %v614, %v670
    %v701 = vadd.bf16 %v615, %v677
    %v702 = vadd.bf16 %v616, %v656
    %v703 = vadd.bf16 %v617, %v663
    %v704 = vadd.bf16 %v618, %v670
    %v705 = vadd.bf16 %v619, %v677
    %v706 = vadd.bf16 %v620, %v656
    %v707 = vadd.bf16 %v621, %v663
    %v708 = vadd.bf16 %v622, %v670
    %v709 = vadd.bf16 %v623, %v677
    %vm710 = vcmp.ge.bf16.partialorder %v678, 0
    %vm711 = vcmp.ge.bf16.partialorder %v679, 0
    %vm712 = vcmp.ge.bf16.partialorder %v680, 0
    %vm713 = vcmp.ge.bf16.partialorder %v681, 0
    %vm714 = vcmp.ge.bf16.partialorder %v682, 0
    %vm715 = vcmp.ge.bf16.partialorder %v683, 0
    %vm716 = vcmp.ge.bf16.partialorder %v684, 0
    %vm717 = vcmp.ge.bf16.partialorder %v685, 0
    %vm718 = vcmp.ge.bf16.partialorder %v686, 0
    %vm719 = vcmp.ge.bf16.partialorder %v687, 0
    %vm720 = vcmp.ge.bf16.partialorder %v688, 0
    %vm721 = vcmp.ge.bf16.partialorder %v689, 0
    %vm722 = vcmp.ge.bf16.partialorder %v690, 0
    %vm723 = vcmp.ge.bf16.partialorder %v691, 0
    %vm724 = vcmp.ge.bf16.partialorder %v692, 0
    %vm725 = vcmp.ge.bf16.partialorder %v693, 0
    %vm726 = vcmp.ge.bf16.partialorder %v694, 0
    %vm727 = vcmp.ge.bf16.partialorder %v695, 0
    %vm728 = vcmp.ge.bf16.partialorder %v696, 0
    %vm729 = vcmp.ge.bf16.partialorder %v697, 0
    %vm730 = vcmp.ge.bf16.partialorder %v698, 0
    %vm731 = vcmp.ge.bf16.partialorder %v699, 0
    %vm732 = vcmp.ge.bf16.partialorder %v700, 0
    %vm733 = vcmp.ge.bf16.partialorder %v701, 0
    %vm734 = vcmp.ge.bf16.partialorder %v702, 0
    %vm735 = vcmp.ge.bf16.partialorder %v703, 0
    %vm736 = vcmp.ge.bf16.partialorder %v704, 0
    %vm737 = vcmp.ge.bf16.partialorder %v705, 0
    %vm738 = vcmp.ge.bf16.partialorder %v706, 0
    %vm739 = vcmp.ge.bf16.partialorder %v707, 0
    %vm740 = vcmp.ge.bf16.partialorder %v708, 0
    %vm741 = vcmp.ge.bf16.partialorder %v709, 0
    %v742 = vmul.bf16 %v678, 1009007652
    %v743 = vmul.bf16 %v679, 1009007652
    %v744 = vmul.bf16 %v680, 1009007652
    %v745 = vmul.bf16 %v681, 1009007652
    %v746 = vmul.bf16 %v682, 1009007652
    %v747 = vmul.bf16 %v683, 1009007652
    %v748 = vmul.bf16 %v684, 1009007652
    %v749 = vmul.bf16 %v685, 1009007652
    %v750 = vmul.bf16 %v686, 1009007652
    %v751 = vmul.bf16 %v687, 1009007652
    %v752 = vmul.bf16 %v688, 1009007652
    %v753 = vmul.bf16 %v689, 1009007652
    %v754 = vmul.bf16 %v690, 1009007652
    %v755 = vmul.bf16 %v691, 1009007652
    %v756 = vmul.bf16 %v692, 1009007652
    %v757 = vmul.bf16 %v693, 1009007652
    %v758 = vmul.bf16 %v694, 1009007652
    %v759 = vmul.bf16 %v695, 1009007652
    %v760 = vmul.bf16 %v696, 1009007652
    %v761 = vmul.bf16 %v697, 1009007652
    %v762 = vmul.bf16 %v698, 1009007652
    %v763 = vmul.bf16 %v699, 1009007652
    %v764 = vmul.bf16 %v700, 1009007652
    %v765 = vmul.bf16 %v701, 1009007652
    %v766 = vmul.bf16 %v702, 1009007652
    %v767 = vmul.bf16 %v703, 1009007652
    %v768 = vmul.bf16 %v704, 1009007652
    %v769 = vmul.bf16 %v705, 1009007652
    %v770 = vmul.bf16 %v706, 1009007652
    %v771 = vmul.bf16 %v707, 1009007652
    %v772 = vmul.bf16 %v708, 1009007652
    %v773 = vmul.bf16 %v709, 1009007652
    %v774 = vsel %vm710, %v678, %v742
    %v775 = vsel %vm711, %v679, %v743
    %v776 = vsel %vm712, %v680, %v744
    %v777 = vsel %vm713, %v681, %v745
    %v778 = vsel %vm714, %v682, %v746
    %v779 = vsel %vm715, %v683, %v747
    %v780 = vsel %vm716, %v684, %v748
    %v781 = vsel %vm717, %v685, %v749
    %v782 = vsel %vm718, %v686, %v750
    %v783 = vsel %vm719, %v687, %v751
    %v784 = vsel %vm720, %v688, %v752
    %v785 = vsel %vm721, %v689, %v753
    %v786 = vsel %vm722, %v690, %v754
    %v787 = vsel %vm723, %v691, %v755
    %v788 = vsel %vm724, %v692, %v756
    %v789 = vsel %vm725, %v693, %v757
    %v790 = vsel %vm726, %v694, %v758
    %v791 = vsel %vm727, %v695, %v759
    %v792 = vsel %vm728, %v696, %v760
    %v793 = vsel %vm729, %v697, %v761
    %v794 = vsel %vm730, %v698, %v762
    %v795 = vsel %vm731, %v699, %v763
    %v796 = vsel %vm732, %v700, %v764
    %v797 = vsel %vm733, %v701, %v765
    %v798 = vsel %vm734, %v702, %v766
    %v799 = vsel %vm735, %v703, %v767
    %v800 = vsel %vm736, %v704, %v768
    %v801 = vsel %vm737, %v705, %v769
    %v802 = vsel %vm738, %v706, %v770
    %v803 = vsel %vm739, %v707, %v771
    %v804 = vsel %vm740, %v708, %v772
    %v805 = vsel %vm741, %v709, %v773
    %v806 = vld [vmem:[#allocation8] sm:$0xff]
    %v807 = vld [vmem:[#allocation8 + $0x8] sm:$0xff]
    %v808 = vld [vmem:[#allocation8 + $0x10] sm:$0xff]
    %v809 = vld [vmem:[#allocation8 + $0x18] sm:$0xff]
    %v810 = vld [vmem:[#allocation8 + $0x20] sm:$0xff]
    %v811 = vld [vmem:[#allocation8 + $0x28] sm:$0xff]
    %v812 = vld [vmem:[#allocation8 + $0x30] sm:$0xff]
    %v813 = vld [vmem:[#allocation8 + $0x38] sm:$0xff]
    %v814 = vld [vmem:[#allocation8 + $0x40] sm:$0xff]
    %v815 = vld [vmem:[#allocation8 + $0x48] sm:$0xff]
    %v816 = vld [vmem:[#allocation8 + $0x50] sm:$0xff]
    %v817 = vld [vmem:[#allocation8 + $0x58] sm:$0xff]
    %v818 = vld [vmem:[#allocation8 + $0x60] sm:$0xff]
    %v819 = vld [vmem:[#allocation8 + $0x68] sm:$0xff]
    %v820 = vld [vmem:[#allocation8 + $0x70] sm:$0xff]
    %v821 = vld [vmem:[#allocation8 + $0x78] sm:$0xff]
    %v822 = vld [vmem:[#allocation8 + $0x80] sm:$0xff]
    %v823 = vld [vmem:[#allocation8 + $0x88] sm:$0xff]
    %v824 = vld [vmem:[#allocation8 + $0x90] sm:$0xff]
    %v825 = vld [vmem:[#allocation8 + $0x98] sm:$0xff]
    %v826 = vld [vmem:[#allocation8 + $0xa0] sm:$0xff]
    %v827 = vld [vmem:[#allocation8 + $0xa8] sm:$0xff]
    %v828 = vld [vmem:[#allocation8 + $0xb0] sm:$0xff]
    %v829 = vld [vmem:[#allocation8 + $0xb8] sm:$0xff]
    %v830 = vld [vmem:[#allocation8 + $0xc0] sm:$0xff]
    %v831 = vld [vmem:[#allocation8 + $0xc8] sm:$0xff]
    %v832 = vld [vmem:[#allocation8 + $0xd0] sm:$0xff]
    %v833 = vld [vmem:[#allocation8 + $0xd8] sm:$0xff]
    %v834 = vld [vmem:[#allocation8 + $0xe0] sm:$0xff]
    %v835 = vld [vmem:[#allocation8 + $0xe8] sm:$0xff]
    %v836 = vld [vmem:[#allocation8 + $0xf0] sm:$0xff]
    %v837 = vld [vmem:[#allocation8 + $0xf8] sm:$0xff]
    %v838 = vld [vmem:[#allocation8 + $0x100] sm:$0xff]
    %v839 = vld [vmem:[#allocation8 + $0x108] sm:$0xff]
    %v840 = vld [vmem:[#allocation8 + $0x110] sm:$0xff]
    %v841 = vld [vmem:[#allocation8 + $0x118] sm:$0xff]
    %v842 = vld [vmem:[#allocation8 + $0x120] sm:$0xff]
    %v843 = vld [vmem:[#allocation8 + $0x128] sm:$0xff]
    %v844 = vld [vmem:[#allocation8 + $0x130] sm:$0xff]
    %v845 = vld [vmem:[#allocation8 + $0x138] sm:$0xff]
    %v846 = vld [vmem:[#allocation8 + $0x140] sm:$0xff]
    %v847 = vld [vmem:[#allocation8 + $0x148] sm:$0xff]
    %v848 = vld [vmem:[#allocation8 + $0x150] sm:$0xff]
    %v849 = vld [vmem:[#allocation8 + $0x158] sm:$0xff]
    %v850 = vld [vmem:[#allocation8 + $0x160] sm:$0xff]
    %v851 = vld [vmem:[#allocation8 + $0x168] sm:$0xff]
    %v852 = vld [vmem:[#allocation8 + $0x170] sm:$0xff]
    %v853 = vld [vmem:[#allocation8 + $0x178] sm:$0xff]
    %v854 = vld [vmem:[#allocation8 + $0x180] sm:$0xff]
    %v855 = vld [vmem:[#allocation8 + $0x188] sm:$0xff]
    %v856 = vld [vmem:[#allocation8 + $0x190] sm:$0xff]
    %v857 = vld [vmem:[#allocation8 + $0x198] sm:$0xff]
    %v858 = vld [vmem:[#allocation8 + $0x1a0] sm:$0xff]
    %v859 = vld [vmem:[#allocation8 + $0x1a8] sm:$0xff]
    %v860 = vld [vmem:[#allocation8 + $0x1b0] sm:$0xff]
    %v861 = vld [vmem:[#allocation8 + $0x1b8] sm:$0xff]
    %v862 = vld [vmem:[#allocation8 + $0x1c0] sm:$0xff]
    %v863 = vld [vmem:[#allocation8 + $0x1c8] sm:$0xff]
    %v864 = vld [vmem:[#allocation8 + $0x1d0] sm:$0xff]
    %v865 = vld [vmem:[#allocation8 + $0x1d8] sm:$0xff]
    %v866 = vld [vmem:[#allocation8 + $0x1e0] sm:$0xff]
    %v867 = vld [vmem:[#allocation8 + $0x1e8] sm:$0xff]
    %v868 = vld [vmem:[#allocation8 + $0x1f0] sm:$0xff]
    %v869 = vld [vmem:[#allocation8 + $0x1f8] sm:$0xff]
    %v870 = vld [vmem:[#allocation8 + $0x200] sm:$0xff]
    %v871 = vld [vmem:[#allocation8 + $0x208] sm:$0xff]
    %v872 = vld [vmem:[#allocation8 + $0x210] sm:$0xff]
    %v873 = vld [vmem:[#allocation8 + $0x218] sm:$0xff]
    %v874 = vld [vmem:[#allocation8 + $0x220] sm:$0xff]
    %v875 = vld [vmem:[#allocation8 + $0x228] sm:$0xff]
    %v876 = vld [vmem:[#allocation8 + $0x230] sm:$0xff]
    %v877 = vld [vmem:[#allocation8 + $0x238] sm:$0xff]
    %v878 = vld [vmem:[#allocation8 + $0x240] sm:$0xff]
    %v879 = vld [vmem:[#allocation8 + $0x248] sm:$0xff]
    %v880 = vld [vmem:[#allocation8 + $0x250] sm:$0xff]
    %v881 = vld [vmem:[#allocation8 + $0x258] sm:$0xff]
    %v882 = vld [vmem:[#allocation8 + $0x260] sm:$0xff]
    %v883 = vld [vmem:[#allocation8 + $0x268] sm:$0xff]
    %v884 = vld [vmem:[#allocation8 + $0x270] sm:$0xff]
    %v885 = vld [vmem:[#allocation8 + $0x278] sm:$0xff]
    %v886 = vld [vmem:[#allocation8 + $0x280] sm:$0xff]
    %v887 = vld [vmem:[#allocation8 + $0x288] sm:$0xff]
    %v888 = vld [vmem:[#allocation8 + $0x290] sm:$0xff]
    %v889 = vld [vmem:[#allocation8 + $0x298] sm:$0xff]
    %v890 = vld [vmem:[#allocation8 + $0x2a0] sm:$0xff]
    %v891 = vld [vmem:[#allocation8 + $0x2a8] sm:$0xff]
    %v892 = vld [vmem:[#allocation8 + $0x2b0] sm:$0xff]
    %v893 = vld [vmem:[#allocation8 + $0x2b8] sm:$0xff]
    %v894 = vld [vmem:[#allocation8 + $0x2c0] sm:$0xff]
    %v895 = vld [vmem:[#allocation8 + $0x2c8] sm:$0xff]
    %v896 = vld [vmem:[#allocation8 + $0x2d0] sm:$0xff]
    %v897 = vld [vmem:[#allocation8 + $0x2d8] sm:$0xff]
    %v898 = vld [vmem:[#allocation8 + $0x2e0] sm:$0xff]
    %v899 = vld [vmem:[#allocation8 + $0x2e8] sm:$0xff]
    %v900 = vld [vmem:[#allocation8 + $0x2f0] sm:$0xff]
    %v901 = vld [vmem:[#allocation8 + $0x2f8] sm:$0xff]
    %v902 = vld [vmem:[#allocation8 + $0x300] sm:$0xff]
    %v903 = vld [vmem:[#allocation8 + $0x308] sm:$0xff]
    %v904 = vld [vmem:[#allocation8 + $0x310] sm:$0xff]
    %v905 = vld [vmem:[#allocation8 + $0x318] sm:$0xff]
    %v906 = vld [vmem:[#allocation8 + $0x320] sm:$0xff]
    %v907 = vld [vmem:[#allocation8 + $0x328] sm:$0xff]
    %v908 = vld [vmem:[#allocation8 + $0x330] sm:$0xff]
    %v909 = vld [vmem:[#allocation8 + $0x338] sm:$0xff]
    %v910 = vld [vmem:[#allocation8 + $0x340] sm:$0xff]
    %v911 = vld [vmem:[#allocation8 + $0x348] sm:$0xff]
    %v912 = vld [vmem:[#allocation8 + $0x350] sm:$0xff]
    %v913 = vld [vmem:[#allocation8 + $0x358] sm:$0xff]
    %v914 = vld [vmem:[#allocation8 + $0x360] sm:$0xff]
    %v915 = vld [vmem:[#allocation8 + $0x368] sm:$0xff]
    %v916 = vld [vmem:[#allocation8 + $0x370] sm:$0xff]
    %v917 = vld [vmem:[#allocation8 + $0x378] sm:$0xff]
    %v918 = vld [vmem:[#allocation8 + $0x380] sm:$0xff]
    %v919 = vld [vmem:[#allocation8 + $0x388] sm:$0xff]
    %v920 = vld [vmem:[#allocation8 + $0x390] sm:$0xff]
    %v921 = vld [vmem:[#allocation8 + $0x398] sm:$0xff]
    %v922 = vld [vmem:[#allocation8 + $0x3a0] sm:$0xff]
    %v923 = vld [vmem:[#allocation8 + $0x3a8] sm:$0xff]
    %v924 = vld [vmem:[#allocation8 + $0x3b0] sm:$0xff]
    %v925 = vld [vmem:[#allocation8 + $0x3b8] sm:$0xff]
    %v926 = vld [vmem:[#allocation8 + $0x3c0] sm:$0xff]
    %v927 = vld [vmem:[#allocation8 + $0x3c8] sm:$0xff]
    %v928 = vld [vmem:[#allocation8 + $0x3d0] sm:$0xff]
    %v929 = vld [vmem:[#allocation8 + $0x3d8] sm:$0xff]
    %v930 = vld [vmem:[#allocation8 + $0x3e0] sm:$0xff]
    %v931 = vld [vmem:[#allocation8 + $0x3e8] sm:$0xff]
    %v932 = vld [vmem:[#allocation8 + $0x3f0] sm:$0xff]
    %v933 = vld [vmem:[#allocation8 + $0x3f8] sm:$0xff]
    %v1062 = vunpack.c.l.b16 %v806
    %v1063 = vunpack.c.h.b16 %v806
    %v1064 = vunpack.c.l.b16 %v807
    %v1065 = vunpack.c.h.b16 %v807
    %v1066 = vunpack.c.l.b16 %v808
    %v1067 = vunpack.c.h.b16 %v808
    %v1068 = vunpack.c.l.b16 %v809
    %v1069 = vunpack.c.h.b16 %v809
    %v1070 = vunpack.c.l.b16 %v810
    %v1071 = vunpack.c.h.b16 %v810
    %v1072 = vunpack.c.l.b16 %v811
    %v1073 = vunpack.c.h.b16 %v811
    %v1074 = vunpack.c.l.b16 %v812
    %v1075 = vunpack.c.h.b16 %v812
    %v1076 = vunpack.c.l.b16 %v813
    %v1077 = vunpack.c.h.b16 %v813
    %v1078 = vunpack.c.l.b16 %v814
    %v1079 = vunpack.c.h.b16 %v814
    %v1080 = vunpack.c.l.b16 %v815
    %v1081 = vunpack.c.h.b16 %v815
    %v1082 = vunpack.c.l.b16 %v816
    %v1083 = vunpack.c.h.b16 %v816
    %v1084 = vunpack.c.l.b16 %v817
    %v1085 = vunpack.c.h.b16 %v817
    %v1086 = vunpack.c.l.b16 %v818
    %v1087 = vunpack.c.h.b16 %v818
    %v1088 = vunpack.c.l.b16 %v819
    %v1089 = vunpack.c.h.b16 %v819
    %v1090 = vunpack.c.l.b16 %v820
    %v1091 = vunpack.c.h.b16 %v820
    %v1092 = vunpack.c.l.b16 %v821
    %v1093 = vunpack.c.h.b16 %v821
    %v1094 = vunpack.c.l.b16 %v822
    %v1095 = vunpack.c.h.b16 %v822
    %v1096 = vunpack.c.l.b16 %v823
    %v1097 = vunpack.c.h.b16 %v823
    %v1098 = vunpack.c.l.b16 %v824
    %v1099 = vunpack.c.h.b16 %v824
    %v1100 = vunpack.c.l.b16 %v825
    %v1101 = vunpack.c.h.b16 %v825
    %v1102 = vunpack.c.l.b16 %v826
    %v1103 = vunpack.c.h.b16 %v826
    %v1104 = vunpack.c.l.b16 %v827
    %v1105 = vunpack.c.h.b16 %v827
    %v1106 = vunpack.c.l.b16 %v828
    %v1107 = vunpack.c.h.b16 %v828
    %v1108 = vunpack.c.l.b16 %v829
    %v1109 = vunpack.c.h.b16 %v829
    %v1110 = vunpack.c.l.b16 %v830
    %v1111 = vunpack.c.h.b16 %v830
    %v1112 = vunpack.c.l.b16 %v831
    %v1113 = vunpack.c.h.b16 %v831
    %v1114 = vunpack.c.l.b16 %v832
    %v1115 = vunpack.c.h.b16 %v832
    %v1116 = vunpack.c.l.b16 %v833
    %v1117 = vunpack.c.h.b16 %v833
    %v1118 = vunpack.c.l.b16 %v834
    %v1119 = vunpack.c.h.b16 %v834
    %v1120 = vunpack.c.l.b16 %v835
    %v1121 = vunpack.c.h.b16 %v835
    %v1122 = vunpack.c.l.b16 %v836
    %v1123 = vunpack.c.h.b16 %v836
    %v1124 = vunpack.c.l.b16 %v837
    %v1125 = vunpack.c.h.b16 %v837
    %v1126 = vunpack.c.l.b16 %v838
    %v1127 = vunpack.c.h.b16 %v838
    %v1128 = vunpack.c.l.b16 %v839
    %v1129 = vunpack.c.h.b16 %v839
    %v1130 = vunpack.c.l.b16 %v840
    %v1131 = vunpack.c.h.b16 %v840
    %v1132 = vunpack.c.l.b16 %v841
    %v1133 = vunpack.c.h.b16 %v841
    %v1134 = vunpack.c.l.b16 %v842
    %v1135 = vunpack.c.h.b16 %v842
    %v1136 = vunpack.c.l.b16 %v843
    %v1137 = vunpack.c.h.b16 %v843
    %v1138 = vunpack.c.l.b16 %v844
    %v1139 = vunpack.c.h.b16 %v844
    %v1140 = vunpack.c.l.b16 %v845
    %v1141 = vunpack.c.h.b16 %v845
    %v1142 = vunpack.c.l.b16 %v846
    %v1143 = vunpack.c.h.b16 %v846
    %v1144 = vunpack.c.l.b16 %v847
    %v1145 = vunpack.c.h.b16 %v847
    %v1146 = vunpack.c.l.b16 %v848
    %v1147 = vunpack.c.h.b16 %v848
    %v1148 = vunpack.c.l.b16 %v849
    %v1149 = vunpack.c.h.b16 %v849
    %v1150 = vunpack.c.l.b16 %v850
    %v1151 = vunpack.c.h.b16 %v850
    %v1152 = vunpack.c.l.b16 %v851
    %v1153 = vunpack.c.h.b16 %v851
    %v1154 = vunpack.c.l.b16 %v852
    %v1155 = vunpack.c.h.b16 %v852
    %v1156 = vunpack.c.l.b16 %v853
    %v1157 = vunpack.c.h.b16 %v853
    %v1158 = vunpack.c.l.b16 %v854
    %v1159 = vunpack.c.h.b16 %v854
    %v1160 = vunpack.c.l.b16 %v855
    %v1161 = vunpack.c.h.b16 %v855
    %v1162 = vunpack.c.l.b16 %v856
    %v1163 = vunpack.c.h.b16 %v856
    %v1164 = vunpack.c.l.b16 %v857
    %v1165 = vunpack.c.h.b16 %v857
    %v1166 = vunpack.c.l.b16 %v858
    %v1167 = vunpack.c.h.b16 %v858
    %v1168 = vunpack.c.l.b16 %v859
    %v1169 = vunpack.c.h.b16 %v859
    %v1170 = vunpack.c.l.b16 %v860
    %v1171 = vunpack.c.h.b16 %v860
    %v1172 = vunpack.c.l.b16 %v861
    %v1173 = vunpack.c.h.b16 %v861
    %v1174 = vunpack.c.l.b16 %v862
    %v1175 = vunpack.c.h.b16 %v862
    %v1176 = vunpack.c.l.b16 %v863
    %v1177 = vunpack.c.h.b16 %v863
    %v1178 = vunpack.c.l.b16 %v864
    %v1179 = vunpack.c.h.b16 %v864
    %v1180 = vunpack.c.l.b16 %v865
    %v1181 = vunpack.c.h.b16 %v865
    %v1182 = vunpack.c.l.b16 %v866
    %v1183 = vunpack.c.h.b16 %v866
    %v1184 = vunpack.c.l.b16 %v867
    %v1185 = vunpack.c.h.b16 %v867
    %v1186 = vunpack.c.l.b16 %v868
    %v1187 = vunpack.c.h.b16 %v868
    %v1188 = vunpack.c.l.b16 %v869
    %v1189 = vunpack.c.h.b16 %v869
    %v1190 = vunpack.c.l.b16 %v870
    %v1191 = vunpack.c.h.b16 %v870
    %v1192 = vunpack.c.l.b16 %v871
    %v1193 = vunpack.c.h.b16 %v871
    %v1194 = vunpack.c.l.b16 %v872
    %v1195 = vunpack.c.h.b16 %v872
    %v1196 = vunpack.c.l.b16 %v873
    %v1197 = vunpack.c.h.b16 %v873
    %v1198 = vunpack.c.l.b16 %v874
    %v1199 = vunpack.c.h.b16 %v874
    %v1200 = vunpack.c.l.b16 %v875
    %v1201 = vunpack.c.h.b16 %v875
    %v1202 = vunpack.c.l.b16 %v876
    %v1203 = vunpack.c.h.b16 %v876
    %v1204 = vunpack.c.l.b16 %v877
    %v1205 = vunpack.c.h.b16 %v877
    %v1206 = vunpack.c.l.b16 %v878
    %v1207 = vunpack.c.h.b16 %v878
    %v1208 = vunpack.c.l.b16 %v879
    %v1209 = vunpack.c.h.b16 %v879
    %v1210 = vunpack.c.l.b16 %v880
    %v1211 = vunpack.c.h.b16 %v880
    %v1212 = vunpack.c.l.b16 %v881
    %v1213 = vunpack.c.h.b16 %v881
    %v1214 = vunpack.c.l.b16 %v882
    %v1215 = vunpack.c.h.b16 %v882
    %v1216 = vunpack.c.l.b16 %v883
    %v1217 = vunpack.c.h.b16 %v883
    %v1218 = vunpack.c.l.b16 %v884
    %v1219 = vunpack.c.h.b16 %v884
    %v1220 = vunpack.c.l.b16 %v885
    %v1221 = vunpack.c.h.b16 %v885
    %v1222 = vunpack.c.l.b16 %v886
    %v1223 = vunpack.c.h.b16 %v886
    %v1224 = vunpack.c.l.b16 %v887
    %v1225 = vunpack.c.h.b16 %v887
    %v1226 = vunpack.c.l.b16 %v888
    %v1227 = vunpack.c.h.b16 %v888
    %v1228 = vunpack.c.l.b16 %v889
    %v1229 = vunpack.c.h.b16 %v889
    %v1230 = vunpack.c.l.b16 %v890
    %v1231 = vunpack.c.h.b16 %v890
    %v1232 = vunpack.c.l.b16 %v891
    %v1233 = vunpack.c.h.b16 %v891
    %v1234 = vunpack.c.l.b16 %v892
    %v1235 = vunpack.c.h.b16 %v892
    %v1236 = vunpack.c.l.b16 %v893
    %v1237 = vunpack.c.h.b16 %v893
    %v1238 = vunpack.c.l.b16 %v894
    %v1239 = vunpack.c.h.b16 %v894
    %v1240 = vunpack.c.l.b16 %v895
    %v1241 = vunpack.c.h.b16 %v895
    %v1242 = vunpack.c.l.b16 %v896
    %v1243 = vunpack.c.h.b16 %v896
    %v1244 = vunpack.c.l.b16 %v897
    %v1245 = vunpack.c.h.b16 %v897
    %v1246 = vunpack.c.l.b16 %v898
    %v1247 = vunpack.c.h.b16 %v898
    %v1248 = vunpack.c.l.b16 %v899
    %v1249 = vunpack.c.h.b16 %v899
    %v1250 = vunpack.c.l.b16 %v900
    %v1251 = vunpack.c.h.b16 %v900
    %v1252 = vunpack.c.l.b16 %v901
    %v1253 = vunpack.c.h.b16 %v901
    %v1254 = vunpack.c.l.b16 %v902
    %v1255 = vunpack.c.h.b16 %v902
    %v1256 = vunpack.c.l.b16 %v903
    %v1257 = vunpack.c.h.b16 %v903
    %v1258 = vunpack.c.l.b16 %v904
    %v1259 = vunpack.c.h.b16 %v904
    %v1260 = vunpack.c.l.b16 %v905
    %v1261 = vunpack.c.h.b16 %v905
    %v1262 = vunpack.c.l.b16 %v906
    %v1263 = vunpack.c.h.b16 %v906
    %v1264 = vunpack.c.l.b16 %v907
    %v1265 = vunpack.c.h.b16 %v907
    %v1266 = vunpack.c.l.b16 %v908
    %v1267 = vunpack.c.h.b16 %v908
    %v1268 = vunpack.c.l.b16 %v909
    %v1269 = vunpack.c.h.b16 %v909
    %v1270 = vunpack.c.l.b16 %v910
    %v1271 = vunpack.c.h.b16 %v910
    %v1272 = vunpack.c.l.b16 %v911
    %v1273 = vunpack.c.h.b16 %v911
    %v1274 = vunpack.c.l.b16 %v912
    %v1275 = vunpack.c.h.b16 %v912
    %v1276 = vunpack.c.l.b16 %v913
    %v1277 = vunpack.c.h.b16 %v913
    %v1278 = vunpack.c.l.b16 %v914
    %v1279 = vunpack.c.h.b16 %v914
    %v1280 = vunpack.c.l.b16 %v915
    %v1281 = vunpack.c.h.b16 %v915
    %v1282 = vunpack.c.l.b16 %v916
    %v1283 = vunpack.c.h.b16 %v916
    %v1284 = vunpack.c.l.b16 %v917
    %v1285 = vunpack.c.h.b16 %v917
    %v1286 = vunpack.c.l.b16 %v918
    %v1287 = vunpack.c.h.b16 %v918
    %v1288 = vunpack.c.l.b16 %v919
    %v1289 = vunpack.c.h.b16 %v919
    %v1290 = vunpack.c.l.b16 %v920
    %v1291 = vunpack.c.h.b16 %v920
    %v1292 = vunpack.c.l.b16 %v921
    %v1293 = vunpack.c.h.b16 %v921
    %v1294 = vunpack.c.l.b16 %v922
    %v1295 = vunpack.c.h.b16 %v922
    %v1296 = vunpack.c.l.b16 %v923
    %v1297 = vunpack.c.h.b16 %v923
    %v1298 = vunpack.c.l.b16 %v924
    %v1299 = vunpack.c.h.b16 %v924
    %v1300 = vunpack.c.l.b16 %v925
    %v1301 = vunpack.c.h.b16 %v925
    %v1302 = vunpack.c.l.b16 %v926
    %v1303 = vunpack.c.h.b16 %v926
    %v1304 = vunpack.c.l.b16 %v927
    %v1305 = vunpack.c.h.b16 %v927
    %v1306 = vunpack.c.l.b16 %v928
    %v1307 = vunpack.c.h.b16 %v928
    %v1308 = vunpack.c.l.b16 %v929
    %v1309 = vunpack.c.h.b16 %v929
    %v1310 = vunpack.c.l.b16 %v930
    %v1311 = vunpack.c.h.b16 %v930
    %v1312 = vunpack.c.l.b16 %v931
    %v1313 = vunpack.c.h.b16 %v931
    %v1314 = vunpack.c.l.b16 %v932
    %v1315 = vunpack.c.h.b16 %v932
    %v1316 = vunpack.c.l.b16 %v933
    %v1317 = vunpack.c.h.b16 %v933
    %v1318 = vpack.c.b16 %v1066, %v1062
    %v1319 = vpack.c.b16 %v1067, %v1063
    %v1320 = vpack.c.b16 %v1068, %v1064
    %v1321 = vpack.c.b16 %v1069, %v1065
    %v1322 = vpack.c.b16 %v1074, %v1070
    %v1323 = vpack.c.b16 %v1075, %v1071
    %v1324 = vpack.c.b16 %v1076, %v1072
    %v1325 = vpack.c.b16 %v1077, %v1073
    %v1326 = vpack.c.b16 %v1082, %v1078
    %v1327 = vpack.c.b16 %v1083, %v1079
    %v1328 = vpack.c.b16 %v1084, %v1080
    %v1329 = vpack.c.b16 %v1085, %v1081
    %v1330 = vpack.c.b16 %v1090, %v1086
    %v1331 = vpack.c.b16 %v1091, %v1087
    %v1332 = vpack.c.b16 %v1092, %v1088
    %v1333 = vpack.c.b16 %v1093, %v1089
    %v1334 = vpack.c.b16 %v1098, %v1094
    %v1335 = vpack.c.b16 %v1099, %v1095
    %v1336 = vpack.c.b16 %v1100, %v1096
    %v1337 = vpack.c.b16 %v1101, %v1097
    %v1338 = vpack.c.b16 %v1106, %v1102
    %v1339 = vpack.c.b16 %v1107, %v1103
    %v1340 = vpack.c.b16 %v1108, %v1104
    %v1341 = vpack.c.b16 %v1109, %v1105
    %v1342 = vpack.c.b16 %v1114, %v1110
    %v1343 = vpack.c.b16 %v1115, %v1111
    %v1344 = vpack.c.b16 %v1116, %v1112
    %v1345 = vpack.c.b16 %v1117, %v1113
    %v1346 = vpack.c.b16 %v1122, %v1118
    %v1347 = vpack.c.b16 %v1123, %v1119
    %v1348 = vpack.c.b16 %v1124, %v1120
    %v1349 = vpack.c.b16 %v1125, %v1121
    %v1350 = vpack.c.b16 %v1130, %v1126
    %v1351 = vpack.c.b16 %v1131, %v1127
    %v1352 = vpack.c.b16 %v1132, %v1128
    %v1353 = vpack.c.b16 %v1133, %v1129
    %v1354 = vpack.c.b16 %v1138, %v1134
    %v1355 = vpack.c.b16 %v1139, %v1135
    %v1356 = vpack.c.b16 %v1140, %v1136
    %v1357 = vpack.c.b16 %v1141, %v1137
    %v1358 = vpack.c.b16 %v1146, %v1142
    %v1359 = vpack.c.b16 %v1147, %v1143
    %v1360 = vpack.c.b16 %v1148, %v1144
    %v1361 = vpack.c.b16 %v1149, %v1145
    %v1362 = vpack.c.b16 %v1154, %v1150
    %v1363 = vpack.c.b16 %v1155, %v1151
    %v1364 = vpack.c.b16 %v1156, %v1152
    %v1365 = vpack.c.b16 %v1157, %v1153
    %v1366 = vpack.c.b16 %v1162, %v1158
    %v1367 = vpack.c.b16 %v1163, %v1159
    %v1368 = vpack.c.b16 %v1164, %v1160
    %v1369 = vpack.c.b16 %v1165, %v1161
    %v1370 = vpack.c.b16 %v1170, %v1166
    %v1371 = vpack.c.b16 %v1171, %v1167
    %v1372 = vpack.c.b16 %v1172, %v1168
    %v1373 = vpack.c.b16 %v1173, %v1169
    %v1374 = vpack.c.b16 %v1178, %v1174
    %v1375 = vpack.c.b16 %v1179, %v1175
    %v1376 = vpack.c.b16 %v1180, %v1176
    %v1377 = vpack.c.b16 %v1181, %v1177
    %v1378 = vpack.c.b16 %v1186, %v1182
    %v1379 = vpack.c.b16 %v1187, %v1183
    %v1380 = vpack.c.b16 %v1188, %v1184
    %v1381 = vpack.c.b16 %v1189, %v1185
    %v1382 = vpack.c.b16 %v1194, %v1190
    %v1383 = vpack.c.b16 %v1195, %v1191
    %v1384 = vpack.c.b16 %v1196, %v1192
    %v1385 = vpack.c.b16 %v1197, %v1193
    %v1386 = vpack.c.b16 %v1202, %v1198
    %v1387 = vpack.c.b16 %v1203, %v1199
    %v1388 = vpack.c.b16 %v1204, %v1200
    %v1389 = vpack.c.b16 %v1205, %v1201
    %v1390 = vpack.c.b16 %v1210, %v1206
    %v1391 = vpack.c.b16 %v1211, %v1207
    %v1392 = vpack.c.b16 %v1212, %v1208
    %v1393 = vpack.c.b16 %v1213, %v1209
    %v1394 = vpack.c.b16 %v1218, %v1214
    %v1395 = vpack.c.b16 %v1219, %v1215
    %v1396 = vpack.c.b16 %v1220, %v1216
    %v1397 = vpack.c.b16 %v1221, %v1217
    %v1398 = vpack.c.b16 %v1226, %v1222
    %v1399 = vpack.c.b16 %v1227, %v1223
    %v1400 = vpack.c.b16 %v1228, %v1224
    %v1401 = vpack.c.b16 %v1229, %v1225
    %v1402 = vpack.c.b16 %v1234, %v1230
    %v1403 = vpack.c.b16 %v1235, %v1231
    %v1404 = vpack.c.b16 %v1236, %v1232
    %v1405 = vpack.c.b16 %v1237, %v1233
    %v1406 = vpack.c.b16 %v1242, %v1238
    %v1407 = vpack.c.b16 %v1243, %v1239
    %v1408 = vpack.c.b16 %v1244, %v1240
    %v1409 = vpack.c.b16 %v1245, %v1241
    %v1410 = vpack.c.b16 %v1250, %v1246
    %v1411 = vpack.c.b16 %v1251, %v1247
    %v1412 = vpack.c.b16 %v1252, %v1248
    %v1413 = vpack.c.b16 %v1253, %v1249
    %v1414 = vpack.c.b16 %v1258, %v1254
    %v1415 = vpack.c.b16 %v1259, %v1255
    %v1416 = vpack.c.b16 %v1260, %v1256
    %v1417 = vpack.c.b16 %v1261, %v1257
    %v1418 = vpack.c.b16 %v1266, %v1262
    %v1419 = vpack.c.b16 %v1267, %v1263
    %v1420 = vpack.c.b16 %v1268, %v1264
    %v1421 = vpack.c.b16 %v1269, %v1265
    %v1422 = vpack.c.b16 %v1274, %v1270
    %v1423 = vpack.c.b16 %v1275, %v1271
    %v1424 = vpack.c.b16 %v1276, %v1272
    %v1425 = vpack.c.b16 %v1277, %v1273
    %v1426 = vpack.c.b16 %v1282, %v1278
    %v1427 = vpack.c.b16 %v1283, %v1279
    %v1428 = vpack.c.b16 %v1284, %v1280
    %v1429 = vpack.c.b16 %v1285, %v1281
    %v1430 = vpack.c.b16 %v1290, %v1286
    %v1431 = vpack.c.b16 %v1291, %v1287
    %v1432 = vpack.c.b16 %v1292, %v1288
    %v1433 = vpack.c.b16 %v1293, %v1289
    %v1434 = vpack.c.b16 %v1298, %v1294
    %v1435 = vpack.c.b16 %v1299, %v1295
    %v1436 = vpack.c.b16 %v1300, %v1296
    %v1437 = vpack.c.b16 %v1301, %v1297
    %v1438 = vpack.c.b16 %v1306, %v1302
    %v1439 = vpack.c.b16 %v1307, %v1303
    %v1440 = vpack.c.b16 %v1308, %v1304
    %v1441 = vpack.c.b16 %v1309, %v1305
    %v1442 = vpack.c.b16 %v1314, %v1310
    %v1443 = vpack.c.b16 %v1315, %v1311
    %v1444 = vpack.c.b16 %v1316, %v1312
    %v1445 = vpack.c.b16 %v1317, %v1313
    %1574 = vmatprep.subr.bf16.mxu0 %v1319
    %1575 = vmatpush1.bf16.msra.mxu0 %v1318
    %1576 = vmatprep.subr.bf16.mxu0 %v1323
    %1577 = vmatpush1.bf16.msra.mxu0 %v1322
    %1578 = vmatprep.subr.bf16.mxu0 %v1327
    %1579 = vmatpush1.bf16.msra.mxu0 %v1326
    %1580 = vmatprep.subr.bf16.mxu0 %v1331
    %1581 = vmatpush1.bf16.msra.mxu0 %v1330
    %1582 = vmatprep.subr.bf16.mxu0 %v1335
    %1583 = vmatpush1.bf16.msra.mxu0 %v1334
    %1584 = vmatprep.subr.bf16.mxu0 %v1339
    %1585 = vmatpush1.bf16.msra.mxu0 %v1338
    %1586 = vmatprep.subr.bf16.mxu0 %v1343
    %1587 = vmatpush1.bf16.msra.mxu0 %v1342
    %1588 = vmatprep.subr.bf16.mxu0 %v1347
    %1589 = vmatpush1.bf16.msra.mxu0 %v1346
    %1590 = vmatprep.subr.bf16.mxu0 %v1351
    %1591 = vmatpush1.bf16.msra.mxu0 %v1350
    %1592 = vmatprep.subr.bf16.mxu0 %v1355
    %1593 = vmatpush1.bf16.msra.mxu0 %v1354
    %1594 = vmatprep.subr.bf16.mxu0 %v1359
    %1595 = vmatpush1.bf16.msra.mxu0 %v1358
    %1596 = vmatprep.subr.bf16.mxu0 %v1363
    %1597 = vmatpush1.bf16.msra.mxu0 %v1362
    %1598 = vmatprep.subr.bf16.mxu0 %v1367
    %1599 = vmatpush1.bf16.msra.mxu0 %v1366
    %1600 = vmatprep.subr.bf16.mxu0 %v1371
    %1601 = vmatpush1.bf16.msra.mxu0 %v1370
    %1602 = vmatprep.subr.bf16.mxu0 %v1375
    %1603 = vmatpush1.bf16.msra.mxu0 %v1374
    %1604 = vmatprep.subr.bf16.mxu0 %v1379
    %1605 = vmatpush1.bf16.msra.mxu0 %v1378
    %1606 = vmatprep.mubr.bf16.mxu0 %v775
    %1607 = vmatmul.mubr.bf16.gmra.mrb[0].mxu0 %v774
    %v1608 = vpop.f32.mrb[0].mxu0
    %v1609 = vadd.f32 0.0, %v1608
    %v1610 = vpop.f32.mrb[0].mxu0
    %v1611 = vadd.f32 0.0, %v1610
    %v1612 = vpop.f32.mrb[0].mxu0
    %v1613 = vadd.f32 0.0, %v1612
    %v1614 = vpop.f32.mrb[0].mxu0
    %v1615 = vadd.f32 0.0, %v1614
    %1616 = vmatprep.mubr.bf16.mxu0 %v779
    %1617 = vmatmul.mubr.bf16.gmra.mrb[0].mxu0 %v778
    %v1618 = vpop.f32.mrb[0].mxu0
    %v1619 = vadd.f32 0.0, %v1618
    %v1620 = vpop.f32.mrb[0].mxu0
    %v1621 = vadd.f32 0.0, %v1620
    %v1622 = vpop.f32.mrb[0].mxu0
    %v1623 = vadd.f32 0.0, %v1622
    %v1624 = vpop.f32.mrb[0].mxu0
    %v1625 = vadd.f32 0.0, %v1624
    %1626 = vmatprep.mubr.bf16.mxu0 %v783
    %1627 = vmatmul.mubr.bf16.gmra.mrb[0].mxu0 %v782
    %v1628 = vpop.f32.mrb[0].mxu0
    %v1629 = vadd.f32 0.0, %v1628
    %v1630 = vpop.f32.mrb[0].mxu0
    %v1631 = vadd.f32 0.0, %v1630
    %v1632 = vpop.f32.mrb[0].mxu0
    %v1633 = vadd.f32 0.0, %v1632
    %v1634 = vpop.f32.mrb[0].mxu0
    %v1635 = vadd.f32 0.0, %v1634
    %1636 = vmatprep.mubr.bf16.mxu0 %v787
    %1637 = vmatmul.mubr.bf16.gmra.mrb[0].mxu0 %v786
    %v1638 = vpop.f32.mrb[0].mxu0
    %v1639 = vadd.f32 0.0, %v1638
    %v1640 = vpop.f32.mrb[0].mxu0
    %v1641 = vadd.f32 0.0, %v1640
    %v1642 = vpop.f32.mrb[0].mxu0
    %v1643 = vadd.f32 0.0, %v1642
    %v1644 = vpop.f32.mrb[0].mxu0
    %v1645 = vadd.f32 0.0, %v1644
    %1646 = vmatprep.mubr.bf16.mxu0 %v791
    %1647 = vmatmul.mubr.bf16.gmra.mrb[0].mxu0 %v790
    %v1648 = vpop.f32.mrb[0].mxu0
    %v1649 = vadd.f32 0.0, %v1648
    %v1650 = vpop.f32.mrb[0].mxu0
    %v1651 = vadd.f32 0.0, %v1650
    %v1652 = vpop.f32.mrb[0].mxu0
    %v1653 = vadd.f32 0.0, %v1652
    %v1654 = vpop.f32.mrb[0].mxu0
    %v1655 = vadd.f32 0.0, %v1654
    %1656 = vmatprep.mubr.bf16.mxu0 %v795
    %1657 = vmatmul.mubr.bf16.gmra.mrb[0].mxu0 %v794
    %v1658 = vpop.f32.mrb[0].mxu0
    %v1659 = vadd.f32 0.0, %v1658
    %v1660 = vpop.f32.mrb[0].mxu0
    %v1661 = vadd.f32 0.0, %v1660
    %v1662 = vpop.f32.mrb[0].mxu0
    %v1663 = vadd.f32 0.0, %v1662
    %v1664 = vpop.f32.mrb[0].mxu0
    %v1665 = vadd.f32 0.0, %v1664
    %1666 = vmatprep.mubr.bf16.mxu0 %v799
    %1667 = vmatmul.mubr.bf16.gmra.mrb[0].mxu0 %v798
    %v1668 = vpop.f32.mrb[0].mxu0
    %v1669 = vadd.f32 0.0, %v1668
    %v1670 = vpop.f32.mrb[0].mxu0
    %v1671 = vadd.f32 0.0, %v1670
    %v1672 = vpop.f32.mrb[0].mxu0
    %v1673 = vadd.f32 0.0, %v1672
    %v1674 = vpop.f32.mrb[0].mxu0
    %v1675 = vadd.f32 0.0, %v1674
    %1676 = vmatprep.mubr.bf16.mxu0 %v803
    %1677 = vmatmul.mubr.bf16.gmra.mrb[0].mxu0 %v802
    %v1678 = vpop.f32.mrb[0].mxu0
    %v1679 = vadd.f32 0.0, %v1678
    %v1680 = vpop.f32.mrb[0].mxu0
    %v1681 = vadd.f32 0.0, %v1680
    %v1682 = vpop.f32.mrb[0].mxu0
    %v1683 = vadd.f32 0.0, %v1682
    %v1684 = vpop.f32.mrb[0].mxu0
    %v1685 = vadd.f32 0.0, %v1684
    %1686 = vdwg.mxu0
    %1687 = vmatprep.subr.bf16.mxu0 %v1383
    %1688 = vmatpush1.bf16.msra.mxu0 %v1382
    %1689 = vmatprep.subr.bf16.mxu0 %v1387
    %1690 = vmatpush1.bf16.msra.mxu0 %v1386
    %1691 = vmatprep.subr.bf16.mxu0 %v1391
    %1692 = vmatpush1.bf16.msra.mxu0 %v1390
    %1693 = vmatprep.subr.bf16.mxu0 %v1395
    %1694 = vmatpush1.bf16.msra.mxu0 %v1394
    %1695 = vmatprep.subr.bf16.mxu0 %v1399
    %1696 = vmatpush1.bf16.msra.mxu0 %v1398
    %1697 = vmatprep.subr.bf16.mxu0 %v1403
    %1698 = vmatpush1.bf16.msra.mxu0 %v1402
    %1699 = vmatprep.subr.bf16.mxu0 %v1407
    %1700 = vmatpush1.bf16.msra.mxu0 %v1406
    %1701 = vmatprep.subr.bf16.mxu0 %v1411
    %1702 = vmatpush1.bf16.msra.mxu0 %v1410
    %1703 = vmatprep.subr.bf16.mxu0 %v1415
    %1704 = vmatpush1.bf16.msra.mxu0 %v1414
    %1705 = vmatprep.subr.bf16.mxu0 %v1419
    %1706 = vmatpush1.bf16.msra.mxu0 %v1418
    %1707 = vmatprep.subr.bf16.mxu0 %v1423
    %1708 = vmatpush1.bf16.msra.mxu0 %v1422
    %1709 = vmatprep.subr.bf16.mxu0 %v1427
    %1710 = vmatpush1.bf16.msra.mxu0 %v1426
    %1711 = vmatprep.subr.bf16.mxu0 %v1431
    %1712 = vmatpush1.bf16.msra.mxu0 %v1430
    %1713 = vmatprep.subr.bf16.mxu0 %v1435
    %1714 = vmatpush1.bf16.msra.mxu0 %v1434
    %1715 = vmatprep.subr.bf16.mxu0 %v1439
    %1716 = vmatpush1.bf16.msra.mxu0 %v1438
    %1717 = vmatprep.subr.bf16.mxu0 %v1443
    %1718 = vmatpush1.bf16.msra.mxu0 %v1442
    %1719 = vmatprep.mubr.bf16.mxu0 %v777
    %1720 = vmatmul.mubr.bf16.gmra.mrb[0].mxu0 %v776
    %v1721 = vpop.f32.mrb[0].mxu0
    %v1722 = vadd.f32 %v1609, %v1721
    %v1723 = vpop.f32.mrb[0].mxu0
    %v1724 = vadd.f32 %v1611, %v1723
    %v1725 = vpop.f32.mrb[0].mxu0
    %v1726 = vadd.f32 %v1613, %v1725
    %v1727 = vpop.f32.mrb[0].mxu0
    %v1728 = vadd.f32 %v1615, %v1727
    %1729 = vmatprep.mubr.bf16.mxu0 %v781
    %1730 = vmatmul.mubr.bf16.gmra.mrb[0].mxu0 %v780
    %v1731 = vpop.f32.mrb[0].mxu0
    %v1732 = vadd.f32 %v1619, %v1731
    %v1733 = vpop.f32.mrb[0].mxu0
    %v1734 = vadd.f32 %v1621, %v1733
    %v1735 = vpop.f32.mrb[0].mxu0
    %v1736 = vadd.f32 %v1623, %v1735
    %v1737 = vpop.f32.mrb[0].mxu0
    %v1738 = vadd.f32 %v1625, %v1737
    %1739 = vmatprep.mubr.bf16.mxu0 %v785
    %1740 = vmatmul.mubr.bf16.gmra.mrb[0].mxu0 %v784
    %v1741 = vpop.f32.mrb[0].mxu0
    %v1742 = vadd.f32 %v1629, %v1741
    %v1743 = vpop.f32.mrb[0].mxu0
    %v1744 = vadd.f32 %v1631, %v1743
    %v1745 = vpop.f32.mrb[0].mxu0
    %v1746 = vadd.f32 %v1633, %v1745
    %v1747 = vpop.f32.mrb[0].mxu0
    %v1748 = vadd.f32 %v1635, %v1747
    %1749 = vmatprep.mubr.bf16.mxu0 %v789
    %1750 = vmatmul.mubr.bf16.gmra.mrb[0].mxu0 %v788
    %v1751 = vpop.f32.mrb[0].mxu0
    %v1752 = vadd.f32 %v1639, %v1751
    %v1753 = vpop.f32.mrb[0].mxu0
    %v1754 = vadd.f32 %v1641, %v1753
    %v1755 = vpop.f32.mrb[0].mxu0
    %v1756 = vadd.f32 %v1643, %v1755
    %v1757 = vpop.f32.mrb[0].mxu0
    %v1758 = vadd.f32 %v1645, %v1757
    %1759 = vmatprep.mubr.bf16.mxu0 %v793
    %1760 = vmatmul.mubr.bf16.gmra.mrb[0].mxu0 %v792
    %v1761 = vpop.f32.mrb[0].mxu0
    %v1762 = vadd.f32 %v1649, %v1761
    %v1763 = vpop.f32.mrb[0].mxu0
    %v1764 = vadd.f32 %v1651, %v1763
    %v1765 = vpop.f32.mrb[0].mxu0
    %v1766 = vadd.f32 %v1653, %v1765
    %v1767 = vpop.f32.mrb[0].mxu0
    %v1768 = vadd.f32 %v1655, %v1767
    %1769 = vmatprep.mubr.bf16.mxu0 %v797
    %1770 = vmatmul.mubr.bf16.gmra.mrb[0].mxu0 %v796
    %v1771 = vpop.f32.mrb[0].mxu0
    %v1772 = vadd.f32 %v1659, %v1771
    %v1773 = vpop.f32.mrb[0].mxu0
    %v1774 = vadd.f32 %v1661, %v1773
    %v1775 = vpop.f32.mrb[0].mxu0
    %v1776 = vadd.f32 %v1663, %v1775
    %v1777 = vpop.f32.mrb[0].mxu0
    %v1778 = vadd.f32 %v1665, %v1777
    %1779 = vmatprep.mubr.bf16.mxu0 %v801
    %1780 = vmatmul.mubr.bf16.gmra.mrb[0].mxu0 %v800
    %v1781 = vpop.f32.mrb[0].mxu0
    %v1782 = vadd.f32 %v1669, %v1781
    %v1783 = vpop.f32.mrb[0].mxu0
    %v1784 = vadd.f32 %v1671, %v1783
    %v1785 = vpop.f32.mrb[0].mxu0
    %v1786 = vadd.f32 %v1673, %v1785
    %v1787 = vpop.f32.mrb[0].mxu0
    %v1788 = vadd.f32 %v1675, %v1787
    %1789 = vmatprep.mubr.bf16.mxu0 %v805
    %1790 = vmatmul.mubr.bf16.gmra.mrb[0].mxu0 %v804
    %v1791 = vpop.f32.mrb[0].mxu0
    %v1792 = vadd.f32 %v1679, %v1791
    %v1793 = vpop.f32.mrb[0].mxu0
    %v1794 = vadd.f32 %v1681, %v1793
    %v1795 = vpop.f32.mrb[0].mxu0
    %v1796 = vadd.f32 %v1683, %v1795
    %v1797 = vpop.f32.mrb[0].mxu0
    %v1798 = vadd.f32 %v1685, %v1797
    %1799 = vdwg.mxu0
    %1800 = vmatprep.subr.bf16.mxu0 %v1321
    %1801 = vmatpush1.bf16.msra.mxu0 %v1320
    %1802 = vmatprep.subr.bf16.mxu0 %v1325
    %1803 = vmatpush1.bf16.msra.mxu0 %v1324
    %1804 = vmatprep.subr.bf16.mxu0 %v1329
    %1805 = vmatpush1.bf16.msra.mxu0 %v1328
    %1806 = vmatprep.subr.bf16.mxu0 %v1333
    %1807 = vmatpush1.bf16.msra.mxu0 %v1332
    %1808 = vmatprep.subr.bf16.mxu0 %v1337
    %1809 = vmatpush1.bf16.msra.mxu0 %v1336
    %1810 = vmatprep.subr.bf16.mxu0 %v1341
    %1811 = vmatpush1.bf16.msra.mxu0 %v1340
    %1812 = vmatprep.subr.bf16.mxu0 %v1345
    %1813 = vmatpush1.bf16.msra.mxu0 %v1344
    %1814 = vmatprep.subr.bf16.mxu0 %v1349
    %1815 = vmatpush1.bf16.msra.mxu0 %v1348
    %1816 = vmatprep.subr.bf16.mxu0 %v1353
    %1817 = vmatpush1.bf16.msra.mxu0 %v1352
    %1818 = vmatprep.subr.bf16.mxu0 %v1357
    %1819 = vmatpush1.bf16.msra.mxu0 %v1356
    %1820 = vmatprep.subr.bf16.mxu0 %v1361
    %1821 = vmatpush1.bf16.msra.mxu0 %v1360
    %1822 = vmatprep.subr.bf16.mxu0 %v1365
    %1823 = vmatpush1.bf16.msra.mxu0 %v1364
    %1824 = vmatprep.subr.bf16.mxu0 %v1369
    %1825 = vmatpush1.bf16.msra.mxu0 %v1368
    %1826 = vmatprep.subr.bf16.mxu0 %v1373
    %1827 = vmatpush1.bf16.msra.mxu0 %v1372
    %1828 = vmatprep.subr.bf16.mxu0 %v1377
    %1829 = vmatpush1.bf16.msra.mxu0 %v1376
    %1830 = vmatprep.subr.bf16.mxu0 %v1381
    %1831 = vmatpush1.bf16.msra.mxu0 %v1380
    %1832 = vmatprep.mubr.bf16.mxu0 %v775
    %1833 = vmatmul.mubr.bf16.gmra.mrb[0].mxu0 %v774
    %v1834 = vpop.f32.mrb[0].mxu0
    %v1835 = vadd.f32 0.0, %v1834
    %v1836 = vpop.f32.mrb[0].mxu0
    %v1837 = vadd.f32 0.0, %v1836
    %v1838 = vpop.f32.mrb[0].mxu0
    %v1839 = vadd.f32 0.0, %v1838
    %v1840 = vpop.f32.mrb[0].mxu0
    %v1841 = vadd.f32 0.0, %v1840
    %1842 = vmatprep.mubr.bf16.mxu0 %v779
    %1843 = vmatmul.mubr.bf16.gmra.mrb[0].mxu0 %v778
    %v1844 = vpop.f32.mrb[0].mxu0
    %v1845 = vadd.f32 0.0, %v1844
    %v1846 = vpop.f32.mrb[0].mxu0
    %v1847 = vadd.f32 0.0, %v1846
    %v1848 = vpop.f32.mrb[0].mxu0
    %v1849 = vadd.f32 0.0, %v1848
    %v1850 = vpop.f32.mrb[0].mxu0
    %v1851 = vadd.f32 0.0, %v1850
    %1852 = vmatprep.mubr.bf16.mxu0 %v783
    %1853 = vmatmul.mubr.bf16.gmra.mrb[0].mxu0 %v782
    %v1854 = vpop.f32.mrb[0].mxu0
    %v1855 = vadd.f32 0.0, %v1854
    %v1856 = vpop.f32.mrb[0].mxu0
    %v1857 = vadd.f32 0.0, %v1856
    %v1858 = vpop.f32.mrb[0].mxu0
    %v1859 = vadd.f32 0.0, %v1858
    %v1860 = vpop.f32.mrb[0].mxu0
    %v1861 = vadd.f32 0.0, %v1860
    %1862 = vmatprep.mubr.bf16.mxu0 %v787
    %1863 = vmatmul.mubr.bf16.gmra.mrb[0].mxu0 %v786
    %v1864 = vpop.f32.mrb[0].mxu0
    %v1865 = vadd.f32 0.0, %v1864
    %v1866 = vpop.f32.mrb[0].mxu0
    %v1867 = vadd.f32 0.0, %v1866
    %v1868 = vpop.f32.mrb[0].mxu0
    %v1869 = vadd.f32 0.0, %v1868
    %v1870 = vpop.f32.mrb[0].mxu0
    %v1871 = vadd.f32 0.0, %v1870
    %1872 = vmatprep.mubr.bf16.mxu0 %v791
    %1873 = vmatmul.mubr.bf16.gmra.mrb[0].mxu0 %v790
    %v1874 = vpop.f32.mrb[0].mxu0
    %v1875 = vadd.f32 0.0, %v1874
    %v1876 = vpop.f32.mrb[0].mxu0
    %v1877 = vadd.f32 0.0, %v1876
    %v1878 = vpop.f32.mrb[0].mxu0
    %v1879 = vadd.f32 0.0, %v1878
    %v1880 = vpop.f32.mrb[0].mxu0
    %v1881 = vadd.f32 0.0, %v1880
    %1882 = vmatprep.mubr.bf16.mxu0 %v795
    %1883 = vmatmul.mubr.bf16.gmra.mrb[0].mxu0 %v794
    %v1884 = vpop.f32.mrb[0].mxu0
    %v1885 = vadd.f32 0.0, %v1884
    %v1886 = vpop.f32.mrb[0].mxu0
    %v1887 = vadd.f32 0.0, %v1886
    %v1888 = vpop.f32.mrb[0].mxu0
    %v1889 = vadd.f32 0.0, %v1888
    %v1890 = vpop.f32.mrb[0].mxu0
    %v1891 = vadd.f32 0.0, %v1890
    %1892 = vmatprep.mubr.bf16.mxu0 %v799
    %1893 = vmatmul.mubr.bf16.gmra.mrb[0].mxu0 %v798
    %v1894 = vpop.f32.mrb[0].mxu0
    %v1895 = vadd.f32 0.0, %v1894
    %v1896 = vpop.f32.mrb[0].mxu0
    %v1897 = vadd.f32 0.0, %v1896
    %v1898 = vpop.f32.mrb[0].mxu0
    %v1899 = vadd.f32 0.0, %v1898
    %v1900 = vpop.f32.mrb[0].mxu0
    %v1901 = vadd.f32 0.0, %v1900
    %1902 = vmatprep.mubr.bf16.mxu0 %v803
    %1903 = vmatmul.mubr.bf16.gmra.mrb[0].mxu0 %v802
    %v1904 = vpop.f32.mrb[0].mxu0
    %v1905 = vadd.f32 0.0, %v1904
    %v1906 = vpop.f32.mrb[0].mxu0
    %v1907 = vadd.f32 0.0, %v1906
    %v1908 = vpop.f32.mrb[0].mxu0
    %v1909 = vadd.f32 0.0, %v1908
    %v1910 = vpop.f32.mrb[0].mxu0
    %v1911 = vadd.f32 0.0, %v1910
    %1912 = vdwg.mxu0
    %1913 = vmatprep.subr.bf16.mxu0 %v1385
    %1914 = vmatpush1.bf16.msra.mxu0 %v1384
    %1915 = vmatprep.subr.bf16.mxu0 %v1389
    %1916 = vmatpush1.bf16.msra.mxu0 %v1388
    %1917 = vmatprep.subr.bf16.mxu0 %v1393
    %1918 = vmatpush1.bf16.msra.mxu0 %v1392
    %1919 = vmatprep.subr.bf16.mxu0 %v1397
    %1920 = vmatpush1.bf16.msra.mxu0 %v1396
    %1921 = vmatprep.subr.bf16.mxu0 %v1401
    %1922 = vmatpush1.bf16.msra.mxu0 %v1400
    %1923 = vmatprep.subr.bf16.mxu0 %v1405
    %1924 = vmatpush1.bf16.msra.mxu0 %v1404
    %1925 = vmatprep.subr.bf16.mxu0 %v1409
    %1926 = vmatpush1.bf16.msra.mxu0 %v1408
    %1927 = vmatprep.subr.bf16.mxu0 %v1413
    %1928 = vmatpush1.bf16.msra.mxu0 %v1412
    %1929 = vmatprep.subr.bf16.mxu0 %v1417
    %1930 = vmatpush1.bf16.msra.mxu0 %v1416
    %1931 = vmatprep.subr.bf16.mxu0 %v1421
    %1932 = vmatpush1.bf16.msra.mxu0 %v1420
    %1933 = vmatprep.subr.bf16.mxu0 %v1425
    %1934 = vmatpush1.bf16.msra.mxu0 %v1424
    %1935 = vmatprep.subr.bf16.mxu0 %v1429
    %1936 = vmatpush1.bf16.msra.mxu0 %v1428
    %1937 = vmatprep.subr.bf16.mxu0 %v1433
    %1938 = vmatpush1.bf16.msra.mxu0 %v1432
    %1939 = vmatprep.subr.bf16.mxu0 %v1437
    %1940 = vmatpush1.bf16.msra.mxu0 %v1436
    %1941 = vmatprep.subr.bf16.mxu0 %v1441
    %1942 = vmatpush1.bf16.msra.mxu0 %v1440
    %1943 = vmatprep.subr.bf16.mxu0 %v1445
    %1944 = vmatpush1.bf16.msra.mxu0 %v1444
    %1945 = vmatprep.mubr.bf16.mxu0 %v777
    %1946 = vmatmul.mubr.bf16.gmra.mrb[0].mxu0 %v776
    %v1947 = vpop.f32.mrb[0].mxu0
    %v1948 = vadd.f32 %v1835, %v1947
    %v1949 = vpop.f32.mrb[0].mxu0
    %v1950 = vadd.f32 %v1837, %v1949
    %v1951 = vpop.f32.mrb[0].mxu0
    %v1952 = vadd.f32 %v1839, %v1951
    %v1953 = vpop.f32.mrb[0].mxu0
    %v1954 = vadd.f32 %v1841, %v1953
    %1955 = vmatprep.mubr.bf16.mxu0 %v781
    %1956 = vmatmul.mubr.bf16.gmra.mrb[0].mxu0 %v780
    %v1957 = vpop.f32.mrb[0].mxu0
    %v1958 = vadd.f32 %v1845, %v1957
    %v1959 = vpop.f32.mrb[0].mxu0
    %v1960 = vadd.f32 %v1847, %v1959
    %v1961 = vpop.f32.mrb[0].mxu0
    %v1962 = vadd.f32 %v1849, %v1961
    %v1963 = vpop.f32.mrb[0].mxu0
    %v1964 = vadd.f32 %v1851, %v1963
    %1965 = vmatprep.mubr.bf16.mxu0 %v785
    %1966 = vmatmul.mubr.bf16.gmra.mrb[0].mxu0 %v784
    %v1967 = vpop.f32.mrb[0].mxu0
    %v1968 = vadd.f32 %v1855, %v1967
    %v1969 = vpop.f32.mrb[0].mxu0
    %v1970 = vadd.f32 %v1857, %v1969
    %v1971 = vpop.f32.mrb[0].mxu0
    %v1972 = vadd.f32 %v1859, %v1971
    %v1973 = vpop.f32.mrb[0].mxu0
    %v1974 = vadd.f32 %v1861, %v1973
    %1975 = vmatprep.mubr.bf16.mxu0 %v789
    %1976 = vmatmul.mubr.bf16.gmra.mrb[0].mxu0 %v788
    %v1977 = vpop.f32.mrb[0].mxu0
    %v1978 = vadd.f32 %v1865, %v1977
    %v1979 = vpop.f32.mrb[0].mxu0
    %v1980 = vadd.f32 %v1867, %v1979
    %v1981 = vpop.f32.mrb[0].mxu0
    %v1982 = vadd.f32 %v1869, %v1981
    %v1983 = vpop.f32.mrb[0].mxu0
    %v1984 = vadd.f32 %v1871, %v1983
    %1985 = vmatprep.mubr.bf16.mxu0 %v793
    %1986 = vmatmul.mubr.bf16.gmra.mrb[0].mxu0 %v792
    %v1987 = vpop.f32.mrb[0].mxu0
    %v1988 = vadd.f32 %v1875, %v1987
    %v1989 = vpop.f32.mrb[0].mxu0
    %v1990 = vadd.f32 %v1877, %v1989
    %v1991 = vpop.f32.mrb[0].mxu0
    %v1992 = vadd.f32 %v1879, %v1991
    %v1993 = vpop.f32.mrb[0].mxu0
    %v1994 = vadd.f32 %v1881, %v1993
    %1995 = vmatprep.mubr.bf16.mxu0 %v797
    %1996 = vmatmul.mubr.bf16.gmra.mrb[0].mxu0 %v796
    %v1997 = vpop.f32.mrb[0].mxu0
    %v1998 = vadd.f32 %v1885, %v1997
    %v1999 = vpop.f32.mrb[0].mxu0
    %v2000 = vadd.f32 %v1887, %v1999
    %v2001 = vpop.f32.mrb[0].mxu0
    %v2002 = vadd.f32 %v1889, %v2001
    %v2003 = vpop.f32.mrb[0].mxu0
    %v2004 = vadd.f32 %v1891, %v2003
    %2005 = vmatprep.mubr.bf16.mxu0 %v801
    %2006 = vmatmul.mubr.bf16.gmra.mrb[0].mxu0 %v800
    %v2007 = vpop.f32.mrb[0].mxu0
    %v2008 = vadd.f32 %v1895, %v2007
    %v2009 = vpop.f32.mrb[0].mxu0
    %v2010 = vadd.f32 %v1897, %v2009
    %v2011 = vpop.f32.mrb[0].mxu0
    %v2012 = vadd.f32 %v1899, %v2011
    %v2013 = vpop.f32.mrb[0].mxu0
    %v2014 = vadd.f32 %v1901, %v2013
    %2015 = vmatprep.mubr.bf16.mxu0 %v805
    %2016 = vmatmul.mubr.bf16.gmra.mrb[0].mxu0 %v804
    %v2017 = vpop.f32.mrb[0].mxu0
    %v2018 = vadd.f32 %v1905, %v2017
    %v2019 = vpop.f32.mrb[0].mxu0
    %v2020 = vadd.f32 %v1907, %v2019
    %v2021 = vpop.f32.mrb[0].mxu0
    %v2022 = vadd.f32 %v1909, %v2021
    %v2023 = vpop.f32.mrb[0].mxu0
    %v2024 = vadd.f32 %v1911, %v2023
    %2025 = vdwg.mxu0
    %v2026 = vpack.c.bf16 %v1726, %v1722
    %v2027 = vpack.c.bf16 %v1728, %v1724
    %v2028 = vpack.c.bf16 %v1952, %v1948
    %v2029 = vpack.c.bf16 %v1954, %v1950
    %v2030 = vpack.c.bf16 %v1736, %v1732
    %v2031 = vpack.c.bf16 %v1738, %v1734
    %v2032 = vpack.c.bf16 %v1962, %v1958
    %v2033 = vpack.c.bf16 %v1964, %v1960
    %v2034 = vpack.c.bf16 %v1746, %v1742
    %v2035 = vpack.c.bf16 %v1748, %v1744
    %v2036 = vpack.c.bf16 %v1972, %v1968
    %v2037 = vpack.c.bf16 %v1974, %v1970
    %v2038 = vpack.c.bf16 %v1756, %v1752
    %v2039 = vpack.c.bf16 %v1758, %v1754
    %v2040 = vpack.c.bf16 %v1982, %v1978
    %v2041 = vpack.c.bf16 %v1984, %v1980
    %v2042 = vpack.c.bf16 %v1766, %v1762
    %v2043 = vpack.c.bf16 %v1768, %v1764
    %v2044 = vpack.c.bf16 %v1992, %v1988
    %v2045 = vpack.c.bf16 %v1994, %v1990
    %v2046 = vpack.c.bf16 %v1776, %v1772
    %v2047 = vpack.c.bf16 %v1778, %v1774
    %v2048 = vpack.c.bf16 %v2002, %v1998
    %v2049 = vpack.c.bf16 %v2004, %v2000
    %v2050 = vpack.c.bf16 %v1786, %v1782
    %v2051 = vpack.c.bf16 %v1788, %v1784
    %v2052 = vpack.c.bf16 %v2012, %v2008
    %v2053 = vpack.c.bf16 %v2014, %v2010
    %v2054 = vpack.c.bf16 %v1796, %v1792
    %v2055 = vpack.c.bf16 %v1798, %v1794
    %v2056 = vpack.c.bf16 %v2022, %v2018
    %v2057 = vpack.c.bf16 %v2024, %v2020
    %v2058 = vld [vmem:[%s4] sm:$0xf]
    %v2060 = vlaneseq
    %v2061 = vshrl.u32 %v2060, 7
    %v2062 = vsub.s32 0, %v2061
    %v2063 = vrot.slane %v2058, %v2062
    %v2064 = vlaneseq
    %v2065 = vshrl.u32 %v2064, 7
    %v2066 = vsub.s32 1, %v2065
    %v2067 = vrot.slane %v2058, %v2066
    %v2068 = vlaneseq
    %v2069 = vshrl.u32 %v2068, 7
    %v2070 = vsub.s32 2, %v2069
    %v2071 = vrot.slane %v2058, %v2070
    %v2072 = vlaneseq
    %v2073 = vshrl.u32 %v2072, 7
    %v2074 = vsub.s32 3, %v2073
    %v2075 = vrot.slane %v2058, %v2074
    %v2080 = vpack.c.bf16 %v2063, %v2063
    %v2081 = vpack.c.bf16 %v2067, %v2067
    %v2082 = vpack.c.bf16 %v2071, %v2071
    %v2083 = vpack.c.bf16 %v2075, %v2075
    %v2085 = vpack.i.b16 %v2080, %v2080
    %v2087 = vlaneseq
    %v2088 = vshrl.u32 %v2087, 7
    %v2089 = vsub.s32 0, %v2088
    %v2090 = vrot.slane %v2085, %v2089
    %v2092 = vpack.i.b16 %v2081, %v2081
    %v2094 = vlaneseq
    %v2095 = vshrl.u32 %v2094, 7
    %v2096 = vsub.s32 0, %v2095
    %v2097 = vrot.slane %v2092, %v2096
    %v2099 = vpack.i.b16 %v2082, %v2082
    %v2101 = vlaneseq
    %v2102 = vshrl.u32 %v2101, 7
    %v2103 = vsub.s32 0, %v2102
    %v2104 = vrot.slane %v2099, %v2103
    %v2106 = vpack.i.b16 %v2083, %v2083
    %v2108 = vlaneseq
    %v2109 = vshrl.u32 %v2108, 7
    %v2110 = vsub.s32 0, %v2109
    %v2111 = vrot.slane %v2106, %v2110
    %v2112 = vadd.bf16 %v2026, %v2090
    %v2113 = vadd.bf16 %v2027, %v2097
    %v2114 = vadd.bf16 %v2028, %v2104
    %v2115 = vadd.bf16 %v2029, %v2111
    %v2116 = vadd.bf16 %v2030, %v2090
    %v2117 = vadd.bf16 %v2031, %v2097
    %v2118 = vadd.bf16 %v2032, %v2104
    %v2119 = vadd.bf16 %v2033, %v2111
    %v2120 = vadd.bf16 %v2034, %v2090
    %v2121 = vadd.bf16 %v2035, %v2097
    %v2122 = vadd.bf16 %v2036, %v2104
    %v2123 = vadd.bf16 %v2037, %v2111
    %v2124 = vadd.bf16 %v2038, %v2090
    %v2125 = vadd.bf16 %v2039, %v2097
    %v2126 = vadd.bf16 %v2040, %v2104
    %v2127 = vadd.bf16 %v2041, %v2111
    %v2128 = vadd.bf16 %v2042, %v2090
    %v2129 = vadd.bf16 %v2043, %v2097
    %v2130 = vadd.bf16 %v2044, %v2104
    %v2131 = vadd.bf16 %v2045, %v2111
    %v2132 = vadd.bf16 %v2046, %v2090
    %v2133 = vadd.bf16 %v2047, %v2097
    %v2134 = vadd.bf16 %v2048, %v2104
    %v2135 = vadd.bf16 %v2049, %v2111
    %v2136 = vadd.bf16 %v2050, %v2090
    %v2137 = vadd.bf16 %v2051, %v2097
    %v2138 = vadd.bf16 %v2052, %v2104
    %v2139 = vadd.bf16 %v2053, %v2111
    %v2140 = vadd.bf16 %v2054, %v2090
    %v2141 = vadd.bf16 %v2055, %v2097
    %v2142 = vadd.bf16 %v2056, %v2104
    %v2143 = vadd.bf16 %v2057, %v2111
    %v2144 = vadd.bf16 %v2112, %v774
    %v2145 = vadd.bf16 %v2113, %v775
    %v2146 = vadd.bf16 %v2114, %v776
    %v2147 = vadd.bf16 %v2115, %v777
    %v2148 = vadd.bf16 %v2116, %v778
    %v2149 = vadd.bf16 %v2117, %v779
    %v2150 = vadd.bf16 %v2118, %v780
    %v2151 = vadd.bf16 %v2119, %v781
    %v2152 = vadd.bf16 %v2120, %v782
    %v2153 = vadd.bf16 %v2121, %v783
    %v2154 = vadd.bf16 %v2122, %v784
    %v2155 = vadd.bf16 %v2123, %v785
    %v2156 = vadd.bf16 %v2124, %v786
    %v2157 = vadd.bf16 %v2125, %v787
    %v2158 = vadd.bf16 %v2126, %v788
    %v2159 = vadd.bf16 %v2127, %v789
    %v2160 = vadd.bf16 %v2128, %v790
    %v2161 = vadd.bf16 %v2129, %v791
    %v2162 = vadd.bf16 %v2130, %v792
    %v2163 = vadd.bf16 %v2131, %v793
    %v2164 = vadd.bf16 %v2132, %v794
    %v2165 = vadd.bf16 %v2133, %v795
    %v2166 = vadd.bf16 %v2134, %v796
    %v2167 = vadd.bf16 %v2135, %v797
    %v2168 = vadd.bf16 %v2136, %v798
    %v2169 = vadd.bf16 %v2137, %v799
    %v2170 = vadd.bf16 %v2138, %v800
    %v2171 = vadd.bf16 %v2139, %v801
    %v2172 = vadd.bf16 %v2140, %v802
    %v2173 = vadd.bf16 %v2141, %v803
    %v2174 = vadd.bf16 %v2142, %v804
    %v2175 = vadd.bf16 %v2143, %v805
    %vm2176 = vcmp.ge.bf16.partialorder %v2144, 0
    %vm2177 = vcmp.ge.bf16.partialorder %v2145, 0
    %vm2178 = vcmp.ge.bf16.partialorder %v2146, 0
    %vm2179 = vcmp.ge.bf16.partialorder %v2147, 0
    %vm2180 = vcmp.ge.bf16.partialorder %v2148, 0
    %vm2181 = vcmp.ge.bf16.partialorder %v2149, 0
    %vm2182 = vcmp.ge.bf16.partialorder %v2150, 0
    %vm2183 = vcmp.ge.bf16.partialorder %v2151, 0
    %vm2184 = vcmp.ge.bf16.partialorder %v2152, 0
    %vm2185 = vcmp.ge.bf16.partialorder %v2153, 0
    %vm2186 = vcmp.ge.bf16.partialorder %v2154, 0
    %vm2187 = vcmp.ge.bf16.partialorder %v2155, 0
    %vm2188 = vcmp.ge.bf16.partialorder %v2156, 0
    %vm2189 = vcmp.ge.bf16.partialorder %v2157, 0
    %vm2190 = vcmp.ge.bf16.partialorder %v2158, 0
    %vm2191 = vcmp.ge.bf16.partialorder %v2159, 0
    %vm2192 = vcmp.ge.bf16.partialorder %v2160, 0
    %vm2193 = vcmp.ge.bf16.partialorder %v2161, 0
    %vm2194 = vcmp.ge.bf16.partialorder %v2162, 0
    %vm2195 = vcmp.ge.bf16.partialorder %v2163, 0
    %vm2196 = vcmp.ge.bf16.partialorder %v2164, 0
    %vm2197 = vcmp.ge.bf16.partialorder %v2165, 0
    %vm2198 = vcmp.ge.bf16.partialorder %v2166, 0
    %vm2199 = vcmp.ge.bf16.partialorder %v2167, 0
    %vm2200 = vcmp.ge.bf16.partialorder %v2168, 0
    %vm2201 = vcmp.ge.bf16.partialorder %v2169, 0
    %vm2202 = vcmp.ge.bf16.partialorder %v2170, 0
    %vm2203 = vcmp.ge.bf16.partialorder %v2171, 0
    %vm2204 = vcmp.ge.bf16.partialorder %v2172, 0
    %vm2205 = vcmp.ge.bf16.partialorder %v2173, 0
    %vm2206 = vcmp.ge.bf16.partialorder %v2174, 0
    %vm2207 = vcmp.ge.bf16.partialorder %v2175, 0
    %v2208 = vmul.bf16 %v2144, 1009007652
    %v2209 = vmul.bf16 %v2145, 1009007652
    %v2210 = vmul.bf16 %v2146, 1009007652
    %v2211 = vmul.bf16 %v2147, 1009007652
    %v2212 = vmul.bf16 %v2148, 1009007652
    %v2213 = vmul.bf16 %v2149, 1009007652
    %v2214 = vmul.bf16 %v2150, 1009007652
    %v2215 = vmul.bf16 %v2151, 1009007652
    %v2216 = vmul.bf16 %v2152, 1009007652
    %v2217 = vmul.bf16 %v2153, 1009007652
    %v2218 = vmul.bf16 %v2154, 1009007652
    %v2219 = vmul.bf16 %v2155, 1009007652
    %v2220 = vmul.bf16 %v2156, 1009007652
    %v2221 = vmul.bf16 %v2157, 1009007652
    %v2222 = vmul.bf16 %v2158, 1009007652
    %v2223 = vmul.bf16 %v2159, 1009007652
    %v2224 = vmul.bf16 %v2160, 1009007652
    %v2225 = vmul.bf16 %v2161, 1009007652
    %v2226 = vmul.bf16 %v2162, 1009007652
    %v2227 = vmul.bf16 %v2163, 1009007652
    %v2228 = vmul.bf16 %v2164, 1009007652
    %v2229 = vmul.bf16 %v2165, 1009007652
    %v2230 = vmul.bf16 %v2166, 1009007652
    %v2231 = vmul.bf16 %v2167, 1009007652
    %v2232 = vmul.bf16 %v2168, 1009007652
    %v2233 = vmul.bf16 %v2169, 1009007652
    %v2234 = vmul.bf16 %v2170, 1009007652
    %v2235 = vmul.bf16 %v2171, 1009007652
    %v2236 = vmul.bf16 %v2172, 1009007652
    %v2237 = vmul.bf16 %v2173, 1009007652
    %v2238 = vmul.bf16 %v2174, 1009007652
    %v2239 = vmul.bf16 %v2175, 1009007652
    %v2240 = vsel %vm2176, %v2144, %v2208
    %v2241 = vsel %vm2177, %v2145, %v2209
    %v2242 = vsel %vm2178, %v2146, %v2210
    %v2243 = vsel %vm2179, %v2147, %v2211
    %v2244 = vsel %vm2180, %v2148, %v2212
    %v2245 = vsel %vm2181, %v2149, %v2213
    %v2246 = vsel %vm2182, %v2150, %v2214
    %v2247 = vsel %vm2183, %v2151, %v2215
    %v2248 = vsel %vm2184, %v2152, %v2216
    %v2249 = vsel %vm2185, %v2153, %v2217
    %v2250 = vsel %vm2186, %v2154, %v2218
    %v2251 = vsel %vm2187, %v2155, %v2219
    %v2252 = vsel %vm2188, %v2156, %v2220
    %v2253 = vsel %vm2189, %v2157, %v2221
    %v2254 = vsel %vm2190, %v2158, %v2222
    %v2255 = vsel %vm2191, %v2159, %v2223
    %v2256 = vsel %vm2192, %v2160, %v2224
    %v2257 = vsel %vm2193, %v2161, %v2225
    %v2258 = vsel %vm2194, %v2162, %v2226
    %v2259 = vsel %vm2195, %v2163, %v2227
    %v2260 = vsel %vm2196, %v2164, %v2228
    %v2261 = vsel %vm2197, %v2165, %v2229
    %v2262 = vsel %vm2198, %v2166, %v2230
    %v2263 = vsel %vm2199, %v2167, %v2231
    %v2264 = vsel %vm2200, %v2168, %v2232
    %v2265 = vsel %vm2201, %v2169, %v2233
    %v2266 = vsel %vm2202, %v2170, %v2234
    %v2267 = vsel %vm2203, %v2171, %v2235
    %v2268 = vsel %vm2204, %v2172, %v2236
    %v2269 = vsel %vm2205, %v2173, %v2237
    %v2270 = vsel %vm2206, %v2174, %v2238
    %v2271 = vsel %vm2207, %v2175, %v2239
    %v2272 = vld [vmem:[#allocation9] sm:$0xff]
    %v2273 = vld [vmem:[#allocation9 + $0x8] sm:$0xff]
    %v2274 = vld [vmem:[#allocation9 + $0x10] sm:$0xff]
    %v2275 = vld [vmem:[#allocation9 + $0x18] sm:$0xff]
    %v2276 = vld [vmem:[#allocation9 + $0x20] sm:$0xff]
    %v2277 = vld [vmem:[#allocation9 + $0x28] sm:$0xff]
    %v2278 = vld [vmem:[#allocation9 + $0x30] sm:$0xff]
    %v2279 = vld [vmem:[#allocation9 + $0x38] sm:$0xff]
    %v2280 = vld [vmem:[#allocation9 + $0x40] sm:$0xff]
    %v2281 = vld [vmem:[#allocation9 + $0x48] sm:$0xff]
    %v2282 = vld [vmem:[#allocation9 + $0x50] sm:$0xff]
    %v2283 = vld [vmem:[#allocation9 + $0x58] sm:$0xff]
    %v2284 = vld [vmem:[#allocation9 + $0x60] sm:$0xff]
    %v2285 = vld [vmem:[#allocation9 + $0x68] sm:$0xff]
    %v2286 = vld [vmem:[#allocation9 + $0x70] sm:$0xff]
    %v2287 = vld [vmem:[#allocation9 + $0x78] sm:$0xff]
    %v2288 = vld [vmem:[#allocation9 + $0x80] sm:$0xff]
    %v2289 = vld [vmem:[#allocation9 + $0x88] sm:$0xff]
    %v2290 = vld [vmem:[#allocation9 + $0x90] sm:$0xff]
    %v2291 = vld [vmem:[#allocation9 + $0x98] sm:$0xff]
    %v2292 = vld [vmem:[#allocation9 + $0xa0] sm:$0xff]
    %v2293 = vld [vmem:[#allocation9 + $0xa8] sm:$0xff]
    %v2294 = vld [vmem:[#allocation9 + $0xb0] sm:$0xff]
    %v2295 = vld [vmem:[#allocation9 + $0xb8] sm:$0xff]
    %v2296 = vld [vmem:[#allocation9 + $0xc0] sm:$0xff]
    %v2297 = vld [vmem:[#allocation9 + $0xc8] sm:$0xff]
    %v2298 = vld [vmem:[#allocation9 + $0xd0] sm:$0xff]
    %v2299 = vld [vmem:[#allocation9 + $0xd8] sm:$0xff]
    %v2300 = vld [vmem:[#allocation9 + $0xe0] sm:$0xff]
    %v2301 = vld [vmem:[#allocation9 + $0xe8] sm:$0xff]
    %v2302 = vld [vmem:[#allocation9 + $0xf0] sm:$0xff]
    %v2303 = vld [vmem:[#allocation9 + $0xf8] sm:$0xff]
    %v2304 = vld [vmem:[#allocation9 + $0x100] sm:$0xff]
    %v2305 = vld [vmem:[#allocation9 + $0x108] sm:$0xff]
    %v2306 = vld [vmem:[#allocation9 + $0x110] sm:$0xff]
    %v2307 = vld [vmem:[#allocation9 + $0x118] sm:$0xff]
    %v2308 = vld [vmem:[#allocation9 + $0x120] sm:$0xff]
    %v2309 = vld [vmem:[#allocation9 + $0x128] sm:$0xff]
    %v2310 = vld [vmem:[#allocation9 + $0x130] sm:$0xff]
    %v2311 = vld [vmem:[#allocation9 + $0x138] sm:$0xff]
    %v2312 = vld [vmem:[#allocation9 + $0x140] sm:$0xff]
    %v2313 = vld [vmem:[#allocation9 + $0x148] sm:$0xff]
    %v2314 = vld [vmem:[#allocation9 + $0x150] sm:$0xff]
    %v2315 = vld [vmem:[#allocation9 + $0x158] sm:$0xff]
    %v2316 = vld [vmem:[#allocation9 + $0x160] sm:$0xff]
    %v2317 = vld [vmem:[#allocation9 + $0x168] sm:$0xff]
    %v2318 = vld [vmem:[#allocation9 + $0x170] sm:$0xff]
    %v2319 = vld [vmem:[#allocation9 + $0x178] sm:$0xff]
    %v2320 = vld [vmem:[#allocation9 + $0x180] sm:$0xff]
    %v2321 = vld [vmem:[#allocation9 + $0x188] sm:$0xff]
    %v2322 = vld [vmem:[#allocation9 + $0x190] sm:$0xff]
    %v2323 = vld [vmem:[#allocation9 + $0x198] sm:$0xff]
    %v2324 = vld [vmem:[#allocation9 + $0x1a0] sm:$0xff]
    %v2325 = vld [vmem:[#allocation9 + $0x1a8] sm:$0xff]
    %v2326 = vld [vmem:[#allocation9 + $0x1b0] sm:$0xff]
    %v2327 = vld [vmem:[#allocation9 + $0x1b8] sm:$0xff]
    %v2328 = vld [vmem:[#allocation9 + $0x1c0] sm:$0xff]
    %v2329 = vld [vmem:[#allocation9 + $0x1c8] sm:$0xff]
    %v2330 = vld [vmem:[#allocation9 + $0x1d0] sm:$0xff]
    %v2331 = vld [vmem:[#allocation9 + $0x1d8] sm:$0xff]
    %v2332 = vld [vmem:[#allocation9 + $0x1e0] sm:$0xff]
    %v2333 = vld [vmem:[#allocation9 + $0x1e8] sm:$0xff]
    %v2334 = vld [vmem:[#allocation9 + $0x1f0] sm:$0xff]
    %v2335 = vld [vmem:[#allocation9 + $0x1f8] sm:$0xff]
    %v2400 = vunpack.c.l.b16 %v2272
    %v2401 = vunpack.c.h.b16 %v2272
    %v2402 = vunpack.c.l.b16 %v2273
    %v2403 = vunpack.c.h.b16 %v2273
    %v2404 = vunpack.c.l.b16 %v2274
    %v2405 = vunpack.c.h.b16 %v2274
    %v2406 = vunpack.c.l.b16 %v2275
    %v2407 = vunpack.c.h.b16 %v2275
    %v2408 = vunpack.c.l.b16 %v2276
    %v2409 = vunpack.c.h.b16 %v2276
    %v2410 = vunpack.c.l.b16 %v2277
    %v2411 = vunpack.c.h.b16 %v2277
    %v2412 = vunpack.c.l.b16 %v2278
    %v2413 = vunpack.c.h.b16 %v2278
    %v2414 = vunpack.c.l.b16 %v2279
    %v2415 = vunpack.c.h.b16 %v2279
    %v2416 = vunpack.c.l.b16 %v2280
    %v2417 = vunpack.c.h.b16 %v2280
    %v2418 = vunpack.c.l.b16 %v2281
    %v2419 = vunpack.c.h.b16 %v2281
    %v2420 = vunpack.c.l.b16 %v2282
    %v2421 = vunpack.c.h.b16 %v2282
    %v2422 = vunpack.c.l.b16 %v2283
    %v2423 = vunpack.c.h.b16 %v2283
    %v2424 = vunpack.c.l.b16 %v2284
    %v2425 = vunpack.c.h.b16 %v2284
    %v2426 = vunpack.c.l.b16 %v2285
    %v2427 = vunpack.c.h.b16 %v2285
    %v2428 = vunpack.c.l.b16 %v2286
    %v2429 = vunpack.c.h.b16 %v2286
    %v2430 = vunpack.c.l.b16 %v2287
    %v2431 = vunpack.c.h.b16 %v2287
    %v2432 = vunpack.c.l.b16 %v2288
    %v2433 = vunpack.c.h.b16 %v2288
    %v2434 = vunpack.c.l.b16 %v2289
    %v2435 = vunpack.c.h.b16 %v2289
    %v2436 = vunpack.c.l.b16 %v2290
    %v2437 = vunpack.c.h.b16 %v2290
    %v2438 = vunpack.c.l.b16 %v2291
    %v2439 = vunpack.c.h.b16 %v2291
    %v2440 = vunpack.c.l.b16 %v2292
    %v2441 = vunpack.c.h.b16 %v2292
    %v2442 = vunpack.c.l.b16 %v2293
    %v2443 = vunpack.c.h.b16 %v2293
    %v2444 = vunpack.c.l.b16 %v2294
    %v2445 = vunpack.c.h.b16 %v2294
    %v2446 = vunpack.c.l.b16 %v2295
    %v2447 = vunpack.c.h.b16 %v2295
    %v2448 = vunpack.c.l.b16 %v2296
    %v2449 = vunpack.c.h.b16 %v2296
    %v2450 = vunpack.c.l.b16 %v2297
    %v2451 = vunpack.c.h.b16 %v2297
    %v2452 = vunpack.c.l.b16 %v2298
    %v2453 = vunpack.c.h.b16 %v2298
    %v2454 = vunpack.c.l.b16 %v2299
    %v2455 = vunpack.c.h.b16 %v2299
    %v2456 = vunpack.c.l.b16 %v2300
    %v2457 = vunpack.c.h.b16 %v2300
    %v2458 = vunpack.c.l.b16 %v2301
    %v2459 = vunpack.c.h.b16 %v2301
    %v2460 = vunpack.c.l.b16 %v2302
    %v2461 = vunpack.c.h.b16 %v2302
    %v2462 = vunpack.c.l.b16 %v2303
    %v2463 = vunpack.c.h.b16 %v2303
    %v2464 = vunpack.c.l.b16 %v2304
    %v2465 = vunpack.c.h.b16 %v2304
    %v2466 = vunpack.c.l.b16 %v2305
    %v2467 = vunpack.c.h.b16 %v2305
    %v2468 = vunpack.c.l.b16 %v2306
    %v2469 = vunpack.c.h.b16 %v2306
    %v2470 = vunpack.c.l.b16 %v2307
    %v2471 = vunpack.c.h.b16 %v2307
    %v2472 = vunpack.c.l.b16 %v2308
    %v2473 = vunpack.c.h.b16 %v2308
    %v2474 = vunpack.c.l.b16 %v2309
    %v2475 = vunpack.c.h.b16 %v2309
    %v2476 = vunpack.c.l.b16 %v2310
    %v2477 = vunpack.c.h.b16 %v2310
    %v2478 = vunpack.c.l.b16 %v2311
    %v2479 = vunpack.c.h.b16 %v2311
    %v2480 = vunpack.c.l.b16 %v2312
    %v2481 = vunpack.c.h.b16 %v2312
    %v2482 = vunpack.c.l.b16 %v2313
    %v2483 = vunpack.c.h.b16 %v2313
    %v2484 = vunpack.c.l.b16 %v2314
    %v2485 = vunpack.c.h.b16 %v2314
    %v2486 = vunpack.c.l.b16 %v2315
    %v2487 = vunpack.c.h.b16 %v2315
    %v2488 = vunpack.c.l.b16 %v2316
    %v2489 = vunpack.c.h.b16 %v2316
    %v2490 = vunpack.c.l.b16 %v2317
    %v2491 = vunpack.c.h.b16 %v2317
    %v2492 = vunpack.c.l.b16 %v2318
    %v2493 = vunpack.c.h.b16 %v2318
    %v2494 = vunpack.c.l.b16 %v2319
    %v2495 = vunpack.c.h.b16 %v2319
    %v2496 = vunpack.c.l.b16 %v2320
    %v2497 = vunpack.c.h.b16 %v2320
    %v2498 = vunpack.c.l.b16 %v2321
    %v2499 = vunpack.c.h.b16 %v2321
    %v2500 = vunpack.c.l.b16 %v2322
    %v2501 = vunpack.c.h.b16 %v2322
    %v2502 = vunpack.c.l.b16 %v2323
    %v2503 = vunpack.c.h.b16 %v2323
    %v2504 = vunpack.c.l.b16 %v2324
    %v2505 = vunpack.c.h.b16 %v2324
    %v2506 = vunpack.c.l.b16 %v2325
    %v2507 = vunpack.c.h.b16 %v2325
    %v2508 = vunpack.c.l.b16 %v2326
    %v2509 = vunpack.c.h.b16 %v2326
    %v2510 = vunpack.c.l.b16 %v2327
    %v2511 = vunpack.c.h.b16 %v2327
    %v2512 = vunpack.c.l.b16 %v2328
    %v2513 = vunpack.c.h.b16 %v2328
    %v2514 = vunpack.c.l.b16 %v2329
    %v2515 = vunpack.c.h.b16 %v2329
    %v2516 = vunpack.c.l.b16 %v2330
    %v2517 = vunpack.c.h.b16 %v2330
    %v2518 = vunpack.c.l.b16 %v2331
    %v2519 = vunpack.c.h.b16 %v2331
    %v2520 = vunpack.c.l.b16 %v2332
    %v2521 = vunpack.c.h.b16 %v2332
    %v2522 = vunpack.c.l.b16 %v2333
    %v2523 = vunpack.c.h.b16 %v2333
    %v2524 = vunpack.c.l.b16 %v2334
    %v2525 = vunpack.c.h.b16 %v2334
    %v2526 = vunpack.c.l.b16 %v2335
    %v2527 = vunpack.c.h.b16 %v2335
    %v2528 = vpack.c.b16 %v2402, %v2400
    %v2529 = vpack.c.b16 %v2403, %v2401
    %v2530 = vpack.c.b16 %v2406, %v2404
    %v2531 = vpack.c.b16 %v2407, %v2405
    %v2532 = vpack.c.b16 %v2410, %v2408
    %v2533 = vpack.c.b16 %v2411, %v2409
    %v2534 = vpack.c.b16 %v2414, %v2412
    %v2535 = vpack.c.b16 %v2415, %v2413
    %v2536 = vpack.c.b16 %v2418, %v2416
    %v2537 = vpack.c.b16 %v2419, %v2417
    %v2538 = vpack.c.b16 %v2422, %v2420
    %v2539 = vpack.c.b16 %v2423, %v2421
    %v2540 = vpack.c.b16 %v2426, %v2424
    %v2541 = vpack.c.b16 %v2427, %v2425
    %v2542 = vpack.c.b16 %v2430, %v2428
    %v2543 = vpack.c.b16 %v2431, %v2429
    %v2544 = vpack.c.b16 %v2434, %v2432
    %v2545 = vpack.c.b16 %v2435, %v2433
    %v2546 = vpack.c.b16 %v2438, %v2436
    %v2547 = vpack.c.b16 %v2439, %v2437
    %v2548 = vpack.c.b16 %v2442, %v2440
    %v2549 = vpack.c.b16 %v2443, %v2441
    %v2550 = vpack.c.b16 %v2446, %v2444
    %v2551 = vpack.c.b16 %v2447, %v2445
    %v2552 = vpack.c.b16 %v2450, %v2448
    %v2553 = vpack.c.b16 %v2451, %v2449
    %v2554 = vpack.c.b16 %v2454, %v2452
    %v2555 = vpack.c.b16 %v2455, %v2453
    %v2556 = vpack.c.b16 %v2458, %v2456
    %v2557 = vpack.c.b16 %v2459, %v2457
    %v2558 = vpack.c.b16 %v2462, %v2460
    %v2559 = vpack.c.b16 %v2463, %v2461
    %v2560 = vpack.c.b16 %v2466, %v2464
    %v2561 = vpack.c.b16 %v2467, %v2465
    %v2562 = vpack.c.b16 %v2470, %v2468
    %v2563 = vpack.c.b16 %v2471, %v2469
    %v2564 = vpack.c.b16 %v2474, %v2472
    %v2565 = vpack.c.b16 %v2475, %v2473
    %v2566 = vpack.c.b16 %v2478, %v2476
    %v2567 = vpack.c.b16 %v2479, %v2477
    %v2568 = vpack.c.b16 %v2482, %v2480
    %v2569 = vpack.c.b16 %v2483, %v2481
    %v2570 = vpack.c.b16 %v2486, %v2484
    %v2571 = vpack.c.b16 %v2487, %v2485
    %v2572 = vpack.c.b16 %v2490, %v2488
    %v2573 = vpack.c.b16 %v2491, %v2489
    %v2574 = vpack.c.b16 %v2494, %v2492
    %v2575 = vpack.c.b16 %v2495, %v2493
    %v2576 = vpack.c.b16 %v2498, %v2496
    %v2577 = vpack.c.b16 %v2499, %v2497
    %v2578 = vpack.c.b16 %v2502, %v2500
    %v2579 = vpack.c.b16 %v2503, %v2501
    %v2580 = vpack.c.b16 %v2506, %v2504
    %v2581 = vpack.c.b16 %v2507, %v2505
    %v2582 = vpack.c.b16 %v2510, %v2508
    %v2583 = vpack.c.b16 %v2511, %v2509
    %v2584 = vpack.c.b16 %v2514, %v2512
    %v2585 = vpack.c.b16 %v2515, %v2513
    %v2586 = vpack.c.b16 %v2518, %v2516
    %v2587 = vpack.c.b16 %v2519, %v2517
    %v2588 = vpack.c.b16 %v2522, %v2520
    %v2589 = vpack.c.b16 %v2523, %v2521
    %v2590 = vpack.c.b16 %v2526, %v2524
    %v2591 = vpack.c.b16 %v2527, %v2525
    %2656 = vmatprep.subr.bf16.mxu0 %v2529
    %2657 = vmatpush1.bf16.msra.mxu0 %v2528
    %2658 = vmatprep.subr.bf16.mxu0 %v2531
    %2659 = vmatpush1.bf16.msra.mxu0 %v2530
    %2660 = vmatprep.subr.bf16.mxu0 %v2533
    %2661 = vmatpush1.bf16.msra.mxu0 %v2532
    %2662 = vmatprep.subr.bf16.mxu0 %v2535
    %2663 = vmatpush1.bf16.msra.mxu0 %v2534
    %2664 = vmatprep.subr.bf16.mxu0 %v2537
    %2665 = vmatpush1.bf16.msra.mxu0 %v2536
    %2666 = vmatprep.subr.bf16.mxu0 %v2539
    %2667 = vmatpush1.bf16.msra.mxu0 %v2538
    %2668 = vmatprep.subr.bf16.mxu0 %v2541
    %2669 = vmatpush1.bf16.msra.mxu0 %v2540
    %2670 = vmatprep.subr.bf16.mxu0 %v2543
    %2671 = vmatpush1.bf16.msra.mxu0 %v2542
    %2672 = vmatprep.subr.bf16.mxu0 %v2545
    %2673 = vmatpush1.bf16.msra.mxu0 %v2544
    %2674 = vmatprep.subr.bf16.mxu0 %v2547
    %2675 = vmatpush1.bf16.msra.mxu0 %v2546
    %2676 = vmatprep.subr.bf16.mxu0 %v2549
    %2677 = vmatpush1.bf16.msra.mxu0 %v2548
    %2678 = vmatprep.subr.bf16.mxu0 %v2551
    %2679 = vmatpush1.bf16.msra.mxu0 %v2550
    %2680 = vmatprep.subr.bf16.mxu0 %v2553
    %2681 = vmatpush1.bf16.msra.mxu0 %v2552
    %2682 = vmatprep.subr.bf16.mxu0 %v2555
    %2683 = vmatpush1.bf16.msra.mxu0 %v2554
    %2684 = vmatprep.subr.bf16.mxu0 %v2557
    %2685 = vmatpush1.bf16.msra.mxu0 %v2556
    %2686 = vmatprep.subr.bf16.mxu0 %v2559
    %2687 = vmatpush1.bf16.msra.mxu0 %v2558
    %2688 = vmatprep.mubr.bf16.mxu0 %v2241
    %2689 = vmatmul.mubr.bf16.gmra.mrb[0].mxu0 %v2240
    %v2690 = vpop.f32.mrb[0].mxu0
    %v2691 = vadd.f32 0.0, %v2690
    %v2692 = vpop.f32.mrb[0].mxu0
    %v2693 = vadd.f32 0.0, %v2692
    %v2694 = vpop.f32.mrb[0].mxu0
    %v2695 = vadd.f32 0.0, %v2694
    %v2696 = vpop.f32.mrb[0].mxu0
    %v2697 = vadd.f32 0.0, %v2696
    %2698 = vmatprep.mubr.bf16.mxu0 %v2245
    %2699 = vmatmul.mubr.bf16.gmra.mrb[0].mxu0 %v2244
    %v2700 = vpop.f32.mrb[0].mxu0
    %v2701 = vadd.f32 0.0, %v2700
    %v2702 = vpop.f32.mrb[0].mxu0
    %v2703 = vadd.f32 0.0, %v2702
    %v2704 = vpop.f32.mrb[0].mxu0
    %v2705 = vadd.f32 0.0, %v2704
    %v2706 = vpop.f32.mrb[0].mxu0
    %v2707 = vadd.f32 0.0, %v2706
    %2708 = vmatprep.mubr.bf16.mxu0 %v2249
    %2709 = vmatmul.mubr.bf16.gmra.mrb[0].mxu0 %v2248
    %v2710 = vpop.f32.mrb[0].mxu0
    %v2711 = vadd.f32 0.0, %v2710
    %v2712 = vpop.f32.mrb[0].mxu0
    %v2713 = vadd.f32 0.0, %v2712
    %v2714 = vpop.f32.mrb[0].mxu0
    %v2715 = vadd.f32 0.0, %v2714
    %v2716 = vpop.f32.mrb[0].mxu0
    %v2717 = vadd.f32 0.0, %v2716
    %2718 = vmatprep.mubr.bf16.mxu0 %v2253
    %2719 = vmatmul.mubr.bf16.gmra.mrb[0].mxu0 %v2252
    %v2720 = vpop.f32.mrb[0].mxu0
    %v2721 = vadd.f32 0.0, %v2720
    %v2722 = vpop.f32.mrb[0].mxu0
    %v2723 = vadd.f32 0.0, %v2722
    %v2724 = vpop.f32.mrb[0].mxu0
    %v2725 = vadd.f32 0.0, %v2724
    %v2726 = vpop.f32.mrb[0].mxu0
    %v2727 = vadd.f32 0.0, %v2726
    %2728 = vmatprep.mubr.bf16.mxu0 %v2257
    %2729 = vmatmul.mubr.bf16.gmra.mrb[0].mxu0 %v2256
    %v2730 = vpop.f32.mrb[0].mxu0
    %v2731 = vadd.f32 0.0, %v2730
    %v2732 = vpop.f32.mrb[0].mxu0
    %v2733 = vadd.f32 0.0, %v2732
    %v2734 = vpop.f32.mrb[0].mxu0
    %v2735 = vadd.f32 0.0, %v2734
    %v2736 = vpop.f32.mrb[0].mxu0
    %v2737 = vadd.f32 0.0, %v2736
    %2738 = vmatprep.mubr.bf16.mxu0 %v2261
    %2739 = vmatmul.mubr.bf16.gmra.mrb[0].mxu0 %v2260
    %v2740 = vpop.f32.mrb[0].mxu0
    %v2741 = vadd.f32 0.0, %v2740
    %v2742 = vpop.f32.mrb[0].mxu0
    %v2743 = vadd.f32 0.0, %v2742
    %v2744 = vpop.f32.mrb[0].mxu0
    %v2745 = vadd.f32 0.0, %v2744
    %v2746 = vpop.f32.mrb[0].mxu0
    %v2747 = vadd.f32 0.0, %v2746
    %2748 = vmatprep.mubr.bf16.mxu0 %v2265
    %2749 = vmatmul.mubr.bf16.gmra.mrb[0].mxu0 %v2264
    %v2750 = vpop.f32.mrb[0].mxu0
    %v2751 = vadd.f32 0.0, %v2750
    %v2752 = vpop.f32.mrb[0].mxu0
    %v2753 = vadd.f32 0.0, %v2752
    %v2754 = vpop.f32.mrb[0].mxu0
    %v2755 = vadd.f32 0.0, %v2754
    %v2756 = vpop.f32.mrb[0].mxu0
    %v2757 = vadd.f32 0.0, %v2756
    %2758 = vmatprep.mubr.bf16.mxu0 %v2269
    %2759 = vmatmul.mubr.bf16.gmra.mrb[0].mxu0 %v2268
    %v2760 = vpop.f32.mrb[0].mxu0
    %v2761 = vadd.f32 0.0, %v2760
    %v2762 = vpop.f32.mrb[0].mxu0
    %v2763 = vadd.f32 0.0, %v2762
    %v2764 = vpop.f32.mrb[0].mxu0
    %v2765 = vadd.f32 0.0, %v2764
    %v2766 = vpop.f32.mrb[0].mxu0
    %v2767 = vadd.f32 0.0, %v2766
    %2768 = vdwg.mxu0
    %2769 = vmatprep.subr.bf16.mxu0 %v2561
    %2770 = vmatpush1.bf16.msra.mxu0 %v2560
    %2771 = vmatprep.subr.bf16.mxu0 %v2563
    %2772 = vmatpush1.bf16.msra.mxu0 %v2562
    %2773 = vmatprep.subr.bf16.mxu0 %v2565
    %2774 = vmatpush1.bf16.msra.mxu0 %v2564
    %2775 = vmatprep.subr.bf16.mxu0 %v2567
    %2776 = vmatpush1.bf16.msra.mxu0 %v2566
    %2777 = vmatprep.subr.bf16.mxu0 %v2569
    %2778 = vmatpush1.bf16.msra.mxu0 %v2568
    %2779 = vmatprep.subr.bf16.mxu0 %v2571
    %2780 = vmatpush1.bf16.msra.mxu0 %v2570
    %2781 = vmatprep.subr.bf16.mxu0 %v2573
    %2782 = vmatpush1.bf16.msra.mxu0 %v2572
    %2783 = vmatprep.subr.bf16.mxu0 %v2575
    %2784 = vmatpush1.bf16.msra.mxu0 %v2574
    %2785 = vmatprep.subr.bf16.mxu0 %v2577
    %2786 = vmatpush1.bf16.msra.mxu0 %v2576
    %2787 = vmatprep.subr.bf16.mxu0 %v2579
    %2788 = vmatpush1.bf16.msra.mxu0 %v2578
    %2789 = vmatprep.subr.bf16.mxu0 %v2581
    %2790 = vmatpush1.bf16.msra.mxu0 %v2580
    %2791 = vmatprep.subr.bf16.mxu0 %v2583
    %2792 = vmatpush1.bf16.msra.mxu0 %v2582
    %2793 = vmatprep.subr.bf16.mxu0 %v2585
    %2794 = vmatpush1.bf16.msra.mxu0 %v2584
    %2795 = vmatprep.subr.bf16.mxu0 %v2587
    %2796 = vmatpush1.bf16.msra.mxu0 %v2586
    %2797 = vmatprep.subr.bf16.mxu0 %v2589
    %2798 = vmatpush1.bf16.msra.mxu0 %v2588
    %2799 = vmatprep.subr.bf16.mxu0 %v2591
    %2800 = vmatpush1.bf16.msra.mxu0 %v2590
    %2801 = vmatprep.mubr.bf16.mxu0 %v2243
    %2802 = vmatmul.mubr.bf16.gmra.mrb[0].mxu0 %v2242
    %v2803 = vpop.f32.mrb[0].mxu0
    %v2804 = vadd.f32 %v2691, %v2803
    %v2805 = vpop.f32.mrb[0].mxu0
    %v2806 = vadd.f32 %v2693, %v2805
    %v2807 = vpop.f32.mrb[0].mxu0
    %v2808 = vadd.f32 %v2695, %v2807
    %v2809 = vpop.f32.mrb[0].mxu0
    %v2810 = vadd.f32 %v2697, %v2809
    %2811 = vmatprep.mubr.bf16.mxu0 %v2247
    %2812 = vmatmul.mubr.bf16.gmra.mrb[0].mxu0 %v2246
    %v2813 = vpop.f32.mrb[0].mxu0
    %v2814 = vadd.f32 %v2701, %v2813
    %v2815 = vpop.f32.mrb[0].mxu0
    %v2816 = vadd.f32 %v2703, %v2815
    %v2817 = vpop.f32.mrb[0].mxu0
    %v2818 = vadd.f32 %v2705, %v2817
    %v2819 = vpop.f32.mrb[0].mxu0
    %v2820 = vadd.f32 %v2707, %v2819
    %2821 = vmatprep.mubr.bf16.mxu0 %v2251
    %2822 = vmatmul.mubr.bf16.gmra.mrb[0].mxu0 %v2250
    %v2823 = vpop.f32.mrb[0].mxu0
    %v2824 = vadd.f32 %v2711, %v2823
    %v2825 = vpop.f32.mrb[0].mxu0
    %v2826 = vadd.f32 %v2713, %v2825
    %v2827 = vpop.f32.mrb[0].mxu0
    %v2828 = vadd.f32 %v2715, %v2827
    %v2829 = vpop.f32.mrb[0].mxu0
    %v2830 = vadd.f32 %v2717, %v2829
    %2831 = vmatprep.mubr.bf16.mxu0 %v2255
    %2832 = vmatmul.mubr.bf16.gmra.mrb[0].mxu0 %v2254
    %v2833 = vpop.f32.mrb[0].mxu0
    %v2834 = vadd.f32 %v2721, %v2833
    %v2835 = vpop.f32.mrb[0].mxu0
    %v2836 = vadd.f32 %v2723, %v2835
    %v2837 = vpop.f32.mrb[0].mxu0
    %v2838 = vadd.f32 %v2725, %v2837
    %v2839 = vpop.f32.mrb[0].mxu0
    %v2840 = vadd.f32 %v2727, %v2839
    %2841 = vmatprep.mubr.bf16.mxu0 %v2259
    %2842 = vmatmul.mubr.bf16.gmra.mrb[0].mxu0 %v2258
    %v2843 = vpop.f32.mrb[0].mxu0
    %v2844 = vadd.f32 %v2731, %v2843
    %v2845 = vpop.f32.mrb[0].mxu0
    %v2846 = vadd.f32 %v2733, %v2845
    %v2847 = vpop.f32.mrb[0].mxu0
    %v2848 = vadd.f32 %v2735, %v2847
    %v2849 = vpop.f32.mrb[0].mxu0
    %v2850 = vadd.f32 %v2737, %v2849
    %2851 = vmatprep.mubr.bf16.mxu0 %v2263
    %2852 = vmatmul.mubr.bf16.gmra.mrb[0].mxu0 %v2262
    %v2853 = vpop.f32.mrb[0].mxu0
    %v2854 = vadd.f32 %v2741, %v2853
    %v2855 = vpop.f32.mrb[0].mxu0
    %v2856 = vadd.f32 %v2743, %v2855
    %v2857 = vpop.f32.mrb[0].mxu0
    %v2858 = vadd.f32 %v2745, %v2857
    %v2859 = vpop.f32.mrb[0].mxu0
    %v2860 = vadd.f32 %v2747, %v2859
    %2861 = vmatprep.mubr.bf16.mxu0 %v2267
    %2862 = vmatmul.mubr.bf16.gmra.mrb[0].mxu0 %v2266
    %v2863 = vpop.f32.mrb[0].mxu0
    %v2864 = vadd.f32 %v2751, %v2863
    %v2865 = vpop.f32.mrb[0].mxu0
    %v2866 = vadd.f32 %v2753, %v2865
    %v2867 = vpop.f32.mrb[0].mxu0
    %v2868 = vadd.f32 %v2755, %v2867
    %v2869 = vpop.f32.mrb[0].mxu0
    %v2870 = vadd.f32 %v2757, %v2869
    %2871 = vmatprep.mubr.bf16.mxu0 %v2271
    %2872 = vmatmul.mubr.bf16.gmra.mrb[0].mxu0 %v2270
    %v2873 = vpop.f32.mrb[0].mxu0
    %v2874 = vadd.f32 %v2761, %v2873
    %v2875 = vpop.f32.mrb[0].mxu0
    %v2876 = vadd.f32 %v2763, %v2875
    %v2877 = vpop.f32.mrb[0].mxu0
    %v2878 = vadd.f32 %v2765, %v2877
    %v2879 = vpop.f32.mrb[0].mxu0
    %v2880 = vadd.f32 %v2767, %v2879
    %2881 = vdwg.mxu0
    %v2882 = vpack.c.bf16 %v2808, %v2804
    %v2883 = vpack.c.bf16 %v2810, %v2806
    %v2884 = vpack.c.bf16 %v2818, %v2814
    %v2885 = vpack.c.bf16 %v2820, %v2816
    %v2886 = vpack.c.bf16 %v2828, %v2824
    %v2887 = vpack.c.bf16 %v2830, %v2826
    %v2888 = vpack.c.bf16 %v2838, %v2834
    %v2889 = vpack.c.bf16 %v2840, %v2836
    %v2890 = vpack.c.bf16 %v2848, %v2844
    %v2891 = vpack.c.bf16 %v2850, %v2846
    %v2892 = vpack.c.bf16 %v2858, %v2854
    %v2893 = vpack.c.bf16 %v2860, %v2856
    %v2894 = vpack.c.bf16 %v2868, %v2864
    %v2895 = vpack.c.bf16 %v2870, %v2866
    %v2896 = vpack.c.bf16 %v2878, %v2874
    %v2897 = vpack.c.bf16 %v2880, %v2876
    %v2898 = vld [vmem:[%s6] sm:$0x3]
    %v2900 = vlaneseq
    %v2901 = vshrl.u32 %v2900, 7
    %v2902 = vsub.s32 0, %v2901
    %v2903 = vrot.slane %v2898, %v2902
    %v2904 = vlaneseq
    %v2905 = vshrl.u32 %v2904, 7
    %v2906 = vsub.s32 1, %v2905
    %v2907 = vrot.slane %v2898, %v2906
    %v2910 = vpack.c.bf16 %v2903, %v2903
    %v2911 = vpack.c.bf16 %v2907, %v2907
    %v2913 = vpack.i.b16 %v2910, %v2910
    %v2915 = vlaneseq
    %v2916 = vshrl.u32 %v2915, 7
    %v2917 = vsub.s32 0, %v2916
    %v2918 = vrot.slane %v2913, %v2917
    %v2920 = vpack.i.b16 %v2911, %v2911
    %v2922 = vlaneseq
    %v2923 = vshrl.u32 %v2922, 7
    %v2924 = vsub.s32 0, %v2923
    %v2925 = vrot.slane %v2920, %v2924
    %v2926 = vadd.bf16 %v2882, %v2918
    %v2927 = vadd.bf16 %v2883, %v2925
    %v2928 = vadd.bf16 %v2884, %v2918
    %v2929 = vadd.bf16 %v2885, %v2925
    %v2930 = vadd.bf16 %v2886, %v2918
    %v2931 = vadd.bf16 %v2887, %v2925
    %v2932 = vadd.bf16 %v2888, %v2918
    %v2933 = vadd.bf16 %v2889, %v2925
    %v2934 = vadd.bf16 %v2890, %v2918
    %v2935 = vadd.bf16 %v2891, %v2925
    %v2936 = vadd.bf16 %v2892, %v2918
    %v2937 = vadd.bf16 %v2893, %v2925
    %v2938 = vadd.bf16 %v2894, %v2918
    %v2939 = vadd.bf16 %v2895, %v2925
    %v2940 = vadd.bf16 %v2896, %v2918
    %v2941 = vadd.bf16 %v2897, %v2925
    %vm2942 = vcmp.ge.bf16.partialorder %v2926, 0
    %vm2943 = vcmp.ge.bf16.partialorder %v2927, 0
    %vm2944 = vcmp.ge.bf16.partialorder %v2928, 0
    %vm2945 = vcmp.ge.bf16.partialorder %v2929, 0
    %vm2946 = vcmp.ge.bf16.partialorder %v2930, 0
    %vm2947 = vcmp.ge.bf16.partialorder %v2931, 0
    %vm2948 = vcmp.ge.bf16.partialorder %v2932, 0
    %vm2949 = vcmp.ge.bf16.partialorder %v2933, 0
    %vm2950 = vcmp.ge.bf16.partialorder %v2934, 0
    %vm2951 = vcmp.ge.bf16.partialorder %v2935, 0
    %vm2952 = vcmp.ge.bf16.partialorder %v2936, 0
    %vm2953 = vcmp.ge.bf16.partialorder %v2937, 0
    %vm2954 = vcmp.ge.bf16.partialorder %v2938, 0
    %vm2955 = vcmp.ge.bf16.partialorder %v2939, 0
    %vm2956 = vcmp.ge.bf16.partialorder %v2940, 0
    %vm2957 = vcmp.ge.bf16.partialorder %v2941, 0
    %v2958 = vmul.bf16 %v2926, 1009007652
    %v2959 = vmul.bf16 %v2927, 1009007652
    %v2960 = vmul.bf16 %v2928, 1009007652
    %v2961 = vmul.bf16 %v2929, 1009007652
    %v2962 = vmul.bf16 %v2930, 1009007652
    %v2963 = vmul.bf16 %v2931, 1009007652
    %v2964 = vmul.bf16 %v2932, 1009007652
    %v2965 = vmul.bf16 %v2933, 1009007652
    %v2966 = vmul.bf16 %v2934, 1009007652
    %v2967 = vmul.bf16 %v2935, 1009007652
    %v2968 = vmul.bf16 %v2936, 1009007652
    %v2969 = vmul.bf16 %v2937, 1009007652
    %v2970 = vmul.bf16 %v2938, 1009007652
    %v2971 = vmul.bf16 %v2939, 1009007652
    %v2972 = vmul.bf16 %v2940, 1009007652
    %v2973 = vmul.bf16 %v2941, 1009007652
    %v2974 = vsel %vm2942, %v2926, %v2958
    %v2975 = vsel %vm2943, %v2927, %v2959
    %v2976 = vsel %vm2944, %v2928, %v2960
    %v2977 = vsel %vm2945, %v2929, %v2961
    %v2978 = vsel %vm2946, %v2930, %v2962
    %v2979 = vsel %vm2947, %v2931, %v2963
    %v2980 = vsel %vm2948, %v2932, %v2964
    %v2981 = vsel %vm2949, %v2933, %v2965
    %v2982 = vsel %vm2950, %v2934, %v2966
    %v2983 = vsel %vm2951, %v2935, %v2967
    %v2984 = vsel %vm2952, %v2936, %v2968
    %v2985 = vsel %vm2953, %v2937, %v2969
    %v2986 = vsel %vm2954, %v2938, %v2970
    %v2987 = vsel %vm2955, %v2939, %v2971
    %v2988 = vsel %vm2956, %v2940, %v2972
    %v2989 = vsel %vm2957, %v2941, %v2973
    %v2990 = vld [vmem:[#allocation11] sm:$0xf]
    %v2991 = vld [vmem:[#allocation11 + $0x4] sm:$0xf]
    %v2992 = vld [vmem:[#allocation11 + $0x8] sm:$0xf]
    %v2993 = vld [vmem:[#allocation11 + $0xc] sm:$0xf]
    %v2994 = vld [vmem:[#allocation11 + $0x10] sm:$0xf]
    %v2995 = vld [vmem:[#allocation11 + $0x14] sm:$0xf]
    %v2996 = vld [vmem:[#allocation11 + $0x18] sm:$0xf]
    %v2997 = vld [vmem:[#allocation11 + $0x1c] sm:$0xf]
    %v2998 = vld [vmem:[#allocation11 + $0x20] sm:$0xf]
    %v2999 = vld [vmem:[#allocation11 + $0x24] sm:$0xf]
    %v3000 = vld [vmem:[#allocation11 + $0x28] sm:$0xf]
    %v3001 = vld [vmem:[#allocation11 + $0x2c] sm:$0xf]
    %v3002 = vld [vmem:[#allocation11 + $0x30] sm:$0xf]
    %v3003 = vld [vmem:[#allocation11 + $0x34] sm:$0xf]
    %v3004 = vld [vmem:[#allocation11 + $0x38] sm:$0xf]
    %v3005 = vld [vmem:[#allocation11 + $0x3c] sm:$0xf]
    %v3006 = vld [vmem:[#allocation11 + $0x40] sm:$0xf]
    %v3007 = vld [vmem:[#allocation11 + $0x44] sm:$0xf]
    %v3008 = vld [vmem:[#allocation11 + $0x48] sm:$0xf]
    %v3009 = vld [vmem:[#allocation11 + $0x4c] sm:$0xf]
    %v3010 = vld [vmem:[#allocation11 + $0x50] sm:$0xf]
    %v3011 = vld [vmem:[#allocation11 + $0x54] sm:$0xf]
    %v3012 = vld [vmem:[#allocation11 + $0x58] sm:$0xf]
    %v3013 = vld [vmem:[#allocation11 + $0x5c] sm:$0xf]
    %v3014 = vld [vmem:[#allocation11 + $0x60] sm:$0xf]
    %v3015 = vld [vmem:[#allocation11 + $0x64] sm:$0xf]
    %v3016 = vld [vmem:[#allocation11 + $0x68] sm:$0xf]
    %v3017 = vld [vmem:[#allocation11 + $0x6c] sm:$0xf]
    %v3018 = vld [vmem:[#allocation11 + $0x70] sm:$0xf]
    %v3019 = vld [vmem:[#allocation11 + $0x74] sm:$0xf]
    %v3020 = vld [vmem:[#allocation11 + $0x78] sm:$0xf]
    %v3021 = vld [vmem:[#allocation11 + $0x7c] sm:$0xf]
    %v3054 = vunpack.c.l.b16 %v2990
    %v3055 = vunpack.c.l.b16 %v2991
    %v3056 = vunpack.c.l.b16 %v2992
    %v3057 = vunpack.c.l.b16 %v2993
    %v3058 = vunpack.c.l.b16 %v2994
    %v3059 = vunpack.c.l.b16 %v2995
    %v3060 = vunpack.c.l.b16 %v2996
    %v3061 = vunpack.c.l.b16 %v2997
    %v3062 = vunpack.c.l.b16 %v2998
    %v3063 = vunpack.c.l.b16 %v2999
    %v3064 = vunpack.c.l.b16 %v3000
    %v3065 = vunpack.c.l.b16 %v3001
    %v3066 = vunpack.c.l.b16 %v3002
    %v3067 = vunpack.c.l.b16 %v3003
    %v3068 = vunpack.c.l.b16 %v3004
    %v3069 = vunpack.c.l.b16 %v3005
    %v3070 = vunpack.c.l.b16 %v3006
    %v3071 = vunpack.c.l.b16 %v3007
    %v3072 = vunpack.c.l.b16 %v3008
    %v3073 = vunpack.c.l.b16 %v3009
    %v3074 = vunpack.c.l.b16 %v3010
    %v3075 = vunpack.c.l.b16 %v3011
    %v3076 = vunpack.c.l.b16 %v3012
    %v3077 = vunpack.c.l.b16 %v3013
    %v3078 = vunpack.c.l.b16 %v3014
    %v3079 = vunpack.c.l.b16 %v3015
    %v3080 = vunpack.c.l.b16 %v3016
    %v3081 = vunpack.c.l.b16 %v3017
    %v3082 = vunpack.c.l.b16 %v3018
    %v3083 = vunpack.c.l.b16 %v3019
    %v3084 = vunpack.c.l.b16 %v3020
    %v3085 = vunpack.c.l.b16 %v3021
    %v3086 = vpack.c.b16 %v3055, %v3054
    %v3087 = vpack.c.b16 %v3057, %v3056
    %v3088 = vpack.c.b16 %v3059, %v3058
    %v3089 = vpack.c.b16 %v3061, %v3060
    %v3090 = vpack.c.b16 %v3063, %v3062
    %v3091 = vpack.c.b16 %v3065, %v3064
    %v3092 = vpack.c.b16 %v3067, %v3066
    %v3093 = vpack.c.b16 %v3069, %v3068
    %v3094 = vpack.c.b16 %v3071, %v3070
    %v3095 = vpack.c.b16 %v3073, %v3072
    %v3096 = vpack.c.b16 %v3075, %v3074
    %v3097 = vpack.c.b16 %v3077, %v3076
    %v3098 = vpack.c.b16 %v3079, %v3078
    %v3099 = vpack.c.b16 %v3081, %v3080
    %v3100 = vpack.c.b16 %v3083, %v3082
    %v3101 = vpack.c.b16 %v3085, %v3084
    %3118 = vmatprep.subr.bf16.mxu0 0
    %3119 = vmatpush1.bf16.msra.mxu0 %v3086
    %3120 = vmatprep.subr.bf16.mxu0 0
    %3121 = vmatpush1.bf16.msra.mxu0 %v3087
    %3122 = vmatprep.subr.bf16.mxu0 0
    %3123 = vmatpush1.bf16.msra.mxu0 %v3088
    %3124 = vmatprep.subr.bf16.mxu0 0
    %3125 = vmatpush1.bf16.msra.mxu0 %v3089
    %3126 = vmatprep.subr.bf16.mxu0 0
    %3127 = vmatpush1.bf16.msra.mxu0 %v3090
    %3128 = vmatprep.subr.bf16.mxu0 0
    %3129 = vmatpush1.bf16.msra.mxu0 %v3091
    %3130 = vmatprep.subr.bf16.mxu0 0
    %3131 = vmatpush1.bf16.msra.mxu0 %v3092
    %3132 = vmatprep.subr.bf16.mxu0 0
    %3133 = vmatpush1.bf16.msra.mxu0 %v3093
    %3134 = vmatprep.subr.bf16.mxu0 0
    %3135 = vmatpush1.bf16.msra.mxu0 %v3094
    %3136 = vmatprep.subr.bf16.mxu0 0
    %3137 = vmatpush1.bf16.msra.mxu0 %v3095
    %3138 = vmatprep.subr.bf16.mxu0 0
    %3139 = vmatpush1.bf16.msra.mxu0 %v3096
    %3140 = vmatprep.subr.bf16.mxu0 0
    %3141 = vmatpush1.bf16.msra.mxu0 %v3097
    %3142 = vmatprep.subr.bf16.mxu0 0
    %3143 = vmatpush1.bf16.msra.mxu0 %v3098
    %3144 = vmatprep.subr.bf16.mxu0 0
    %3145 = vmatpush1.bf16.msra.mxu0 %v3099
    %3146 = vmatprep.subr.bf16.mxu0 0
    %3147 = vmatpush1.bf16.msra.mxu0 %v3100
    %3148 = vmatprep.subr.bf16.mxu0 0
    %3149 = vmatpush1.bf16.msra.mxu0 %v3101
    %3150 = vmatprep.mubr.bf16.mxu0 %v2975
    %3151 = vmatmul.mubr.bf16.gmra.mrb[0].mxu0 %v2974
    %v3152 = vpop.f32.mrb[0].mxu0
    %v3153 = vadd.f32 0.0, %v3152
    %v3154 = vpop.f32.mrb[0].mxu0
    %v3155 = vpop.f32.mrb[0].mxu0
    %v3156 = vadd.f32 0.0, %v3155
    %v3157 = vpop.f32.mrb[0].mxu0
    %3158 = vmatprep.mubr.bf16.mxu0 %v2977
    %3159 = vmatmul.mubr.bf16.gmra.mrb[0].mxu0 %v2976
    %v3160 = vpop.f32.mrb[0].mxu0
    %v3161 = vadd.f32 0.0, %v3160
    %v3162 = vpop.f32.mrb[0].mxu0
    %v3163 = vpop.f32.mrb[0].mxu0
    %v3164 = vadd.f32 0.0, %v3163
    %v3165 = vpop.f32.mrb[0].mxu0
    %3166 = vmatprep.mubr.bf16.mxu0 %v2979
    %3167 = vmatmul.mubr.bf16.gmra.mrb[0].mxu0 %v2978
    %v3168 = vpop.f32.mrb[0].mxu0
    %v3169 = vadd.f32 0.0, %v3168
    %v3170 = vpop.f32.mrb[0].mxu0
    %v3171 = vpop.f32.mrb[0].mxu0
    %v3172 = vadd.f32 0.0, %v3171
    %v3173 = vpop.f32.mrb[0].mxu0
    %3174 = vmatprep.mubr.bf16.mxu0 %v2981
    %3175 = vmatmul.mubr.bf16.gmra.mrb[0].mxu0 %v2980
    %v3176 = vpop.f32.mrb[0].mxu0
    %v3177 = vadd.f32 0.0, %v3176
    %v3178 = vpop.f32.mrb[0].mxu0
    %v3179 = vpop.f32.mrb[0].mxu0
    %v3180 = vadd.f32 0.0, %v3179
    %v3181 = vpop.f32.mrb[0].mxu0
    %3182 = vmatprep.mubr.bf16.mxu0 %v2983
    %3183 = vmatmul.mubr.bf16.gmra.mrb[0].mxu0 %v2982
    %v3184 = vpop.f32.mrb[0].mxu0
    %v3185 = vadd.f32 0.0, %v3184
    %v3186 = vpop.f32.mrb[0].mxu0
    %v3187 = vpop.f32.mrb[0].mxu0
    %v3188 = vadd.f32 0.0, %v3187
    %v3189 = vpop.f32.mrb[0].mxu0
    %3190 = vmatprep.mubr.bf16.mxu0 %v2985
    %3191 = vmatmul.mubr.bf16.gmra.mrb[0].mxu0 %v2984
    %v3192 = vpop.f32.mrb[0].mxu0
    %v3193 = vadd.f32 0.0, %v3192
    %v3194 = vpop.f32.mrb[0].mxu0
    %v3195 = vpop.f32.mrb[0].mxu0
    %v3196 = vadd.f32 0.0, %v3195
    %v3197 = vpop.f32.mrb[0].mxu0
    %3198 = vmatprep.mubr.bf16.mxu0 %v2987
    %3199 = vmatmul.mubr.bf16.gmra.mrb[0].mxu0 %v2986
    %v3200 = vpop.f32.mrb[0].mxu0
    %v3201 = vadd.f32 0.0, %v3200
    %v3202 = vpop.f32.mrb[0].mxu0
    %v3203 = vpop.f32.mrb[0].mxu0
    %v3204 = vadd.f32 0.0, %v3203
    %v3205 = vpop.f32.mrb[0].mxu0
    %3206 = vmatprep.mubr.bf16.mxu0 %v2989
    %3207 = vmatmul.mubr.bf16.gmra.mrb[0].mxu0 %v2988
    %v3208 = vpop.f32.mrb[0].mxu0
    %v3209 = vadd.f32 0.0, %v3208
    %v3210 = vpop.f32.mrb[0].mxu0
    %v3211 = vpop.f32.mrb[0].mxu0
    %v3212 = vadd.f32 0.0, %v3211
    %v3213 = vpop.f32.mrb[0].mxu0
    %3214 = vdwg.mxu0
    %v3215 = vpack.c.bf16 %v3156, %v3153
    %v3216 = vpack.c.bf16 %v3164, %v3161
    %v3217 = vpack.c.bf16 %v3172, %v3169
    %v3218 = vpack.c.bf16 %v3180, %v3177
    %v3219 = vpack.c.bf16 %v3188, %v3185
    %v3220 = vpack.c.bf16 %v3196, %v3193
    %v3221 = vpack.c.bf16 %v3204, %v3201
    %v3222 = vpack.c.bf16 %v3212, %v3209
    %v3223 = vld [vmem:[%s8] sm:$0x1]
    %v3224 = vpack.c.bf16 %v3223, %v3223
    %v3226 = vpack.i.b16 %v3224, %v3224
    %v3228 = vlaneseq
    %v3229 = vshrl.u32 %v3228, 7
    %v3230 = vsub.s32 0, %v3229
    %v3231 = vrot.slane %v3226, %v3230
    %v3232 = vadd.bf16 %v3215, %v3231
    %v3233 = vadd.bf16 %v3216, %v3231
    %v3234 = vadd.bf16 %v3217, %v3231
    %v3235 = vadd.bf16 %v3218, %v3231
    %v3236 = vadd.bf16 %v3219, %v3231
    %v3237 = vadd.bf16 %v3220, %v3231
    %v3238 = vadd.bf16 %v3221, %v3231
    %v3239 = vadd.bf16 %v3222, %v3231
    %vm3240 = vcmp.ge.bf16.partialorder %v3232, 0
    %vm3241 = vcmp.ge.bf16.partialorder %v3233, 0
    %vm3242 = vcmp.ge.bf16.partialorder %v3234, 0
    %vm3243 = vcmp.ge.bf16.partialorder %v3235, 0
    %vm3244 = vcmp.ge.bf16.partialorder %v3236, 0
    %vm3245 = vcmp.ge.bf16.partialorder %v3237, 0
    %vm3246 = vcmp.ge.bf16.partialorder %v3238, 0
    %vm3247 = vcmp.ge.bf16.partialorder %v3239, 0
    %v3248 = vmul.bf16 %v3232, 1009007652
    %v3249 = vmul.bf16 %v3233, 1009007652
    %v3250 = vmul.bf16 %v3234, 1009007652
    %v3251 = vmul.bf16 %v3235, 1009007652
    %v3252 = vmul.bf16 %v3236, 1009007652
    %v3253 = vmul.bf16 %v3237, 1009007652
    %v3254 = vmul.bf16 %v3238, 1009007652
    %v3255 = vmul.bf16 %v3239, 1009007652
    %v3256 = vsel %vm3240, %v3232, %v3248
    %v3257 = vsel %vm3241, %v3233, %v3249
    %v3258 = vsel %vm3242, %v3234, %v3250
    %v3259 = vsel %vm3243, %v3235, %v3251
    %v3260 = vsel %vm3244, %v3236, %v3252
    %v3261 = vsel %vm3245, %v3237, %v3253
    %v3262 = vsel %vm3246, %v3238, %v3254
    %v3263 = vsel %vm3247, %v3239, %v3255
    %v3264 = vld [vmem:[#allocation12] sm:$0xf]
    %v3265 = vld [vmem:[#allocation12 + $0x4] sm:$0xf]
    %v3266 = vld [vmem:[#allocation12 + $0x8] sm:$0xf]
    %v3267 = vld [vmem:[#allocation12 + $0xc] sm:$0xf]
    %v3268 = vld [vmem:[#allocation12 + $0x10] sm:$0xf]
    %v3269 = vld [vmem:[#allocation12 + $0x14] sm:$0xf]
    %v3270 = vld [vmem:[#allocation12 + $0x18] sm:$0xf]
    %v3271 = vld [vmem:[#allocation12 + $0x1c] sm:$0xf]
    %v3272 = vld [vmem:[#allocation12 + $0x20] sm:$0xf]
    %v3273 = vld [vmem:[#allocation12 + $0x24] sm:$0xf]
    %v3274 = vld [vmem:[#allocation12 + $0x28] sm:$0xf]
    %v3275 = vld [vmem:[#allocation12 + $0x2c] sm:$0xf]
    %v3276 = vld [vmem:[#allocation12 + $0x30] sm:$0xf]
    %v3277 = vld [vmem:[#allocation12 + $0x34] sm:$0xf]
    %v3278 = vld [vmem:[#allocation12 + $0x38] sm:$0xf]
    %v3279 = vld [vmem:[#allocation12 + $0x3c] sm:$0xf]
    %v3296 = vunpack.c.l.b16 %v3264
    %v3297 = vunpack.c.l.b16 %v3265
    %v3298 = vunpack.c.l.b16 %v3266
    %v3299 = vunpack.c.l.b16 %v3267
    %v3300 = vunpack.c.l.b16 %v3268
    %v3301 = vunpack.c.l.b16 %v3269
    %v3302 = vunpack.c.l.b16 %v3270
    %v3303 = vunpack.c.l.b16 %v3271
    %v3304 = vunpack.c.l.b16 %v3272
    %v3305 = vunpack.c.l.b16 %v3273
    %v3306 = vunpack.c.l.b16 %v3274
    %v3307 = vunpack.c.l.b16 %v3275
    %v3308 = vunpack.c.l.b16 %v3276
    %v3309 = vunpack.c.l.b16 %v3277
    %v3310 = vunpack.c.l.b16 %v3278
    %v3311 = vunpack.c.l.b16 %v3279
    %v3312 = vpack.c.b16 %v3297, %v3296
    %v3313 = vpack.c.b16 %v3299, %v3298
    %v3314 = vpack.c.b16 %v3301, %v3300
    %v3315 = vpack.c.b16 %v3303, %v3302
    %v3316 = vpack.c.b16 %v3305, %v3304
    %v3317 = vpack.c.b16 %v3307, %v3306
    %v3318 = vpack.c.b16 %v3309, %v3308
    %v3319 = vpack.c.b16 %v3311, %v3310
    %3328 = vmatprep.subr.bf16.mxu0 0
    %3329 = vmatpush1.bf16.msra.mxu0 %v3312
    %3330 = vmatprep.subr.bf16.mxu0 0
    %3331 = vmatpush1.bf16.msra.mxu0 %v3313
    %3332 = vmatprep.subr.bf16.mxu0 0
    %3333 = vmatpush1.bf16.msra.mxu0 %v3314
    %3334 = vmatprep.subr.bf16.mxu0 0
    %3335 = vmatpush1.bf16.msra.mxu0 %v3315
    %3336 = vmatprep.subr.bf16.mxu0 0
    %3337 = vmatpush1.bf16.msra.mxu0 %v3316
    %3338 = vmatprep.subr.bf16.mxu0 0
    %3339 = vmatpush1.bf16.msra.mxu0 %v3317
    %3340 = vmatprep.subr.bf16.mxu0 0
    %3341 = vmatpush1.bf16.msra.mxu0 %v3318
    %3342 = vmatprep.subr.bf16.mxu0 0
    %3343 = vmatpush1.bf16.msra.mxu0 %v3319
    %3344 = vmatprep.subr.bf16.mxu0 0
    %3345 = vmatpush1.bf16.msra.mxu0 0
    %3346 = vmatprep.subr.bf16.mxu0 0
    %3347 = vmatpush1.bf16.msra.mxu0 0
    %3348 = vmatprep.subr.bf16.mxu0 0
    %3349 = vmatpush1.bf16.msra.mxu0 0
    %3350 = vmatprep.subr.bf16.mxu0 0
    %3351 = vmatpush1.bf16.msra.mxu0 0
    %3352 = vmatprep.subr.bf16.mxu0 0
    %3353 = vmatpush1.bf16.msra.mxu0 0
    %3354 = vmatprep.subr.bf16.mxu0 0
    %3355 = vmatpush1.bf16.msra.mxu0 0
    %3356 = vmatprep.subr.bf16.mxu0 0
    %3357 = vmatpush1.bf16.msra.mxu0 0
    %3358 = vmatprep.subr.bf16.mxu0 0
    %3359 = vmatpush1.bf16.msra.mxu0 0
    %3360 = vmatprep.mubr.bf16.mxu0 0
    %3361 = vmatmul.mubr.bf16.gmra.mrb[0].mxu0 %v3256
    %v3362 = vpop.f32.mrb[0].mxu0
    %v3363 = vadd.f32 0.0, %v3362
    %v3364 = vpop.f32.mrb[0].mxu0
    %v3365 = vpop.f32.mrb[0].mxu0
    %v3366 = vadd.f32 0.0, %v3365
    %v3367 = vpop.f32.mrb[0].mxu0
    %3368 = vmatprep.mubr.bf16.mxu0 0
    %3369 = vmatmul.mubr.bf16.gmra.mrb[0].mxu0 %v3257
    %v3370 = vpop.f32.mrb[0].mxu0
    %v3371 = vadd.f32 0.0, %v3370
    %v3372 = vpop.f32.mrb[0].mxu0
    %v3373 = vpop.f32.mrb[0].mxu0
    %v3374 = vadd.f32 0.0, %v3373
    %v3375 = vpop.f32.mrb[0].mxu0
    %3376 = vmatprep.mubr.bf16.mxu0 0
    %3377 = vmatmul.mubr.bf16.gmra.mrb[0].mxu0 %v3258
    %v3378 = vpop.f32.mrb[0].mxu0
    %v3379 = vadd.f32 0.0, %v3378
    %v3380 = vpop.f32.mrb[0].mxu0
    %v3381 = vpop.f32.mrb[0].mxu0
    %v3382 = vadd.f32 0.0, %v3381
    %v3383 = vpop.f32.mrb[0].mxu0
    %3384 = vmatprep.mubr.bf16.mxu0 0
    %3385 = vmatmul.mubr.bf16.gmra.mrb[0].mxu0 %v3259
    %v3386 = vpop.f32.mrb[0].mxu0
    %v3387 = vadd.f32 0.0, %v3386
    %v3388 = vpop.f32.mrb[0].mxu0
    %v3389 = vpop.f32.mrb[0].mxu0
    %v3390 = vadd.f32 0.0, %v3389
    %v3391 = vpop.f32.mrb[0].mxu0
    %3392 = vmatprep.mubr.bf16.mxu0 0
    %3393 = vmatmul.mubr.bf16.gmra.mrb[0].mxu0 %v3260
    %v3394 = vpop.f32.mrb[0].mxu0
    %v3395 = vadd.f32 0.0, %v3394
    %v3396 = vpop.f32.mrb[0].mxu0
    %v3397 = vpop.f32.mrb[0].mxu0
    %v3398 = vadd.f32 0.0, %v3397
    %v3399 = vpop.f32.mrb[0].mxu0
    %3400 = vmatprep.mubr.bf16.mxu0 0
    %3401 = vmatmul.mubr.bf16.gmra.mrb[0].mxu0 %v3261
    %v3402 = vpop.f32.mrb[0].mxu0
    %v3403 = vadd.f32 0.0, %v3402
    %v3404 = vpop.f32.mrb[0].mxu0
    %v3405 = vpop.f32.mrb[0].mxu0
    %v3406 = vadd.f32 0.0, %v3405
    %v3407 = vpop.f32.mrb[0].mxu0
    %3408 = vmatprep.mubr.bf16.mxu0 0
    %3409 = vmatmul.mubr.bf16.gmra.mrb[0].mxu0 %v3262
    %v3410 = vpop.f32.mrb[0].mxu0
    %v3411 = vadd.f32 0.0, %v3410
    %v3412 = vpop.f32.mrb[0].mxu0
    %v3413 = vpop.f32.mrb[0].mxu0
    %v3414 = vadd.f32 0.0, %v3413
    %v3415 = vpop.f32.mrb[0].mxu0
    %3416 = vmatprep.mubr.bf16.mxu0 0
    %3417 = vmatmul.mubr.bf16.gmra.mrb[0].mxu0 %v3263
    %v3418 = vpop.f32.mrb[0].mxu0
    %v3419 = vadd.f32 0.0, %v3418
    %v3420 = vpop.f32.mrb[0].mxu0
    %v3421 = vpop.f32.mrb[0].mxu0
    %v3422 = vadd.f32 0.0, %v3421
    %v3423 = vpop.f32.mrb[0].mxu0
    %3424 = vdwg.mxu0
    %v3425 = vpack.c.bf16 %v3366, %v3363
    %v3426 = vpack.c.bf16 %v3374, %v3371
    %v3427 = vpack.c.bf16 %v3382, %v3379
    %v3428 = vpack.c.bf16 %v3390, %v3387
    %v3429 = vpack.c.bf16 %v3398, %v3395
    %v3430 = vpack.c.bf16 %v3406, %v3403
    %v3431 = vpack.c.bf16 %v3414, %v3411
    %v3432 = vpack.c.bf16 %v3422, %v3419
    %v3433 = vld [vmem:[%s10] sm:$0x1]
    %v3434 = vpack.c.bf16 %v3433, %v3433
    %v3436 = vpack.i.b16 %v3434, %v3434
    %v3438 = vlaneseq
    %v3439 = vshrl.u32 %v3438, 7
    %v3440 = vsub.s32 0, %v3439
    %v3441 = vrot.slane %v3436, %v3440
    %v3442 = vadd.bf16 %v3425, %v3441
    %v3443 = vadd.bf16 %v3426, %v3441
    %v3444 = vadd.bf16 %v3427, %v3441
    %v3445 = vadd.bf16 %v3428, %v3441
    %v3446 = vadd.bf16 %v3429, %v3441
    %v3447 = vadd.bf16 %v3430, %v3441
    %v3448 = vadd.bf16 %v3431, %v3441
    %v3449 = vadd.bf16 %v3432, %v3441
    %vm3450 = vcmp.ge.bf16.partialorder %v3442, 0
    %vm3451 = vcmp.ge.bf16.partialorder %v3443, 0
    %vm3452 = vcmp.ge.bf16.partialorder %v3444, 0
    %vm3453 = vcmp.ge.bf16.partialorder %v3445, 0
    %vm3454 = vcmp.ge.bf16.partialorder %v3446, 0
    %vm3455 = vcmp.ge.bf16.partialorder %v3447, 0
    %vm3456 = vcmp.ge.bf16.partialorder %v3448, 0
    %vm3457 = vcmp.ge.bf16.partialorder %v3449, 0
    %v3458 = vmul.bf16 %v3442, 1009007652
    %v3459 = vmul.bf16 %v3443, 1009007652
    %v3460 = vmul.bf16 %v3444, 1009007652
    %v3461 = vmul.bf16 %v3445, 1009007652
    %v3462 = vmul.bf16 %v3446, 1009007652
    %v3463 = vmul.bf16 %v3447, 1009007652
    %v3464 = vmul.bf16 %v3448, 1009007652
    %v3465 = vmul.bf16 %v3449, 1009007652
    %v3466 = vsel %vm3450, %v3442, %v3458
    %v3467 = vsel %vm3451, %v3443, %v3459
    %v3468 = vsel %vm3452, %v3444, %v3460
    %v3469 = vsel %vm3453, %v3445, %v3461
    %v3470 = vsel %vm3454, %v3446, %v3462
    %v3471 = vsel %vm3455, %v3447, %v3463
    %v3472 = vsel %vm3456, %v3448, %v3464
    %v3473 = vsel %vm3457, %v3449, %v3465
    %v3474 = vld [vmem:[#allocation14] sm:$0xf]
    %v3475 = vld [vmem:[#allocation14 + $0x4] sm:$0xf]
    %v3476 = vld [vmem:[#allocation14 + $0x8] sm:$0xf]
    %v3477 = vld [vmem:[#allocation14 + $0xc] sm:$0xf]
    %v3478 = vld [vmem:[#allocation14 + $0x10] sm:$0xf]
    %v3479 = vld [vmem:[#allocation14 + $0x14] sm:$0xf]
    %v3480 = vld [vmem:[#allocation14 + $0x18] sm:$0xf]
    %v3481 = vld [vmem:[#allocation14 + $0x1c] sm:$0xf]
    %v3482 = vld [vmem:[#allocation14 + $0x20] sm:$0xf]
    %v3483 = vld [vmem:[#allocation14 + $0x24] sm:$0xf]
    %v3484 = vld [vmem:[#allocation14 + $0x28] sm:$0xf]
    %v3485 = vld [vmem:[#allocation14 + $0x2c] sm:$0xf]
    %v3486 = vld [vmem:[#allocation14 + $0x30] sm:$0xf]
    %v3487 = vld [vmem:[#allocation14 + $0x34] sm:$0xf]
    %v3488 = vld [vmem:[#allocation14 + $0x38] sm:$0xf]
    %v3489 = vld [vmem:[#allocation14 + $0x3c] sm:$0xf]
    %v3506 = vunpack.c.l.b16 %v3474
    %v3507 = vunpack.c.l.b16 %v3475
    %v3508 = vunpack.c.l.b16 %v3476
    %v3509 = vunpack.c.l.b16 %v3477
    %v3510 = vunpack.c.l.b16 %v3478
    %v3511 = vunpack.c.l.b16 %v3479
    %v3512 = vunpack.c.l.b16 %v3480
    %v3513 = vunpack.c.l.b16 %v3481
    %v3514 = vunpack.c.l.b16 %v3482
    %v3515 = vunpack.c.l.b16 %v3483
    %v3516 = vunpack.c.l.b16 %v3484
    %v3517 = vunpack.c.l.b16 %v3485
    %v3518 = vunpack.c.l.b16 %v3486
    %v3519 = vunpack.c.l.b16 %v3487
    %v3520 = vunpack.c.l.b16 %v3488
    %v3521 = vunpack.c.l.b16 %v3489
    %v3522 = vpack.c.b16 %v3507, %v3506
    %v3523 = vpack.c.b16 %v3509, %v3508
    %v3524 = vpack.c.b16 %v3511, %v3510
    %v3525 = vpack.c.b16 %v3513, %v3512
    %v3526 = vpack.c.b16 %v3515, %v3514
    %v3527 = vpack.c.b16 %v3517, %v3516
    %v3528 = vpack.c.b16 %v3519, %v3518
    %v3529 = vpack.c.b16 %v3521, %v3520
    %3538 = vmatprep.subr.bf16.mxu0 0
    %3539 = vmatpush1.bf16.msra.mxu0 %v3522
    %3540 = vmatprep.subr.bf16.mxu0 0
    %3541 = vmatpush1.bf16.msra.mxu0 %v3523
    %3542 = vmatprep.subr.bf16.mxu0 0
    %3543 = vmatpush1.bf16.msra.mxu0 %v3524
    %3544 = vmatprep.subr.bf16.mxu0 0
    %3545 = vmatpush1.bf16.msra.mxu0 %v3525
    %3546 = vmatprep.subr.bf16.mxu0 0
    %3547 = vmatpush1.bf16.msra.mxu0 %v3526
    %3548 = vmatprep.subr.bf16.mxu0 0
    %3549 = vmatpush1.bf16.msra.mxu0 %v3527
    %3550 = vmatprep.subr.bf16.mxu0 0
    %3551 = vmatpush1.bf16.msra.mxu0 %v3528
    %3552 = vmatprep.subr.bf16.mxu0 0
    %3553 = vmatpush1.bf16.msra.mxu0 %v3529
    %3554 = vmatprep.subr.bf16.mxu0 0
    %3555 = vmatpush1.bf16.msra.mxu0 0
    %3556 = vmatprep.subr.bf16.mxu0 0
    %3557 = vmatpush1.bf16.msra.mxu0 0
    %3558 = vmatprep.subr.bf16.mxu0 0
    %3559 = vmatpush1.bf16.msra.mxu0 0
    %3560 = vmatprep.subr.bf16.mxu0 0
    %3561 = vmatpush1.bf16.msra.mxu0 0
    %3562 = vmatprep.subr.bf16.mxu0 0
    %3563 = vmatpush1.bf16.msra.mxu0 0
    %3564 = vmatprep.subr.bf16.mxu0 0
    %3565 = vmatpush1.bf16.msra.mxu0 0
    %3566 = vmatprep.subr.bf16.mxu0 0
    %3567 = vmatpush1.bf16.msra.mxu0 0
    %3568 = vmatprep.subr.bf16.mxu0 0
    %3569 = vmatpush1.bf16.msra.mxu0 0
    %3570 = vmatprep.mubr.bf16.mxu0 0
    %3571 = vmatmul.mubr.bf16.gmra.mrb[0].mxu0 %v3466
    %v3572 = vpop.f32.mrb[0].mxu0
    %v3573 = vadd.f32 0.0, %v3572
    %v3574 = vpop.f32.mrb[0].mxu0
    %v3575 = vpop.f32.mrb[0].mxu0
    %v3576 = vadd.f32 0.0, %v3575
    %v3577 = vpop.f32.mrb[0].mxu0
    %3578 = vmatprep.mubr.bf16.mxu0 0
    %3579 = vmatmul.mubr.bf16.gmra.mrb[0].mxu0 %v3467
    %v3580 = vpop.f32.mrb[0].mxu0
    %v3581 = vadd.f32 0.0, %v3580
    %v3582 = vpop.f32.mrb[0].mxu0
    %v3583 = vpop.f32.mrb[0].mxu0
    %v3584 = vadd.f32 0.0, %v3583
    %v3585 = vpop.f32.mrb[0].mxu0
    %3586 = vmatprep.mubr.bf16.mxu0 0
    %3587 = vmatmul.mubr.bf16.gmra.mrb[0].mxu0 %v3468
    %v3588 = vpop.f32.mrb[0].mxu0
    %v3589 = vadd.f32 0.0, %v3588
    %v3590 = vpop.f32.mrb[0].mxu0
    %v3591 = vpop.f32.mrb[0].mxu0
    %v3592 = vadd.f32 0.0, %v3591
    %v3593 = vpop.f32.mrb[0].mxu0
    %3594 = vmatprep.mubr.bf16.mxu0 0
    %3595 = vmatmul.mubr.bf16.gmra.mrb[0].mxu0 %v3469
    %v3596 = vpop.f32.mrb[0].mxu0
    %v3597 = vadd.f32 0.0, %v3596
    %v3598 = vpop.f32.mrb[0].mxu0
    %v3599 = vpop.f32.mrb[0].mxu0
    %v3600 = vadd.f32 0.0, %v3599
    %v3601 = vpop.f32.mrb[0].mxu0
    %3602 = vmatprep.mubr.bf16.mxu0 0
    %3603 = vmatmul.mubr.bf16.gmra.mrb[0].mxu0 %v3470
    %v3604 = vpop.f32.mrb[0].mxu0
    %v3605 = vadd.f32 0.0, %v3604
    %v3606 = vpop.f32.mrb[0].mxu0
    %v3607 = vpop.f32.mrb[0].mxu0
    %v3608 = vadd.f32 0.0, %v3607
    %v3609 = vpop.f32.mrb[0].mxu0
    %3610 = vmatprep.mubr.bf16.mxu0 0
    %3611 = vmatmul.mubr.bf16.gmra.mrb[0].mxu0 %v3471
    %v3612 = vpop.f32.mrb[0].mxu0
    %v3613 = vadd.f32 0.0, %v3612
    %v3614 = vpop.f32.mrb[0].mxu0
    %v3615 = vpop.f32.mrb[0].mxu0
    %v3616 = vadd.f32 0.0, %v3615
    %v3617 = vpop.f32.mrb[0].mxu0
    %3618 = vmatprep.mubr.bf16.mxu0 0
    %3619 = vmatmul.mubr.bf16.gmra.mrb[0].mxu0 %v3472
    %v3620 = vpop.f32.mrb[0].mxu0
    %v3621 = vadd.f32 0.0, %v3620
    %v3622 = vpop.f32.mrb[0].mxu0
    %v3623 = vpop.f32.mrb[0].mxu0
    %v3624 = vadd.f32 0.0, %v3623
    %v3625 = vpop.f32.mrb[0].mxu0
    %3626 = vmatprep.mubr.bf16.mxu0 0
    %3627 = vmatmul.mubr.bf16.gmra.mrb[0].mxu0 %v3473
    %v3628 = vpop.f32.mrb[0].mxu0
    %v3629 = vadd.f32 0.0, %v3628
    %v3630 = vpop.f32.mrb[0].mxu0
    %v3631 = vpop.f32.mrb[0].mxu0
    %v3632 = vadd.f32 0.0, %v3631
    %v3633 = vpop.f32.mrb[0].mxu0
    %3634 = vdwg.mxu0
    %v3635 = vpack.c.bf16 %v3576, %v3573
    %v3636 = vpack.c.bf16 %v3584, %v3581
    %v3637 = vpack.c.bf16 %v3592, %v3589
    %v3638 = vpack.c.bf16 %v3600, %v3597
    %v3639 = vpack.c.bf16 %v3608, %v3605
    %v3640 = vpack.c.bf16 %v3616, %v3613
    %v3641 = vpack.c.bf16 %v3624, %v3621
    %v3642 = vpack.c.bf16 %v3632, %v3629
    %v3643 = vld [vmem:[%s12] sm:$0x1]
    %v3644 = vpack.c.bf16 %v3643, %v3643
    %v3646 = vpack.i.b16 %v3644, %v3644
    %v3648 = vlaneseq
    %v3649 = vshrl.u32 %v3648, 7
    %v3650 = vsub.s32 0, %v3649
    %v3651 = vrot.slane %v3646, %v3650
    %v3652 = vadd.bf16 %v3635, %v3651
    %v3653 = vadd.bf16 %v3636, %v3651
    %v3654 = vadd.bf16 %v3637, %v3651
    %v3655 = vadd.bf16 %v3638, %v3651
    %v3656 = vadd.bf16 %v3639, %v3651
    %v3657 = vadd.bf16 %v3640, %v3651
    %v3658 = vadd.bf16 %v3641, %v3651
    %v3659 = vadd.bf16 %v3642, %v3651
    %vm3660 = vcmp.ge.bf16.partialorder %v3652, 0
    %vm3661 = vcmp.ge.bf16.partialorder %v3653, 0
    %vm3662 = vcmp.ge.bf16.partialorder %v3654, 0
    %vm3663 = vcmp.ge.bf16.partialorder %v3655, 0
    %vm3664 = vcmp.ge.bf16.partialorder %v3656, 0
    %vm3665 = vcmp.ge.bf16.partialorder %v3657, 0
    %vm3666 = vcmp.ge.bf16.partialorder %v3658, 0
    %vm3667 = vcmp.ge.bf16.partialorder %v3659, 0
    %v3668 = vmul.bf16 %v3652, 1009007652
    %v3669 = vmul.bf16 %v3653, 1009007652
    %v3670 = vmul.bf16 %v3654, 1009007652
    %v3671 = vmul.bf16 %v3655, 1009007652
    %v3672 = vmul.bf16 %v3656, 1009007652
    %v3673 = vmul.bf16 %v3657, 1009007652
    %v3674 = vmul.bf16 %v3658, 1009007652
    %v3675 = vmul.bf16 %v3659, 1009007652
    %v3676 = vsel %vm3660, %v3652, %v3668
    %v3677 = vsel %vm3661, %v3653, %v3669
    %v3678 = vsel %vm3662, %v3654, %v3670
    %v3679 = vsel %vm3663, %v3655, %v3671
    %v3680 = vsel %vm3664, %v3656, %v3672
    %v3681 = vsel %vm3665, %v3657, %v3673
    %v3682 = vsel %vm3666, %v3658, %v3674
    %v3683 = vsel %vm3667, %v3659, %v3675
    %v3684 = vld [vmem:[%s13] sm:$0x1]
    %v3685 = vld [vmem:[#allocation2] sm:$0x1]
    %3687 = vset.pattern.permute.xlu0 0
    %3688 = vperm.xlu0 %3687, %v3685
    %v3689 = vpop.permute.xlu0 %3688
    %v3691 = vlaneseq
    %v3692 = vshrl.u32 %v3691, 7
    %v3693 = vsub.s32 0, %v3692
    %v3694 = vrot.slane %v3689, %v3693
    %3695 = vmatprep.subr.bf16.mxu0 0
    %3696 = vmatpush1.bf16.xpose.msra.mxu0 %v3676
    %3697 = vmatprep.subr.bf16.mxu0 0
    %3698 = vmatpush1.bf16.xpose.msra.mxu0 %v3677
    %3699 = vmatprep.subr.bf16.mxu0 0
    %3700 = vmatpush1.bf16.xpose.msra.mxu0 %v3678
    %3701 = vmatprep.subr.bf16.mxu0 0
    %3702 = vmatpush1.bf16.xpose.msra.mxu0 %v3679
    %3703 = vmatprep.subr.bf16.mxu0 0
    %3704 = vmatpush1.bf16.xpose.msra.mxu0 %v3680
    %3705 = vmatprep.subr.bf16.mxu0 0
    %3706 = vmatpush1.bf16.xpose.msra.mxu0 %v3681
    %3707 = vmatprep.subr.bf16.mxu0 0
    %3708 = vmatpush1.bf16.xpose.msra.mxu0 %v3682
    %3709 = vmatprep.subr.bf16.mxu0 0
    %3710 = vmatpush1.bf16.xpose.msra.mxu0 %v3683
    %3711 = vmatprep.subr.bf16.mxu0 0
    %3712 = vmatpush1.bf16.xpose.msra.mxu0 0
    %3713 = vmatprep.subr.bf16.mxu0 0
    %3714 = vmatpush1.bf16.xpose.msra.mxu0 0
    %3715 = vmatprep.subr.bf16.mxu0 0
    %3716 = vmatpush1.bf16.xpose.msra.mxu0 0
    %3717 = vmatprep.subr.bf16.mxu0 0
    %3718 = vmatpush1.bf16.xpose.msra.mxu0 0
    %3719 = vmatprep.subr.bf16.mxu0 0
    %3720 = vmatpush1.bf16.xpose.msra.mxu0 0
    %3721 = vmatprep.subr.bf16.mxu0 0
    %3722 = vmatpush1.bf16.xpose.msra.mxu0 0
    %3723 = vmatprep.subr.bf16.mxu0 0
    %3724 = vmatpush1.bf16.xpose.msra.mxu0 0
    %3725 = vmatprep.subr.bf16.mxu0 0
    %3726 = vmatpush1.bf16.xpose.msra.mxu0 0
    %3727 = vmatprep.mubr.bf16.mxu0 0
    %3728 = vmatmul.mubr.bf16.gmra.mrb[0].mxu0 %v3684
    %v3729 = vpop.f32.mrb[0].mxu0
    %v3730 = vadd.f32 %v3694, %v3729
    %v3731 = vpop.f32.mrb[0].mxu0
    %v3732 = vpop.f32.mrb[0].mxu0
    %v3733 = vpop.f32.mrb[0].mxu0
    %3734 = vdwg.mxu0
    %3735 = vst [vmem:[#allocation15] sm:$0x1] %v3730
    // Predicated region
    $region90: #{tpu_custom_call.1} parent=1 // pred_check
      _
    $region91: #{tpu_custom_call.1} parent=1 // pred_check_branch
      %3737 = sbr.rel (0) target = $region93
    $region92: #{tpu_custom_call.1} parent=1 // pred_region
      %s3739 = ssub.s32 16, 16
      %3740 = vsyncadd [#allocation5], %s3739
      %s3742 = sshll.u32 [#allocation15], 4
      %s3743 = int_to_ptr.vmem [resolvable:$true] %s3742
      %3745 = dma.vmem_to_hbm [thread:$0]  %s3743, 16, %s15, [#allocation5]
    $region93: #{tpu_custom_call.1} parent=1 // pred_fallthru
      _
    // Predicated region
    $region94: #{tpu_custom_call.1} parent=1 // pred_check
      _
    $region95: #{tpu_custom_call.1} parent=1 // pred_check_branch
      %3747 = sbr.rel (0) target = $region97
    $region96: #{tpu_custom_call.1} parent=1 // pred_region
      %3748 = dma.done [#allocation5], 16
    $region97: #{tpu_custom_call.1} parent=1 // pred_fallthru
      _
    %3749 = vsyncpa [#allocation4], 1
    %3750 = vsyncpa [#allocation7], 1
    %3751 = vsyncpa [#allocation10], 1
    %3752 = vsyncpa [#allocation13], 1
    %3753 = vsyncpa [#allocation5], 1

</llo_original>
